<compile_context>
chip_gen: v7x
topology: tpu7x:2x2x1
jax: 0.10.0
libtpu: 0.0.40
codegen_flags: <defaults>
</compile_context>

<pallas_src>
import functools

import jax
import jax.numpy as jnp
from jax import lax
from jax.experimental import pallas as pl
from jax.experimental.pallas import tpu as pltpu


EXPANSION = 4
_VMEM_LIMIT = 32 * 1024 * 1024    # explicit scoped-VMEM limit (> v5e default)
_VMEM_BUDGET = 12 * 1024 * 1024   # per-step working-set cap for M-tiled blocks


# ----------------------------------------------------------------------------
# tile helpers
# ----------------------------------------------------------------------------
def _pick_tile_k(k):
    if k <= 512:
        return k
    for tk in (512, 256, 128):
        if k % tk == 0:
            return tk
    return k


def _pick_tile_m(m, row_bytes):
    """Pick the M tile.  row_bytes ~= bytes of all M-tiled blocks per row."""
    for tm in (512, 256, 128):
        if m % tm == 0 and 2 * tm * row_bytes <= _VMEM_BUDGET:
            return tm, 0
    if m <= 128:
        return m, 0
    return 128, (-m) % 128


# ----------------------------------------------------------------------------
# Kernel: generic fused  (X @ W) * scale + bias  [+ residual]  [+ ReLU]
#         (bf16 MXU matmul, f32 accumulation, K tiling on the last grid axis)
# ----------------------------------------------------------------------------
def _mm_kernel(apply_relu, with_residual):
    def kernel(x_ref, w_ref, s_ref, b_ref, *rest):
        if with_residual:
            r_ref, o_ref, acc_ref = rest
        else:
            o_ref, acc_ref = rest
        k = pl.program_id(1)

        @pl.when(k == 0)
        def _init():
            acc_ref[...] = jnp.zeros_like(acc_ref)

        acc_ref[...] += jnp.dot(x_ref[...], w_ref[...],
                                preferred_element_type=jnp.float32)

        @pl.when(k == pl.num_programs(1) - 1)
        def _finalize():
            y = acc_ref[...] * s_ref[...] + b_ref[...]
            if with_residual:
                y = y + r_ref[...].astype(jnp.float32)
            if apply_relu:
                y = jnp.maximum(y, 0.0)
            o_ref[...] = y.astype(o_ref.dtype)

    return kernel


def matmul_bn_act(x, w, scale, bias, residual=None, apply_relu=True,
                  out_dtype=jnp.float32):
    """relu?((x @ w) * scale + bias [+ residual]); bf16 MXU, f32 accum."""
    m, k = x.shape
    n = w.shape[1]
    x = x.astype(jnp.bfloat16)
    w = w.astype(jnp.bfloat16)

    tk = _pick_tile_k(k)
    nk = k // tk
    row_bytes = tk * 2 + n * 4 + n * 4 + (n * 2 if residual is not None else 0)
    tm, m_pad = _pick_tile_m(m, row_bytes)
    if m_pad:
        x = jnp.pad(x, ((0, m_pad), (0, 0)))
        if residual is not None:
            residual = jnp.pad(residual, ((0, m_pad), (0, 0)))
    mp = m + m_pad

    scale2 = scale.reshape(1, n).astype(jnp.float32)
    bias2 = bias.reshape(1, n).astype(jnp.float32)

    in_specs = [
        pl.BlockSpec((tm, tk), lambda i, kk: (i, kk)),
        pl.BlockSpec((tk, n), lambda i, kk: (kk, 0)),
        pl.BlockSpec((1, n), lambda i, kk: (0, 0)),
        pl.BlockSpec((1, n), lambda i, kk: (0, 0)),
    ]
    args = [x, w, scale2, bias2]
    if residual is not None:
        in_specs.append(pl.BlockSpec((tm, n), lambda i, kk: (i, 0)))
        args.append(residual.astype(jnp.bfloat16))

    out = pl.pallas_call(
        _mm_kernel(apply_relu, residual is not None),
        out_shape=jax.ShapeDtypeStruct((mp, n), out_dtype),
        grid=(mp // tm, nk),
        in_specs=in_specs,
        out_specs=pl.BlockSpec((tm, n), lambda i, kk: (i, 0)),
        scratch_shapes=[pltpu.VMEM((tm, n), jnp.float32)],
        compiler_params=pltpu.CompilerParams(
            dimension_semantics=("parallel", "arbitrary"),
            vmem_limit_bytes=_VMEM_LIMIT),
    )(*args)
    return out[:m] if m_pad else out


# ----------------------------------------------------------------------------
# Kernel: fused conv1(1x1)+bn1+relu  +  conv2(3x3, pad=1, stride=1)+bn2+relu
#         per image; h1 lives only in a zero-padded VMEM scratch (no im2col,
#         no HBM round-trip of h1).
# ----------------------------------------------------------------------------
def _conv12_kernel(x_ref, w1_ref, w2_ref, s1_ref, b1_ref, s2_ref, b2_ref,
                   o_ref, h1p_ref):
    h = x_ref.shape[1]
    w = x_ref.shape[2]
    p = w1_ref.shape[1]

    # Zero scratch once per image -> provides the 1-pixel zero padding.
    h1p_ref[...] = jnp.zeros_like(h1p_ref)

    def conv1_row(y, carry):
        xrow = x_ref[0, y]                                       # (W, Cin) bf16
        hrow = jnp.dot(xrow, w1_ref[...],
                       preferred_element_type=jnp.float32)       # (W, P) f32
        hrow = jnp.maximum(hrow * s1_ref[...] + b1_ref[...], 0.0)
        h1p_ref[y + 1, pl.ds(1, w), :] = hrow
        return carry

    lax.fori_loop(0, h, conv1_row, 0)

    def conv2_row(y, carry):
        acc = jnp.zeros((w, p), jnp.float32)
        for t in range(9):                                       # 9 taps (ky,kx)
            ky, kx = divmod(t, 3)
            lhs = h1p_ref[y + ky, pl.ds(kx, w), :].astype(jnp.bfloat16)
            acc = acc + jnp.dot(lhs, w2_ref[t],
                                preferred_element_type=jnp.float32)
        yrow = jnp.maximum(acc * s2_ref[...] + b2_ref[...], 0.0)
        o_ref[0, y] = yrow.astype(o_ref.dtype)
        return carry

    lax.fori_loop(0, h, conv2_row, 0)


def conv1_conv2_fused(x_bf16, w1, w2_taps, s1, b1, s2, b2):
    n, h, w, cin = x_bf16.shape
    planes = w1.shape[1]
    w1b = w1.astype(jnp.bfloat16)
    w2b = w2_taps.astype(jnp.bfloat16)                 # (9, planes, planes)
    s1r = s1.reshape(1, planes).astype(jnp.float32)
    b1r = b1.reshape(1, planes).astype(jnp.float32)
    s2r = s2.reshape(1, planes).astype(jnp.float32)
    b2r = b2.reshape(1, planes).astype(jnp.float32)

    return pl.pallas_call(
        _conv12_kernel,
        out_shape=jax.ShapeDtypeStruct((n, h, w, planes), jnp.bfloat16),
        grid=(n,),
        in_specs=[
            pl.BlockSpec((1, h, w, cin), lambda i: (i, 0, 0, 0)),
            pl.BlockSpec((cin, planes), lambda i: (0, 0)),
            pl.BlockSpec((9, planes, planes), lambda i: (0, 0, 0)),
            pl.BlockSpec((1, planes), lambda i: (0, 0)),
            pl.BlockSpec((1, planes), lambda i: (0, 0)),
            pl.BlockSpec((1, planes), lambda i: (0, 0)),
            pl.BlockSpec((1, planes), lambda i: (0, 0)),
        ],
        out_specs=pl.BlockSpec((1, h, w, planes), lambda i: (i, 0, 0, 0)),
        scratch_shapes=[pltpu.VMEM((h + 2, w + 2, planes), jnp.float32)],
        compiler_params=pltpu.CompilerParams(
            dimension_semantics=("parallel",),
            vmem_limit_bytes=_VMEM_LIMIT),
    )(x_bf16, w1b, w2b, s1r, b1r, s2r, b2r)


# ----------------------------------------------------------------------------
# Kernel: fused conv3(1x1)+bn3 + projection shortcut(1x1 conv + bn) + add + relu
#         (shortcut contraction is K-tiled on the trailing grid axis)
# ----------------------------------------------------------------------------
def _conv3_proj_kernel(h2_ref, w3_ref, xs_ref, ws_ref, s3_ref, ss_ref, bt_ref,
                       o_ref, acc_ref):
    k = pl.program_id(1)

    @pl.when(k == 0)
    def _init():
        acc_ref[...] = (jnp.dot(h2_ref[...], w3_ref[...],
                                preferred_element_type=jnp.float32)
                        * s3_ref[...] + bt_ref[...])

    acc_ref[...] += (jnp.dot(xs_ref[...], ws_ref[...],
                             preferred_element_type=jnp.float32)
                     * ss_ref[...])

    @pl.when(k == pl.num_programs(1) - 1)
    def _finalize():
        o_ref[...] = jnp.maximum(acc_ref[...], 0.0).astype(o_ref.dtype)


def conv3_shortcut_fused(h2, w3, xs, ws, s3, b3, ss, bs,
                         out_dtype=jnp.float32):
    m, p = h2.shape
    cin = xs.shape[1]
    n = w3.shape[1]
    h2 = h2.astype(jnp.bfloat16)
    xs = xs.astype(jnp.bfloat16)
    w3 = w3.astype(jnp.bfloat16)
    ws = ws.astype(jnp.bfloat16)

    tk = _pick_tile_k(cin)
    nk = cin // tk
    row_bytes = p * 2 + tk * 2 + n * 4 + n * 4
    tm, m_pad = _pick_tile_m(m, row_bytes)
    if m_pad:
        h2 = jnp.pad(h2, ((0, m_pad), (0, 0)))
        xs = jnp.pad(xs, ((0, m_pad), (0, 0)))
    mp = m + m_pad

    s3r = s3.reshape(1, n).astype(jnp.float32)
    ssr = ss.reshape(1, n).astype(jnp.float32)
    btot = (b3 + bs).reshape(1, n).astype(jnp.float32)

    out = pl.pallas_call(
        _conv3_proj_kernel,
        out_shape=jax.ShapeDtypeStruct((mp, n), out_dtype),
        grid=(mp // tm, nk),
        in_specs=[
            pl.BlockSpec((tm, p), lambda i, kk: (i, 0)),
            pl.BlockSpec((p, n), lambda i, kk: (0, 0)),
            pl.BlockSpec((tm, tk), lambda i, kk: (i, kk)),
            pl.BlockSpec((tk, n), lambda i, kk: (kk, 0)),
            pl.BlockSpec((1, n), lambda i, kk: (0, 0)),
            pl.BlockSpec((1, n), lambda i, kk: (0, 0)),
            pl.BlockSpec((1, n), lambda i, kk: (0, 0)),
        ],
        out_specs=pl.BlockSpec((tm, n), lambda i, kk: (i, 0)),
        scratch_shapes=[pltpu.VMEM((tm, n), jnp.float32)],
        compiler_params=pltpu.CompilerParams(
            dimension_semantics=("parallel", "arbitrary"),
            vmem_limit_bytes=_VMEM_LIMIT),
    )(h2, w3, xs, ws, s3r, ssr, btot)
    return out[:m] if m_pad else out


# ----------------------------------------------------------------------------
# Fallback glue for stride > 1: im2col for the 3x3 conv (pad=1, stride=s), NHWC
# ----------------------------------------------------------------------------
def im2col_3x3(x_nhwc, stride):
    n, h, w, c = x_nhwc.shape
    xp = jnp.pad(x_nhwc, ((0, 0), (1, 1), (1, 1), (0, 0)))
    ho = (h + 2 - 3) // stride + 1
    wo = (w + 2 - 3) // stride + 1
    cols = []
    for ky in range(3):
        for kx in range(3):
            patch = xp[:,
                       ky:ky + stride * (ho - 1) + 1:stride,
                       kx:kx + stride * (wo - 1) + 1:stride,
                       :]
            cols.append(patch)
    patches = jnp.concatenate(cols, axis=-1)            # (N, Ho, Wo, 9*C)
    return patches.reshape(n * ho * wo, 9 * c), (n, ho, wo)


# ----------------------------------------------------------------------------
# Bottleneck forward (expansion = 4), NCHW in / NCHW out
# ----------------------------------------------------------------------------
@functools.partial(jax.jit, static_argnames=("stride",))
def bottleneck_forward(x_nchw, params, stride=1):
    x = jnp.transpose(x_nchw, (0, 2, 3, 1))               # -> NHWC, f32
    n, h, w, cin = x.shape
    planes = params["w1"].shape[1]
    out_c = EXPANSION * planes
    xb = x.astype(jnp.bfloat16)

    if stride == 1:
        # fused conv1(1x1)+bn1+relu + conv2(3x3,pad=1)+bn2+relu, per image.
        h2 = conv1_conv2_fused(xb, params["w1"], params["w2_taps"],
                               params["s1"], params["b1"],
                               params["s2"], params["b2"])     # (N,H,W,P) bf16
        ho, wo = h, w
    else:
        # TODO(synk): fuse the strided 3x3 conv as well; for stride>1 fall back
        # to conv1 kernel + JAX im2col + conv2 matmul kernel (bf16, fused BN).
        h1 = matmul_bn_act(xb.reshape(-1, cin), params["w1"],
                           params["s1"], params["b1"],
                           apply_relu=True, out_dtype=jnp.bfloat16)
        h1 = h1.reshape(n, h, w, planes)
        patches, (_, ho, wo) = im2col_3x3(h1, stride)
        h2 = matmul_bn_act(patches, params["w2_flat"],
                           params["s2"], params["b2"],
                           apply_relu=True, out_dtype=jnp.bfloat16)
        h2 = h2.reshape(n, ho, wo, planes)

    h2_flat = h2.reshape(-1, planes)
    if stride != 1 or cin != out_c:
        # conv3 + bn3 + projection shortcut + add + relu, all in one kernel.
        xs = xb[:, ::stride, ::stride, :].reshape(-1, cin)
        out = conv3_shortcut_fused(h2_flat, params["w3"], xs, params["ws"],
                                   params["s3"], params["b3"],
                                   params["ss"], params["bs"])
    else:
        # conv3 + bn3 + identity shortcut + relu, fused.
        res = xb.reshape(-1, cin)
        out = matmul_bn_act(h2_flat, params["w3"], params["s3"], params["b3"],
                            residual=res, apply_relu=True,
                            out_dtype=jnp.float32)
    out = out.reshape(n, ho, wo, out_c)
    return jnp.transpose(out, (0, 3, 1, 2))                # -> NCHW


# ----------------------------------------------------------------------------
# Deterministic parameter construction + pure-JAX references for validation
# ----------------------------------------------------------------------------
def fold_bn(gamma, beta, mean, var, eps=1e-5):
    scale = gamma / jnp.sqrt(var + eps)
    bias = beta - mean * scale
    return scale, bias


def make_params(key, in_planes, planes, stride):
    ks = jax.random.split(key, 8)
    out3 = EXPANSION * planes

    def bn_params(k, c):
        k1, k2, k3, k4 = jax.random.split(k, 4)
        gamma = 1.0 + 0.1 * jax.random.normal(k1, (c,), jnp.float32)
        beta = 0.1 * jax.random.normal(k2, (c,), jnp.float32)
        mean = 0.1 * jax.random.normal(k3, (c,), jnp.float32)
        var = 1.0 + 0.1 * jax.random.uniform(k4, (c,), jnp.float32)
        return fold_bn(gamma, beta, mean, var)

    w1 = 0.2 * jax.random.normal(ks[0], (in_planes, planes), jnp.float32)
    w2_hwio = 0.2 * jax.random.normal(ks[1], (3, 3, planes, planes),
                                      jnp.float32)
    w3 = 0.2 * jax.random.normal(ks[2], (planes, out3), jnp.float32)

    s1, b1 = bn_params(ks[3], planes)
    s2, b2 = bn_params(ks[4], planes)
    s3, b3 = bn_params(ks[5], out3)

    params = {
        "w1": w1,
        "w2_hwio": w2_hwio,
        "w2_taps": w2_hwio.reshape(9, planes, planes),   # (tap, cin, cout)
        "w2_flat": w2_hwio.reshape(9 * planes, planes),  # (ky,kx,cin) row order
        "w3": w3,
        "s1": s1, "b1": b1,
        "s2": s2, "b2": b2,
        "s3": s3, "b3": b3,
    }
    if stride != 1 or in_planes != out3:
        ws = 0.2 * jax.random.normal(ks[6], (in_planes, out3), jnp.float32)
        ss, bs = bn_params(ks[7], out3)
        params.update(ws=ws, ss=ss, bs=bs)
    return params


def reference_forward(x_nchw, p, stride=1, mirror_bf16=False):
    """Pure-JAX reference. mirror_bf16=True mirrors the kernel's bf16 casts."""
    x = jnp.transpose(x_nchw, (0, 2, 3, 1))
    cin = x.shape[-1]
    planes = p["w1"].shape[1]
    out3 = EXPANSION * planes
    dn = ("NHWC", "HWIO", "NHWC")
    cast = (lambda a: a.astype(jnp.bfloat16)) if mirror_bf16 else (lambda a: a)

    def conv(xx, w, s, pad):
        return jax.lax.conv_general_dilated(
            cast(xx), cast(w), (s, s), pad, dimension_numbers=dn,
            preferred_element_type=jnp.float32)

    h = conv(x, p["w1"].reshape(1, 1, cin, planes), 1, "VALID")
    h = jnp.maximum(h * p["s1"] + p["b1"], 0.0)
    h = conv(h, p["w2_hwio"], stride, ((1, 1), (1, 1)))
    h = jnp.maximum(h * p["s2"] + p["b2"], 0.0)
    h = conv(h, p["w3"].reshape(1, 1, planes, out3), 1, "VALID")
    h = h * p["s3"] + p["b3"]
    if "ws" in p:
        sc = conv(x, p["ws"].reshape(1, 1, cin, out3), stride, "VALID")
        sc = sc * p["ss"] + p["bs"]
    else:
        sc = cast(x[:, ::stride, ::stride, :]).astype(jnp.float32)
    out = jnp.maximum(h + sc, 0.0)
    return jnp.transpose(out, (0, 3, 1, 2))


if __name__ == "__main__":
    key = jax.random.PRNGKey(0)
    configs = [
        # projection shortcut (channel change), fused conv1+conv2 path
        dict(batch=2, in_planes=4, planes=4, spatial=16, stride=1),
        # identity shortcut, fused conv1+conv2 path
        dict(batch=2, in_planes=16, planes=4, spatial=16, stride=1),
        # strided block: im2col fallback for conv2 + fused conv3/shortcut
        dict(batch=2, in_planes=8, planes=4, spatial=16, stride=2),
    ]

    for idx, cfg in enumerate(configs):
        kx, kp = jax.random.split(jax.random.fold_in(key, idx))
        x = jax.random.normal(
            kx, (cfg["batch"], cfg["in_planes"], cfg["spatial"],
                 cfg["spatial"]), jnp.float32)
        params = make_params(kp, cfg["in_planes"], cfg["planes"],
                             cfg["stride"])

        out = jax.block_until_ready(
            bottleneck_forward(x, params, stride=cfg["stride"]))
        so = cfg["spatial"] // cfg["stride"]
        assert out.shape == (cfg["batch"], EXPANSION * cfg["planes"], so, so)

        ref_b = jax.block_until_ready(
            reference_forward(x, params, stride=cfg["stride"],
                              mirror_bf16=True))
        ref_f = jax.block_until_ready(
            reference_forward(x, params, stride=cfg["stride"],
                              mirror_bf16=False))

        err_b = float(jnp.max(jnp.abs(out - ref_b)))
        err_f = float(jnp.max(jnp.abs(out - ref_f)))
        assert jnp.allclose(out, ref_b, atol=2e-3, rtol=2e-3), (idx, err_b)
        assert jnp.allclose(out, ref_f, atol=5e-2, rtol=5e-2), (idx, err_f)

    print("KERNEL_OK")
</pallas_src>

<mosaic_0001>
module attributes {stable_mosaic.version = 11 : i64} {
  func.func @_conv12_kernel(%arg0: i32, %arg1: memref<1x16x16x4xbf16, #tpu.memory_space<vmem>>, %arg2: memref<4x4xbf16, #tpu.memory_space<vmem>>, %arg3: memref<9x4x4xbf16, #tpu.memory_space<vmem>>, %arg4: memref<1x4xf32, #tpu.memory_space<vmem>>, %arg5: memref<1x4xf32, #tpu.memory_space<vmem>>, %arg6: memref<1x4xf32, #tpu.memory_space<vmem>>, %arg7: memref<1x4xf32, #tpu.memory_space<vmem>>, %arg8: memref<1x16x16x4xbf16, #tpu.memory_space<vmem>>, %arg9: memref<18x18x4xf32, #tpu.memory_space<vmem>>) attributes {dimension_semantics = [#tpu.dimension_semantics<parallel>], iteration_bounds = array<i64: 2>, scalar_prefetch = 0 : i64, scratch_operands = 1 : i64, tpu.core_type = #tpu.core_type<tc>, window_params = [{transform_indices = @transform_0, window_bounds = array<i64: 1, 16, 16, 4>}, {pipeline_mode = #tpu.pipeline_mode<synchronous>, transform_indices = @transform_1, window_bounds = array<i64: 4, 4>}, {pipeline_mode = #tpu.pipeline_mode<synchronous>, transform_indices = @transform_2, window_bounds = array<i64: 9, 4, 4>}, {pipeline_mode = #tpu.pipeline_mode<synchronous>, transform_indices = @transform_3, window_bounds = array<i64: 1, 4>}, {pipeline_mode = #tpu.pipeline_mode<synchronous>, transform_indices = @transform_4, window_bounds = array<i64: 1, 4>}, {pipeline_mode = #tpu.pipeline_mode<synchronous>, transform_indices = @transform_5, window_bounds = array<i64: 1, 4>}, {pipeline_mode = #tpu.pipeline_mode<synchronous>, transform_indices = @transform_6, window_bounds = array<i64: 1, 4>}, {transform_indices = @transform_7, window_bounds = array<i64: 1, 16, 16, 4>}]} {
    %cst = arith.constant 0.000000e+00 : f32
    %0 = vector.broadcast %cst : f32 to vector<18x18x4xf32>
    %c0 = arith.constant 0 : index
    %c0_0 = arith.constant 0 : index
    %c0_1 = arith.constant 0 : index
    %1 = vector.load %arg9[%c0, %c0_0, %c0_1] : memref<18x18x4xf32, #tpu.memory_space<vmem>>, vector<18x18x4xf32>
    tpu.vector_store %arg9[%c0, %c0_0, %c0_1], %0 {strides = array<i32>} : memref<18x18x4xf32, #tpu.memory_space<vmem>>, vector<18x18x4xf32>,
    %c0_i32 = arith.constant 0 : i32
    %c16_i32 = arith.constant 16 : i32
    %2 = arith.addi %c0_i32, %c16_i32 : i32
    %c1_i32 = arith.constant 1 : i32
    scf.for %arg10 = %c0_i32 to %2 step %c1_i32  : i32 {
      %c0_7 = arith.constant 0 : index
      %4 = arith.index_cast %arg10 : i32 to index
      %c0_8 = arith.constant 0 : index
      %c0_9 = arith.constant 0 : index
      %5 = vector.load %arg1[%c0_7, %4, %c0_8, %c0_9] : memref<1x16x16x4xbf16, #tpu.memory_space<vmem>>, vector<1x1x16x4xbf16>
      %6 = vector.shape_cast %5 : vector<1x1x16x4xbf16> to vector<16x4xbf16>
      %c0_10 = arith.constant 0 : index
      %c0_11 = arith.constant 0 : index
      %7 = vector.load %arg2[%c0_10, %c0_11] : memref<4x4xbf16, #tpu.memory_space<vmem>>, vector<4x4xbf16>
      %cst_12 = arith.constant dense<0.000000e+00> : vector<16x4xf32>
      %8 = tpu.matmul %6, %7, %cst_12 {dimension_numbers = #tpu.dot_dimension_numbers<[1], [0], [0], [1], [0, 0, 1, 1], [], []>} : vector<16x4xbf16>, vector<4x4xbf16>, vector<16x4xf32> -> vector<16x4xf32>
      %c0_13 = arith.constant 0 : index
      %c0_14 = arith.constant 0 : index
      %9 = vector.load %arg4[%c0_13, %c0_14] : memref<1x4xf32, #tpu.memory_space<vmem>>, vector<1x4xf32>
      %10 = vector.broadcast %9 : vector<1x4xf32> to vector<16x4xf32>
      %11 = arith.mulf %8, %10 : vector<16x4xf32>
      %c0_15 = arith.constant 0 : index
      %c0_16 = arith.constant 0 : index
      %12 = vector.load %arg5[%c0_15, %c0_16] : memref<1x4xf32, #tpu.memory_space<vmem>>, vector<1x4xf32>
      %13 = vector.broadcast %12 : vector<1x4xf32> to vector<16x4xf32>
      %14 = arith.addf %11, %13 : vector<16x4xf32>
      %cst_17 = arith.constant 0.000000e+00 : f32
      %15 = vector.broadcast %cst_17 : f32 to vector<16x4xf32>
      %16 = arith.maximumf %14, %15 : vector<16x4xf32>
      %c1_i32_18 = arith.constant 1 : i32
      %17 = arith.addi %arg10, %c1_i32_18 : i32
      %18 = arith.index_cast %17 : i32 to index
      %c1 = arith.constant 1 : index
      %c0_19 = arith.constant 0 : index
      %19 = vector.load %arg9[%18, %c1, %c0_19] : memref<18x18x4xf32, #tpu.memory_space<vmem>>, vector<1x16x4xf32>
      %20 = vector.shape_cast %19 : vector<1x16x4xf32> to vector<16x4xf32>
      %21 = vector.shape_cast %16 : vector<16x4xf32> to vector<1x16x4xf32>
      tpu.vector_store %arg9[%18, %c1, %c0_19], %21 {strides = array<i32>} : memref<18x18x4xf32, #tpu.memory_space<vmem>>, vector<1x16x4xf32>,
    }
    %c16_i32_2 = arith.constant 16 : i32
    %c0_i32_3 = arith.constant 0 : i32
    %c16_i32_4 = arith.constant 16 : i32
    %3 = arith.addi %c0_i32_3, %c16_i32_4 : i32
    %c1_i32_5 = arith.constant 1 : i32
    scf.for %arg10 = %c0_i32_3 to %3 step %c1_i32_5  : i32 {
      %cst_7 = arith.constant 0.000000e+00 : f32
      %4 = vector.broadcast %cst_7 : f32 to vector<16x4xf32>
      %c0_i32_8 = arith.constant 0 : i32
      %5 = arith.addi %arg10, %c0_i32_8 : i32
      %6 = arith.index_cast %5 : i32 to index
      %c0_9 = arith.constant 0 : index
      %c0_10 = arith.constant 0 : index
      %7 = vector.load %arg9[%6, %c0_9, %c0_10] : memref<18x18x4xf32, #tpu.memory_space<vmem>>, vector<1x16x4xf32>
      %8 = vector.shape_cast %7 : vector<1x16x4xf32> to vector<16x4xf32>
      %9 = arith.truncf %8 : vector<16x4xf32> to vector<16x4xbf16>
      %c0_11 = arith.constant 0 : index
      %c0_12 = arith.constant 0 : index
      %c0_13 = arith.constant 0 : index
      %10 = vector.load %arg3[%c0_11, %c0_12, %c0_13] : memref<9x4x4xbf16, #tpu.memory_space<vmem>>, vector<1x4x4xbf16>
      %11 = vector.shape_cast %10 : vector<1x4x4xbf16> to vector<4x4xbf16>
      %cst_14 = arith.constant dense<0.000000e+00> : vector<16x4xf32>
      %12 = tpu.matmul %9, %11, %cst_14 {dimension_numbers = #tpu.dot_dimension_numbers<[1], [0], [0], [1], [0, 0, 1, 1], [], []>} : vector<16x4xbf16>, vector<4x4xbf16>, vector<16x4xf32> -> vector<16x4xf32>
      %13 = arith.addf %4, %12 : vector<16x4xf32>
      %c0_i32_15 = arith.constant 0 : i32
      %14 = arith.addi %arg10, %c0_i32_15 : i32
      %15 = arith.index_cast %14 : i32 to index
      %c1 = arith.constant 1 : index
      %c0_16 = arith.constant 0 : index
      %16 = vector.load %arg9[%15, %c1, %c0_16] : memref<18x18x4xf32, #tpu.memory_space<vmem>>, vector<1x16x4xf32>
      %17 = vector.shape_cast %16 : vector<1x16x4xf32> to vector<16x4xf32>
      %18 = arith.truncf %17 : vector<16x4xf32> to vector<16x4xbf16>
      %c1_17 = arith.constant 1 : index
      %c0_18 = arith.constant 0 : index
      %c0_19 = arith.constant 0 : index
      %19 = vector.load %arg3[%c1_17, %c0_18, %c0_19] : memref<9x4x4xbf16, #tpu.memory_space<vmem>>, vector<1x4x4xbf16>
      %20 = vector.shape_cast %19 : vector<1x4x4xbf16> to vector<4x4xbf16>
      %cst_20 = arith.constant dense<0.000000e+00> : vector<16x4xf32>
      %21 = tpu.matmul %18, %20, %cst_20 {dimension_numbers = #tpu.dot_dimension_numbers<[1], [0], [0], [1], [0, 0, 1, 1], [], []>} : vector<16x4xbf16>, vector<4x4xbf16>, vector<16x4xf32> -> vector<16x4xf32>
      %22 = arith.addf %13, %21 : vector<16x4xf32>
      %c0_i32_21 = arith.constant 0 : i32
      %23 = arith.addi %arg10, %c0_i32_21 : i32
      %24 = arith.index_cast %23 : i32 to index
      %c2 = arith.constant 2 : index
      %c0_22 = arith.constant 0 : index
      %25 = vector.load %arg9[%24, %c2, %c0_22] : memref<18x18x4xf32, #tpu.memory_space<vmem>>, vector<1x16x4xf32>
      %26 = vector.shape_cast %25 : vector<1x16x4xf32> to vector<16x4xf32>
      %27 = arith.truncf %26 : vector<16x4xf32> to vector<16x4xbf16>
      %c2_23 = arith.constant 2 : index
      %c0_24 = arith.constant 0 : index
      %c0_25 = arith.constant 0 : index
      %28 = vector.load %arg3[%c2_23, %c0_24, %c0_25] : memref<9x4x4xbf16, #tpu.memory_space<vmem>>, vector<1x4x4xbf16>
      %29 = vector.shape_cast %28 : vector<1x4x4xbf16> to vector<4x4xbf16>
      %cst_26 = arith.constant dense<0.000000e+00> : vector<16x4xf32>
      %30 = tpu.matmul %27, %29, %cst_26 {dimension_numbers = #tpu.dot_dimension_numbers<[1], [0], [0], [1], [0, 0, 1, 1], [], []>} : vector<16x4xbf16>, vector<4x4xbf16>, vector<16x4xf32> -> vector<16x4xf32>
      %31 = arith.addf %22, %30 : vector<16x4xf32>
      %c1_i32_27 = arith.constant 1 : i32
      %32 = arith.addi %arg10, %c1_i32_27 : i32
      %33 = arith.index_cast %32 : i32 to index
      %c0_28 = arith.constant 0 : index
      %c0_29 = arith.constant 0 : index
      %34 = vector.load %arg9[%33, %c0_28, %c0_29] : memref<18x18x4xf32, #tpu.memory_space<vmem>>, vector<1x16x4xf32>
      %35 = vector.shape_cast %34 : vector<1x16x4xf32> to vector<16x4xf32>
      %36 = arith.truncf %35 : vector<16x4xf32> to vector<16x4xbf16>
      %c3 = arith.constant 3 : index
      %c0_30 = arith.constant 0 : index
      %c0_31 = arith.constant 0 : index
      %37 = vector.load %arg3[%c3, %c0_30, %c0_31] : memref<9x4x4xbf16, #tpu.memory_space<vmem>>, vector<1x4x4xbf16>
      %38 = vector.shape_cast %37 : vector<1x4x4xbf16> to vector<4x4xbf16>
      %cst_32 = arith.constant dense<0.000000e+00> : vector<16x4xf32>
      %39 = tpu.matmul %36, %38, %cst_32 {dimension_numbers = #tpu.dot_dimension_numbers<[1], [0], [0], [1], [0, 0, 1, 1], [], []>} : vector<16x4xbf16>, vector<4x4xbf16>, vector<16x4xf32> -> vector<16x4xf32>
      %40 = arith.addf %31, %39 : vector<16x4xf32>
      %c1_i32_33 = arith.constant 1 : i32
      %41 = arith.addi %arg10, %c1_i32_33 : i32
      %42 = arith.index_cast %41 : i32 to index
      %c1_34 = arith.constant 1 : index
      %c0_35 = arith.constant 0 : index
      %43 = vector.load %arg9[%42, %c1_34, %c0_35] : memref<18x18x4xf32, #tpu.memory_space<vmem>>, vector<1x16x4xf32>
      %44 = vector.shape_cast %43 : vector<1x16x4xf32> to vector<16x4xf32>
      %45 = arith.truncf %44 : vector<16x4xf32> to vector<16x4xbf16>
      %c4 = arith.constant 4 : index
      %c0_36 = arith.constant 0 : index
      %c0_37 = arith.constant 0 : index
      %46 = vector.load %arg3[%c4, %c0_36, %c0_37] : memref<9x4x4xbf16, #tpu.memory_space<vmem>>, vector<1x4x4xbf16>
      %47 = vector.shape_cast %46 : vector<1x4x4xbf16> to vector<4x4xbf16>
      %cst_38 = arith.constant dense<0.000000e+00> : vector<16x4xf32>
      %48 = tpu.matmul %45, %47, %cst_38 {dimension_numbers = #tpu.dot_dimension_numbers<[1], [0], [0], [1], [0, 0, 1, 1], [], []>} : vector<16x4xbf16>, vector<4x4xbf16>, vector<16x4xf32> -> vector<16x4xf32>
      %49 = arith.addf %40, %48 : vector<16x4xf32>
      %c1_i32_39 = arith.constant 1 : i32
      %50 = arith.addi %arg10, %c1_i32_39 : i32
      %51 = arith.index_cast %50 : i32 to index
      %c2_40 = arith.constant 2 : index
      %c0_41 = arith.constant 0 : index
      %52 = vector.load %arg9[%51, %c2_40, %c0_41] : memref<18x18x4xf32, #tpu.memory_space<vmem>>, vector<1x16x4xf32>
      %53 = vector.shape_cast %52 : vector<1x16x4xf32> to vector<16x4xf32>
      %54 = arith.truncf %53 : vector<16x4xf32> to vector<16x4xbf16>
      %c5 = arith.constant 5 : index
      %c0_42 = arith.constant 0 : index
      %c0_43 = arith.constant 0 : index
      %55 = vector.load %arg3[%c5, %c0_42, %c0_43] : memref<9x4x4xbf16, #tpu.memory_space<vmem>>, vector<1x4x4xbf16>
      %56 = vector.shape_cast %55 : vector<1x4x4xbf16> to vector<4x4xbf16>
      %cst_44 = arith.constant dense<0.000000e+00> : vector<16x4xf32>
      %57 = tpu.matmul %54, %56, %cst_44 {dimension_numbers = #tpu.dot_dimension_numbers<[1], [0], [0], [1], [0, 0, 1, 1], [], []>} : vector<16x4xbf16>, vector<4x4xbf16>, vector<16x4xf32> -> vector<16x4xf32>
      %58 = arith.addf %49, %57 : vector<16x4xf32>
      %c2_i32 = arith.constant 2 : i32
      %59 = arith.addi %arg10, %c2_i32 : i32
      %60 = arith.index_cast %59 : i32 to index
      %c0_45 = arith.constant 0 : index
      %c0_46 = arith.constant 0 : index
      %61 = vector.load %arg9[%60, %c0_45, %c0_46] : memref<18x18x4xf32, #tpu.memory_space<vmem>>, vector<1x16x4xf32>
      %62 = vector.shape_cast %61 : vector<1x16x4xf32> to vector<16x4xf32>
      %63 = arith.truncf %62 : vector<16x4xf32> to vector<16x4xbf16>
      %c6 = arith.constant 6 : index
      %c0_47 = arith.constant 0 : index
      %c0_48 = arith.constant 0 : index
      %64 = vector.load %arg3[%c6, %c0_47, %c0_48] : memref<9x4x4xbf16, #tpu.memory_space<vmem>>, vector<1x4x4xbf16>
      %65 = vector.shape_cast %64 : vector<1x4x4xbf16> to vector<4x4xbf16>
      %cst_49 = arith.constant dense<0.000000e+00> : vector<16x4xf32>
      %66 = tpu.matmul %63, %65, %cst_49 {dimension_numbers = #tpu.dot_dimension_numbers<[1], [0], [0], [1], [0, 0, 1, 1], [], []>} : vector<16x4xbf16>, vector<4x4xbf16>, vector<16x4xf32> -> vector<16x4xf32>
      %67 = arith.addf %58, %66 : vector<16x4xf32>
      %c2_i32_50 = arith.constant 2 : i32
      %68 = arith.addi %arg10, %c2_i32_50 : i32
      %69 = arith.index_cast %68 : i32 to index
      %c1_51 = arith.constant 1 : index
      %c0_52 = arith.constant 0 : index
      %70 = vector.load %arg9[%69, %c1_51, %c0_52] : memref<18x18x4xf32, #tpu.memory_space<vmem>>, vector<1x16x4xf32>
      %71 = vector.shape_cast %70 : vector<1x16x4xf32> to vector<16x4xf32>
      %72 = arith.truncf %71 : vector<16x4xf32> to vector<16x4xbf16>
      %c7 = arith.constant 7 : index
      %c0_53 = arith.constant 0 : index
      %c0_54 = arith.constant 0 : index
      %73 = vector.load %arg3[%c7, %c0_53, %c0_54] : memref<9x4x4xbf16, #tpu.memory_space<vmem>>, vector<1x4x4xbf16>
      %74 = vector.shape_cast %73 : vector<1x4x4xbf16> to vector<4x4xbf16>
      %cst_55 = arith.constant dense<0.000000e+00> : vector<16x4xf32>
      %75 = tpu.matmul %72, %74, %cst_55 {dimension_numbers = #tpu.dot_dimension_numbers<[1], [0], [0], [1], [0, 0, 1, 1], [], []>} : vector<16x4xbf16>, vector<4x4xbf16>, vector<16x4xf32> -> vector<16x4xf32>
      %76 = arith.addf %67, %75 : vector<16x4xf32>
      %c2_i32_56 = arith.constant 2 : i32
      %77 = arith.addi %arg10, %c2_i32_56 : i32
      %78 = arith.index_cast %77 : i32 to index
      %c2_57 = arith.constant 2 : index
      %c0_58 = arith.constant 0 : index
      %79 = vector.load %arg9[%78, %c2_57, %c0_58] : memref<18x18x4xf32, #tpu.memory_space<vmem>>, vector<1x16x4xf32>
      %80 = vector.shape_cast %79 : vector<1x16x4xf32> to vector<16x4xf32>
      %81 = arith.truncf %80 : vector<16x4xf32> to vector<16x4xbf16>
      %c8 = arith.constant 8 : index
      %c0_59 = arith.constant 0 : index
      %c0_60 = arith.constant 0 : index
      %82 = vector.load %arg3[%c8, %c0_59, %c0_60] : memref<9x4x4xbf16, #tpu.memory_space<vmem>>, vector<1x4x4xbf16>
      %83 = vector.shape_cast %82 : vector<1x4x4xbf16> to vector<4x4xbf16>
      %cst_61 = arith.constant dense<0.000000e+00> : vector<16x4xf32>
      %84 = tpu.matmul %81, %83, %cst_61 {dimension_numbers = #tpu.dot_dimension_numbers<[1], [0], [0], [1], [0, 0, 1, 1], [], []>} : vector<16x4xbf16>, vector<4x4xbf16>, vector<16x4xf32> -> vector<16x4xf32>
      %85 = arith.addf %76, %84 : vector<16x4xf32>
      %c0_62 = arith.constant 0 : index
      %c0_63 = arith.constant 0 : index
      %86 = vector.load %arg6[%c0_62, %c0_63] : memref<1x4xf32, #tpu.memory_space<vmem>>, vector<1x4xf32>
      %87 = vector.broadcast %86 : vector<1x4xf32> to vector<16x4xf32>
      %88 = arith.mulf %85, %87 : vector<16x4xf32>
      %c0_64 = arith.constant 0 : index
      %c0_65 = arith.constant 0 : index
      %89 = vector.load %arg7[%c0_64, %c0_65] : memref<1x4xf32, #tpu.memory_space<vmem>>, vector<1x4xf32>
      %90 = vector.broadcast %89 : vector<1x4xf32> to vector<16x4xf32>
      %91 = arith.addf %88, %90 : vector<16x4xf32>
      %cst_66 = arith.constant 0.000000e+00 : f32
      %92 = vector.broadcast %cst_66 : f32 to vector<16x4xf32>
      %93 = arith.maximumf %91, %92 : vector<16x4xf32>
      %94 = arith.truncf %93 : vector<16x4xf32> to vector<16x4xbf16>
      %c0_67 = arith.constant 0 : index
      %95 = arith.index_cast %arg10 : i32 to index
      %c0_68 = arith.constant 0 : index
      %c0_69 = arith.constant 0 : index
      %96 = vector.load %arg8[%c0_67, %95, %c0_68, %c0_69] : memref<1x16x16x4xbf16, #tpu.memory_space<vmem>>, vector<1x1x16x4xbf16>
      %97 = vector.shape_cast %96 : vector<1x1x16x4xbf16> to vector<16x4xbf16>
      %98 = vector.shape_cast %94 : vector<16x4xbf16> to vector<1x1x16x4xbf16>
      tpu.vector_store %arg8[%c0_67, %95, %c0_68, %c0_69], %98 {strides = array<i32>} : memref<1x16x16x4xbf16, #tpu.memory_space<vmem>>, vector<1x1x16x4xbf16>,
    }
    %c16_i32_6 = arith.constant 16 : i32
    return
  }
  func.func @transform_0(%arg0: i32) -> (i32, i32, i32, i32) {
    %c0_i32 = arith.constant 0 : i32
    %c0_i32_0 = arith.constant 0 : i32
    %c0_i32_1 = arith.constant 0 : i32
    %c0_i32_2 = arith.constant 0 : i32
    return %arg0, %c0_i32, %c0_i32_0, %c0_i32_1 : i32, i32, i32, i32
  }
  func.func @transform_1(%arg0: i32) -> (i32, i32) {
    %c0_i32 = arith.constant 0 : i32
    %c0_i32_0 = arith.constant 0 : i32
    %c0_i32_1 = arith.constant 0 : i32
    return %c0_i32, %c0_i32_0 : i32, i32
  }
  func.func @transform_2(%arg0: i32) -> (i32, i32, i32) {
    %c0_i32 = arith.constant 0 : i32
    %c0_i32_0 = arith.constant 0 : i32
    %c0_i32_1 = arith.constant 0 : i32
    %c0_i32_2 = arith.constant 0 : i32
    return %c0_i32, %c0_i32_0, %c0_i32_1 : i32, i32, i32
  }
  func.func @transform_3(%arg0: i32) -> (i32, i32) {
    %c0_i32 = arith.constant 0 : i32
    %c0_i32_0 = arith.constant 0 : i32
    %c0_i32_1 = arith.constant 0 : i32
    return %c0_i32, %c0_i32_0 : i32, i32
  }
  func.func @transform_4(%arg0: i32) -> (i32, i32) {
    %c0_i32 = arith.constant 0 : i32
    %c0_i32_0 = arith.constant 0 : i32
    %c0_i32_1 = arith.constant 0 : i32
    return %c0_i32, %c0_i32_0 : i32, i32
  }
  func.func @transform_5(%arg0: i32) -> (i32, i32) {
    %c0_i32 = arith.constant 0 : i32
    %c0_i32_0 = arith.constant 0 : i32
    %c0_i32_1 = arith.constant 0 : i32
    return %c0_i32, %c0_i32_0 : i32, i32
  }
  func.func @transform_6(%arg0: i32) -> (i32, i32) {
    %c0_i32 = arith.constant 0 : i32
    %c0_i32_0 = arith.constant 0 : i32
    %c0_i32_1 = arith.constant 0 : i32
    return %c0_i32, %c0_i32_0 : i32, i32
  }
  func.func @transform_7(%arg0: i32) -> (i32, i32, i32, i32) {
    %c0_i32 = arith.constant 0 : i32
    %c0_i32_0 = arith.constant 0 : i32
    %c0_i32_1 = arith.constant 0 : i32
    %c0_i32_2 = arith.constant 0 : i32
    return %arg0, %c0_i32, %c0_i32_0, %c0_i32_1 : i32, i32, i32, i32
  }
}

module attributes {stable_mosaic.version = 11 : i64} {
  func.func @_conv3_proj_kernel(%arg0: i32, %arg1: i32, %arg2: memref<512x4xbf16, #tpu.memory_space<vmem>>, %arg3: memref<4x16xbf16, #tpu.memory_space<vmem>>, %arg4: memref<512x4xbf16, #tpu.memory_space<vmem>>, %arg5: memref<4x16xbf16, #tpu.memory_space<vmem>>, %arg6: memref<1x16xf32, #tpu.memory_space<vmem>>, %arg7: memref<1x16xf32, #tpu.memory_space<vmem>>, %arg8: memref<1x16xf32, #tpu.memory_space<vmem>>, %arg9: memref<512x16xf32, #tpu.memory_space<vmem>>, %arg10: memref<512x16xf32, #tpu.memory_space<vmem>>) attributes {dimension_semantics = [#tpu.dimension_semantics<parallel>, #tpu.dimension_semantics<arbitrary>], iteration_bounds = array<i64: 1, 1>, scalar_prefetch = 0 : i64, scratch_operands = 1 : i64, tpu.core_type = #tpu.core_type<tc>, window_params = [{transform_indices = @transform_0, window_bounds = array<i64: 512, 4>}, {pipeline_mode = #tpu.pipeline_mode<synchronous>, transform_indices = @transform_1, window_bounds = array<i64: 4, 16>}, {transform_indices = @transform_2, window_bounds = array<i64: 512, 4>}, {transform_indices = @transform_3, window_bounds = array<i64: 4, 16>}, {pipeline_mode = #tpu.pipeline_mode<synchronous>, transform_indices = @transform_4, window_bounds = array<i64: 1, 16>}, {pipeline_mode = #tpu.pipeline_mode<synchronous>, transform_indices = @transform_5, window_bounds = array<i64: 1, 16>}, {pipeline_mode = #tpu.pipeline_mode<synchronous>, transform_indices = @transform_6, window_bounds = array<i64: 1, 16>}, {transform_indices = @transform_7, window_bounds = array<i64: 512, 16>}]} {
    %c0_i32 = arith.constant 0 : i32
    %0 = arith.cmpi eq, %arg1, %c0_i32 : i32
    %1 = arith.extui %0 : i1 to i32
    %c0_i32_0 = arith.constant 0 : i32
    %2 = arith.cmpi ne, %1, %c0_i32_0 : i32
    scf.if %2 {
      %c0_12 = arith.constant 0 : index
      %c0_13 = arith.constant 0 : index
      %15 = vector.load %arg2[%c0_12, %c0_13] : memref<512x4xbf16, #tpu.memory_space<vmem>>, vector<512x4xbf16>
      %c0_14 = arith.constant 0 : index
      %c0_15 = arith.constant 0 : index
      %16 = vector.load %arg3[%c0_14, %c0_15] : memref<4x16xbf16, #tpu.memory_space<vmem>>, vector<4x16xbf16>
      %cst_16 = arith.constant dense<0.000000e+00> : vector<512x16xf32>
      %17 = tpu.matmul %15, %16, %cst_16 {dimension_numbers = #tpu.dot_dimension_numbers<[1], [0], [0], [1], [0, 0, 1, 1], [], []>} : vector<512x4xbf16>, vector<4x16xbf16>, vector<512x16xf32> -> vector<512x16xf32>
      %c0_17 = arith.constant 0 : index
      %c0_18 = arith.constant 0 : index
      %18 = vector.load %arg6[%c0_17, %c0_18] : memref<1x16xf32, #tpu.memory_space<vmem>>, vector<1x16xf32>
      %19 = vector.broadcast %18 : vector<1x16xf32> to vector<512x16xf32>
      %20 = arith.mulf %17, %19 : vector<512x16xf32>
      %c0_19 = arith.constant 0 : index
      %c0_20 = arith.constant 0 : index
      %21 = vector.load %arg8[%c0_19, %c0_20] : memref<1x16xf32, #tpu.memory_space<vmem>>, vector<1x16xf32>
      %22 = vector.broadcast %21 : vector<1x16xf32> to vector<512x16xf32>
      %23 = arith.addf %20, %22 : vector<512x16xf32>
      %c0_21 = arith.constant 0 : index
      %c0_22 = arith.constant 0 : index
      %24 = vector.load %arg10[%c0_21, %c0_22] : memref<512x16xf32, #tpu.memory_space<vmem>>, vector<512x16xf32>
      tpu.vector_store %arg10[%c0_21, %c0_22], %23 {strides = array<i32>} : memref<512x16xf32, #tpu.memory_space<vmem>>, vector<512x16xf32>,
    } else {
    }
    %c0 = arith.constant 0 : index
    %c0_1 = arith.constant 0 : index
    %3 = vector.load %arg10[%c0, %c0_1] : memref<512x16xf32, #tpu.memory_space<vmem>>, vector<512x16xf32>
    %c0_2 = arith.constant 0 : index
    %c0_3 = arith.constant 0 : index
    %4 = vector.load %arg4[%c0_2, %c0_3] : memref<512x4xbf16, #tpu.memory_space<vmem>>, vector<512x4xbf16>
    %c0_4 = arith.constant 0 : index
    %c0_5 = arith.constant 0 : index
    %5 = vector.load %arg5[%c0_4, %c0_5] : memref<4x16xbf16, #tpu.memory_space<vmem>>, vector<4x16xbf16>
    %cst = arith.constant dense<0.000000e+00> : vector<512x16xf32>
    %6 = tpu.matmul %4, %5, %cst {dimension_numbers = #tpu.dot_dimension_numbers<[1], [0], [0], [1], [0, 0, 1, 1], [], []>} : vector<512x4xbf16>, vector<4x16xbf16>, vector<512x16xf32> -> vector<512x16xf32>
    %c0_6 = arith.constant 0 : index
    %c0_7 = arith.constant 0 : index
    %7 = vector.load %arg7[%c0_6, %c0_7] : memref<1x16xf32, #tpu.memory_space<vmem>>, vector<1x16xf32>
    %8 = vector.broadcast %7 : vector<1x16xf32> to vector<512x16xf32>
    %9 = arith.mulf %6, %8 : vector<512x16xf32>
    %10 = arith.addf %3, %9 : vector<512x16xf32>
    %c0_8 = arith.constant 0 : index
    %c0_9 = arith.constant 0 : index
    %11 = vector.load %arg10[%c0_8, %c0_9] : memref<512x16xf32, #tpu.memory_space<vmem>>, vector<512x16xf32>
    tpu.vector_store %arg10[%c0_8, %c0_9], %10 {strides = array<i32>} : memref<512x16xf32, #tpu.memory_space<vmem>>, vector<512x16xf32>,
    %c0_i32_10 = arith.constant 0 : i32
    %12 = arith.cmpi eq, %arg1, %c0_i32_10 : i32
    %13 = arith.extui %12 : i1 to i32
    %c0_i32_11 = arith.constant 0 : i32
    %14 = arith.cmpi ne, %13, %c0_i32_11 : i32
    scf.if %14 {
      %c0_12 = arith.constant 0 : index
      %c0_13 = arith.constant 0 : index
      %15 = vector.load %arg10[%c0_12, %c0_13] : memref<512x16xf32, #tpu.memory_space<vmem>>, vector<512x16xf32>
      %cst_14 = arith.constant 0.000000e+00 : f32
      %16 = vector.broadcast %cst_14 : f32 to vector<512x16xf32>
      %17 = arith.maximumf %15, %16 : vector<512x16xf32>
      %c0_15 = arith.constant 0 : index
      %c0_16 = arith.constant 0 : index
      %18 = vector.load %arg9[%c0_15, %c0_16] : memref<512x16xf32, #tpu.memory_space<vmem>>, vector<512x16xf32>
      tpu.vector_store %arg9[%c0_15, %c0_16], %17 {strides = array<i32>} : memref<512x16xf32, #tpu.memory_space<vmem>>, vector<512x16xf32>,
    } else {
    }
    return
  }
  func.func @transform_0(%arg0: i32, %arg1: i32) -> (i32, i32) {
    %c0_i32 = arith.constant 0 : i32
    %c0_i32_0 = arith.constant 0 : i32
    return %arg0, %c0_i32 : i32, i32
  }
  func.func @transform_1(%arg0: i32, %arg1: i32) -> (i32, i32) {
    %c0_i32 = arith.constant 0 : i32
    %c0_i32_0 = arith.constant 0 : i32
    %c0_i32_1 = arith.constant 0 : i32
    return %c0_i32, %c0_i32_0 : i32, i32
  }
  func.func @transform_2(%arg0: i32, %arg1: i32) -> (i32, i32) {
    %c0_i32 = arith.constant 0 : i32
    return %arg0, %arg1 : i32, i32
  }
  func.func @transform_3(%arg0: i32, %arg1: i32) -> (i32, i32) {
    %c0_i32 = arith.constant 0 : i32
    %c0_i32_0 = arith.constant 0 : i32
    return %arg1, %c0_i32 : i32, i32
  }
  func.func @transform_4(%arg0: i32, %arg1: i32) -> (i32, i32) {
    %c0_i32 = arith.constant 0 : i32
    %c0_i32_0 = arith.constant 0 : i32
    %c0_i32_1 = arith.constant 0 : i32
    return %c0_i32, %c0_i32_0 : i32, i32
  }
  func.func @transform_5(%arg0: i32, %arg1: i32) -> (i32, i32) {
    %c0_i32 = arith.constant 0 : i32
    %c0_i32_0 = arith.constant 0 : i32
    %c0_i32_1 = arith.constant 0 : i32
    return %c0_i32, %c0_i32_0 : i32, i32
  }
  func.func @transform_6(%arg0: i32, %arg1: i32) -> (i32, i32) {
    %c0_i32 = arith.constant 0 : i32
    %c0_i32_0 = arith.constant 0 : i32
    %c0_i32_1 = arith.constant 0 : i32
    return %c0_i32, %c0_i32_0 : i32, i32
  }
  func.func @transform_7(%arg0: i32, %arg1: i32) -> (i32, i32) {
    %c0_i32 = arith.constant 0 : i32
    %c0_i32_0 = arith.constant 0 : i32
    return %arg0, %c0_i32 : i32, i32
  }
}

</mosaic_0001>

<llo_original>
// kernel: bottleneck_forward.2
$region0: #{bottleneck_forward.2}
  #allocation0 [shape = 'u32[]', space=smem, size = 0x4, offset = 0x4, fixed_abs, tag = 'smem constant byte address 0x4 - core index']
  #allocation1 [shape = 'u32[144,128]{1,0:T(1,128)}', space=vmem, size = 0x12000, scoped, tag = 'internal scratch']
  #allocation2 [shape = 'f32[18,18,4]{2,1,0:T(8,128)}', space=vmem, size = 0x36000, scoped, tag = 'scratch operand']
  %s0 = inlined_call_operand.vmem [shape: bf16[2,16,16,4], index: 0, kind: input, shape index: {}]
  %s1 = inlined_call_operand.vmem [shape: bf16[4,4], index: 1, kind: input, shape index: {}]
  %s2 = inlined_call_operand.vmem [shape: bf16[9,4,4], index: 2, kind: input, shape index: {}]
  %s3 = inlined_call_operand.vmem [shape: f32[1,4], index: 3, kind: input, shape index: {}]
  %s4 = inlined_call_operand.vmem [shape: f32[1,4], index: 4, kind: input, shape index: {}]
  %s5 = inlined_call_operand.vmem [shape: f32[1,4], index: 5, kind: input, shape index: {}]
  %s6 = inlined_call_operand.vmem [shape: f32[1,4], index: 6, kind: input, shape index: {}]
  %s7 = inlined_call_operand.vmem [shape: bf16[2,16,16,4], index: 7, kind: output, shape index: {}]
  %s8 = sld [smem:[#allocation0]]
  $region75: #{bottleneck_forward.2} parent=0
    _
  %s10 = ssub.s32 1, %s8
  %s11 = scalar_select 0, %s10, %s8
  loop: start=0, step=1, limit=4
  $region2: #{bottleneck_forward.2} parent=0 // loop_pre_header
    _
  $region3: #{bottleneck_forward.2} parent=0 // loop_header
    %s13 = sphi 0, %s17
    %p14 = scmp.ge.s32.totalorder %s13, 4
    %s23 = sphi 0, %s25
    %s26 = sphi 0, %s23
    %s27 = sphi 0, %s26
    %s43 = sphi 0, %s27
    %s47 = sphi 0, %s47
    %s49 = sphi 0, %s47
    %s50 = sphi 0, %s49
    %s64 = sphi 0, %s50
    %s68 = sphi 0, %s68
    %s70 = sphi 0, %s68
    %s71 = sphi 0, %s70
    %s85 = sphi 0, %s71
    %s89 = sphi 0, %s89
    %s91 = sphi 0, %s89
    %s92 = sphi 0, %s91
    %s106 = sphi 0, %s92
    %s110 = sphi 0, %s110
    %s112 = sphi 0, %s110
    %s113 = sphi 0, %s112
    %s127 = sphi 0, %s113
    %s131 = sphi 0, %s131
    %s133 = sphi 0, %s131
    %s134 = sphi 0, %s133
    %s148 = sphi 0, %s134
    %s152 = sphi 0, %s152
    %s154 = sphi 0, %s152
    %s155 = sphi 0, %s154
    %s169 = sphi 0, %s155
    %s175 = sphi 0, %s177
    %s178 = sphi 0, %s175
    %s179 = sphi 0, %s178
    %s195 = sphi 0, %s179
  $region4: #{bottleneck_forward.2} parent=0 // loop_header_branch
    %16 = sbr.rel (%p14) target = $region8
  $region5: #{bottleneck_forward.2} parent=0 // loop_body
    %s18 = ssub.s32 %s13, 1
    %s19 = ssub.s32 %s13, 2
    %s20 = sadd.s32 %s13, 1
    %s21 = ssub.s32 %s13, %s20
    %p22 = scmp.eq.s32.totalorder %s21, 0
    %s24 = sadd.s32 %s23, 1
    %s25 = scalar_select %p22, %s23, %s24
    %p28 = pneg %p22
    %p29 = scmp.eq.s32.totalorder %s13, 1
    %p30 = por %p28, %p29
    %p31 = scmp.ne.s32.totalorder %s23, %s26
    %p32 = scmp.eq.s32.totalorder %s13, 0
    %p33 = por %p31, %p32
    %p34 = scmp.ne.s32.totalorder %s23, %s26
    %p35 = scmp.eq.s32.totalorder %s18, 1
    %p36 = por %p34, %p35
    %p37 = scmp.ne.s32.totalorder %s26, %s27
    %p38 = scmp.eq.s32.totalorder %s18, 0
    %p39 = por %p37, %p38
    %p40 = scmp.ne.s32.totalorder %s26, %s27
    %p41 = scmp.eq.s32.totalorder %s19, 1
    %p42 = por %p40, %p41
    %p44 = scmp.ne.s32.totalorder %s27, %s43
    %p45 = scmp.eq.s32.totalorder %s19, 0
    %p46 = por %p44, %p45
    %s48 = sadd.s32 %s47, 1
    %p51 = scmp.eq.s32.totalorder %s13, 1
    %p52 = scmp.ne.s32.totalorder %s47, %s49
    %p53 = scmp.eq.s32.totalorder %s13, 0
    %p54 = por %p52, %p53
    %p55 = scmp.ne.s32.totalorder %s47, %s49
    %p56 = scmp.eq.s32.totalorder %s18, 1
    %p57 = por %p55, %p56
    %p58 = scmp.ne.s32.totalorder %s49, %s50
    %p59 = scmp.eq.s32.totalorder %s18, 0
    %p60 = por %p58, %p59
    %p61 = scmp.ne.s32.totalorder %s49, %s50
    %p62 = scmp.eq.s32.totalorder %s19, 1
    %p63 = por %p61, %p62
    %p65 = scmp.ne.s32.totalorder %s50, %s64
    %p66 = scmp.eq.s32.totalorder %s19, 0
    %p67 = por %p65, %p66
    %s69 = sadd.s32 %s68, 1
    %p72 = scmp.eq.s32.totalorder %s13, 1
    %p73 = scmp.ne.s32.totalorder %s68, %s70
    %p74 = scmp.eq.s32.totalorder %s13, 0
    %p75 = por %p73, %p74
    %p76 = scmp.ne.s32.totalorder %s68, %s70
    %p77 = scmp.eq.s32.totalorder %s18, 1
    %p78 = por %p76, %p77
    %p79 = scmp.ne.s32.totalorder %s70, %s71
    %p80 = scmp.eq.s32.totalorder %s18, 0
    %p81 = por %p79, %p80
    %p82 = scmp.ne.s32.totalorder %s70, %s71
    %p83 = scmp.eq.s32.totalorder %s19, 1
    %p84 = por %p82, %p83
    %p86 = scmp.ne.s32.totalorder %s71, %s85
    %p87 = scmp.eq.s32.totalorder %s19, 0
    %p88 = por %p86, %p87
    %s90 = sadd.s32 %s89, 1
    %p93 = scmp.eq.s32.totalorder %s13, 1
    %p94 = scmp.ne.s32.totalorder %s89, %s91
    %p95 = scmp.eq.s32.totalorder %s13, 0
    %p96 = por %p94, %p95
    %p97 = scmp.ne.s32.totalorder %s89, %s91
    %p98 = scmp.eq.s32.totalorder %s18, 1
    %p99 = por %p97, %p98
    %p100 = scmp.ne.s32.totalorder %s91, %s92
    %p101 = scmp.eq.s32.totalorder %s18, 0
    %p102 = por %p100, %p101
    %p103 = scmp.ne.s32.totalorder %s91, %s92
    %p104 = scmp.eq.s32.totalorder %s19, 1
    %p105 = por %p103, %p104
    %p107 = scmp.ne.s32.totalorder %s92, %s106
    %p108 = scmp.eq.s32.totalorder %s19, 0
    %p109 = por %p107, %p108
    %s111 = sadd.s32 %s110, 1
    %p114 = scmp.eq.s32.totalorder %s13, 1
    %p115 = scmp.ne.s32.totalorder %s110, %s112
    %p116 = scmp.eq.s32.totalorder %s13, 0
    %p117 = por %p115, %p116
    %p118 = scmp.ne.s32.totalorder %s110, %s112
    %p119 = scmp.eq.s32.totalorder %s18, 1
    %p120 = por %p118, %p119
    %p121 = scmp.ne.s32.totalorder %s112, %s113
    %p122 = scmp.eq.s32.totalorder %s18, 0
    %p123 = por %p121, %p122
    %p124 = scmp.ne.s32.totalorder %s112, %s113
    %p125 = scmp.eq.s32.totalorder %s19, 1
    %p126 = por %p124, %p125
    %p128 = scmp.ne.s32.totalorder %s113, %s127
    %p129 = scmp.eq.s32.totalorder %s19, 0
    %p130 = por %p128, %p129
    %s132 = sadd.s32 %s131, 1
    %p135 = scmp.eq.s32.totalorder %s13, 1
    %p136 = scmp.ne.s32.totalorder %s131, %s133
    %p137 = scmp.eq.s32.totalorder %s13, 0
    %p138 = por %p136, %p137
    %p139 = scmp.ne.s32.totalorder %s131, %s133
    %p140 = scmp.eq.s32.totalorder %s18, 1
    %p141 = por %p139, %p140
    %p142 = scmp.ne.s32.totalorder %s133, %s134
    %p143 = scmp.eq.s32.totalorder %s18, 0
    %p144 = por %p142, %p143
    %p145 = scmp.ne.s32.totalorder %s133, %s134
    %p146 = scmp.eq.s32.totalorder %s19, 1
    %p147 = por %p145, %p146
    %p149 = scmp.ne.s32.totalorder %s134, %s148
    %p150 = scmp.eq.s32.totalorder %s19, 0
    %p151 = por %p149, %p150
    %s153 = sadd.s32 %s152, 1
    %p156 = scmp.eq.s32.totalorder %s13, 1
    %p157 = scmp.ne.s32.totalorder %s152, %s154
    %p158 = scmp.eq.s32.totalorder %s13, 0
    %p159 = por %p157, %p158
    %p160 = scmp.ne.s32.totalorder %s152, %s154
    %p161 = scmp.eq.s32.totalorder %s18, 1
    %p162 = por %p160, %p161
    %p163 = scmp.ne.s32.totalorder %s154, %s155
    %p164 = scmp.eq.s32.totalorder %s18, 0
    %p165 = por %p163, %p164
    %p166 = scmp.ne.s32.totalorder %s154, %s155
    %p167 = scmp.eq.s32.totalorder %s19, 1
    %p168 = por %p166, %p167
    %p170 = scmp.ne.s32.totalorder %s155, %s169
    %p171 = scmp.eq.s32.totalorder %s19, 0
    %p172 = por %p170, %p171
    %s173 = ssub.s32 %s13, %s20
    %p174 = scmp.eq.s32.totalorder %s173, 0
    %s176 = sadd.s32 %s175, 1
    %s177 = scalar_select %p174, %s175, %s176
    %p180 = pneg %p174
    %p181 = scmp.eq.s32.totalorder %s13, 1
    %p182 = por %p180, %p181
    %p183 = scmp.ne.s32.totalorder %s175, %s178
    %p184 = scmp.eq.s32.totalorder %s13, 0
    %p185 = por %p183, %p184
    %p186 = scmp.ne.s32.totalorder %s175, %s178
    %p187 = scmp.eq.s32.totalorder %s18, 1
    %p188 = por %p186, %p187
    %p189 = scmp.ne.s32.totalorder %s178, %s179
    %p190 = scmp.eq.s32.totalorder %s18, 0
    %p191 = por %p189, %p190
    %p192 = scmp.ne.s32.totalorder %s178, %s179
    %p193 = scmp.eq.s32.totalorder %s19, 1
    %p194 = por %p192, %p193
    %p196 = scmp.ne.s32.totalorder %s179, %s195
    %p197 = scmp.eq.s32.totalorder %s19, 0
    %p198 = por %p196, %p197
    %p199 = scmp.le.s32.totalorder 1, %s13
    %p200 = scmp.lt.s32.totalorder %s13, 3
    %p201 = pnand %p199, %p200
    %p202 = pneg %p201
    // Predicated region
    $region9: #{bottleneck_forward.2} parent=5 // pred_check
      _
    $region10: #{bottleneck_forward.2} parent=5 // pred_check_branch
      %204 = sbr.rel (%p201) target = $region12
    $region11: #{bottleneck_forward.2} parent=5 // pred_region
      %s205 = ssub.s32 %s13, 1
      // Predicated region
      $region13: #{bottleneck_forward.2} parent=11 // pred_check
        %p206 = pneg %p60
      $region14: #{bottleneck_forward.2} parent=11 // pred_check_branch
        %208 = sbr.rel (%p206) target = $region16
      $region15: #{bottleneck_forward.2} parent=11 // pred_region
        _
      $region16: #{bottleneck_forward.2} parent=11 // pred_fallthru
        _
      // Predicated region
      $region17: #{bottleneck_forward.2} parent=11 // pred_check
        %p209 = pneg %p81
      $region18: #{bottleneck_forward.2} parent=11 // pred_check_branch
        %211 = sbr.rel (%p209) target = $region20
      $region19: #{bottleneck_forward.2} parent=11 // pred_region
        _
      $region20: #{bottleneck_forward.2} parent=11 // pred_fallthru
        _
      // Predicated region
      $region21: #{bottleneck_forward.2} parent=11 // pred_check
        %p212 = pneg %p102
      $region22: #{bottleneck_forward.2} parent=11 // pred_check_branch
        %214 = sbr.rel (%p212) target = $region24
      $region23: #{bottleneck_forward.2} parent=11 // pred_region
        _
      $region24: #{bottleneck_forward.2} parent=11 // pred_fallthru
        _
      // Predicated region
      $region25: #{bottleneck_forward.2} parent=11 // pred_check
        %p215 = pneg %p123
      $region26: #{bottleneck_forward.2} parent=11 // pred_check_branch
        %217 = sbr.rel (%p215) target = $region28
      $region27: #{bottleneck_forward.2} parent=11 // pred_region
        _
      $region28: #{bottleneck_forward.2} parent=11 // pred_fallthru
        _
      // Predicated region
      $region29: #{bottleneck_forward.2} parent=11 // pred_check
        %p218 = pneg %p144
      $region30: #{bottleneck_forward.2} parent=11 // pred_check_branch
        %220 = sbr.rel (%p218) target = $region32
      $region31: #{bottleneck_forward.2} parent=11 // pred_region
        _
      $region32: #{bottleneck_forward.2} parent=11 // pred_fallthru
        _
      // Predicated region
      $region33: #{bottleneck_forward.2} parent=11 // pred_check
        %p221 = pneg %p165
      $region34: #{bottleneck_forward.2} parent=11 // pred_check_branch
        %223 = sbr.rel (%p221) target = $region36
      $region35: #{bottleneck_forward.2} parent=11 // pred_region
        _
      $region36: #{bottleneck_forward.2} parent=11 // pred_fallthru
        _
    $region12: #{bottleneck_forward.2} parent=5 // pred_fallthru
      _
    %p224 = scmp.lt.s32.totalorder %s13, 2
    // Predicated region
    $region37: #{bottleneck_forward.2} parent=5 // pred_check
      %p225 = pneg %p224
    $region38: #{bottleneck_forward.2} parent=5 // pred_check_branch
      %227 = sbr.rel (%p225) target = $region40
    $region39: #{bottleneck_forward.2} parent=5 // pred_region
      // Predicated region
      $region41: #{bottleneck_forward.2} parent=39 // pred_check
        %p228 = pneg %p33
      $region42: #{bottleneck_forward.2} parent=39 // pred_check_branch
        %230 = sbr.rel (%p228) target = $region44
      $region43: #{bottleneck_forward.2} parent=39 // pred_region
        %p231 = scmp.lt.s32.totalorder %s13, 1
        %s232 = scalar_select %p231, %s13, 1
        %s233 = smul.addr %s232, 32
        %s234 = smul.addr %s233, 4
        %s235 = scalar_lea.vmem %s0, %s234
      $region44: #{bottleneck_forward.2} parent=39 // pred_fallthru
        _
    $region40: #{bottleneck_forward.2} parent=5 // pred_fallthru
      _
    %p236 = scmp.le.s32.totalorder 1, %s13
    %p237 = scmp.lt.s32.totalorder %s13, 3
    %p238 = pnand %p236, %p237
    %p239 = pneg %p238
    // Predicated region
    $region45: #{bottleneck_forward.2} parent=5 // pred_check
      _
    $region46: #{bottleneck_forward.2} parent=5 // pred_check_branch
      %241 = sbr.rel (%p238) target = $region48
    $region47: #{bottleneck_forward.2} parent=5 // pred_region
      %s242 = ssub.s32 %s13, 1
      %p243 = scmp.lt.s32.totalorder %s18, 1
      %s244 = scalar_select %p243, %s18, 1
      %s245 = smul.addr %s244, 32
      %s246 = smul.addr %s245, 4
      %s247 = scalar_lea.vmem %s0, %s246
      %p248 = pneg %p39
      %p249 = pneg %p36
      %p250 = pneg %p60
      %p251 = pneg %p57
      %p252 = pneg %p81
      %p253 = pneg %p78
      %p254 = pneg %p102
      %p255 = pneg %p99
      %p256 = pneg %p123
      %p257 = pneg %p120
      %p258 = pneg %p144
      %p259 = pneg %p141
      %p260 = pneg %p165
      %p261 = pneg %p162
      %p262 = pneg %p191
      %p263 = pneg %p188
      %p264 = scmp.lt.s32.totalorder %s18, 1
      %s265 = scalar_select %p264, %s18, 1
      %s266 = smul.addr %s265, 32
      %s267 = smul.addr %s266, 4
      %s268 = scalar_lea.vmem %s7, %s267
      %p269 = scmp.lt.s32.totalorder %s18, 1
      %s270 = scalar_select %p269, %s18, 1
      %s271 = smul.addr %s270, 32
      %s272 = smul.addr %s271, 4
      %s273 = scalar_lea.vmem %s0, %s272
      %p274 = scmp.lt.s32.totalorder %s18, 1
      %s275 = scalar_select %p274, %s18, 1
      %s276 = smul.addr %s275, 32
      %s277 = smul.addr %s276, 4
      %s278 = scalar_lea.vmem %s7, %s277
      %vm280 = vcmask 31744
      %281 = vst.msk [vmem:[#allocation2] sm:$0xff] %vm280, 0.0
      %282 = vst.msk [vmem:[#allocation2 + $0x8] sm:$0xff] %vm280, 0.0
      %vm283 = vcmask 25600
      %284 = vst.msk [vmem:[#allocation2 + $0x10] sm:$0x3] %vm283, 0.0
      %285 = vst.msk [vmem:[#allocation2 + $0x18] sm:$0xff] %vm280, 0.0
      %286 = vst.msk [vmem:[#allocation2 + $0x20] sm:$0xff] %vm280, 0.0
      %287 = vst.msk [vmem:[#allocation2 + $0x28] sm:$0x3] %vm283, 0.0
      %288 = vst.msk [vmem:[#allocation2 + $0x30] sm:$0xff] %vm280, 0.0
      %289 = vst.msk [vmem:[#allocation2 + $0x38] sm:$0xff] %vm280, 0.0
      %290 = vst.msk [vmem:[#allocation2 + $0x40] sm:$0x3] %vm283, 0.0
      %291 = vst.msk [vmem:[#allocation2 + $0x48] sm:$0xff] %vm280, 0.0
      %292 = vst.msk [vmem:[#allocation2 + $0x50] sm:$0xff] %vm280, 0.0
      %293 = vst.msk [vmem:[#allocation2 + $0x58] sm:$0x3] %vm283, 0.0
      %294 = vst.msk [vmem:[#allocation2 + $0x60] sm:$0xff] %vm280, 0.0
      %295 = vst.msk [vmem:[#allocation2 + $0x68] sm:$0xff] %vm280, 0.0
      %296 = vst.msk [vmem:[#allocation2 + $0x70] sm:$0x3] %vm283, 0.0
      %297 = vst.msk [vmem:[#allocation2 + $0x78] sm:$0xff] %vm280, 0.0
      %298 = vst.msk [vmem:[#allocation2 + $0x80] sm:$0xff] %vm280, 0.0
      %299 = vst.msk [vmem:[#allocation2 + $0x88] sm:$0x3] %vm283, 0.0
      %300 = vst.msk [vmem:[#allocation2 + $0x90] sm:$0xff] %vm280, 0.0
      %301 = vst.msk [vmem:[#allocation2 + $0x98] sm:$0xff] %vm280, 0.0
      %302 = vst.msk [vmem:[#allocation2 + $0xa0] sm:$0x3] %vm283, 0.0
      %303 = vst.msk [vmem:[#allocation2 + $0xa8] sm:$0xff] %vm280, 0.0
      %304 = vst.msk [vmem:[#allocation2 + $0xb0] sm:$0xff] %vm280, 0.0
      %305 = vst.msk [vmem:[#allocation2 + $0xb8] sm:$0x3] %vm283, 0.0
      %306 = vst.msk [vmem:[#allocation2 + $0xc0] sm:$0xff] %vm280, 0.0
      %307 = vst.msk [vmem:[#allocation2 + $0xc8] sm:$0xff] %vm280, 0.0
      %308 = vst.msk [vmem:[#allocation2 + $0xd0] sm:$0x3] %vm283, 0.0
      %309 = vst.msk [vmem:[#allocation2 + $0xd8] sm:$0xff] %vm280, 0.0
      %310 = vst.msk [vmem:[#allocation2 + $0xe0] sm:$0xff] %vm280, 0.0
      %311 = vst.msk [vmem:[#allocation2 + $0xe8] sm:$0x3] %vm283, 0.0
      %312 = vst.msk [vmem:[#allocation2 + $0xf0] sm:$0xff] %vm280, 0.0
      %313 = vst.msk [vmem:[#allocation2 + $0xf8] sm:$0xff] %vm280, 0.0
      %314 = vst.msk [vmem:[#allocation2 + $0x100] sm:$0x3] %vm283, 0.0
      %315 = vst.msk [vmem:[#allocation2 + $0x108] sm:$0xff] %vm280, 0.0
      %316 = vst.msk [vmem:[#allocation2 + $0x110] sm:$0xff] %vm280, 0.0
      %317 = vst.msk [vmem:[#allocation2 + $0x118] sm:$0x3] %vm283, 0.0
      %318 = vst.msk [vmem:[#allocation2 + $0x120] sm:$0xff] %vm280, 0.0
      %319 = vst.msk [vmem:[#allocation2 + $0x128] sm:$0xff] %vm280, 0.0
      %320 = vst.msk [vmem:[#allocation2 + $0x130] sm:$0x3] %vm283, 0.0
      %321 = vst.msk [vmem:[#allocation2 + $0x138] sm:$0xff] %vm280, 0.0
      %322 = vst.msk [vmem:[#allocation2 + $0x140] sm:$0xff] %vm280, 0.0
      %323 = vst.msk [vmem:[#allocation2 + $0x148] sm:$0x3] %vm283, 0.0
      %324 = vst.msk [vmem:[#allocation2 + $0x150] sm:$0xff] %vm280, 0.0
      %325 = vst.msk [vmem:[#allocation2 + $0x158] sm:$0xff] %vm280, 0.0
      %326 = vst.msk [vmem:[#allocation2 + $0x160] sm:$0x3] %vm283, 0.0
      %327 = vst.msk [vmem:[#allocation2 + $0x168] sm:$0xff] %vm280, 0.0
      %328 = vst.msk [vmem:[#allocation2 + $0x170] sm:$0xff] %vm280, 0.0
      %329 = vst.msk [vmem:[#allocation2 + $0x178] sm:$0x3] %vm283, 0.0
      %330 = vst.msk [vmem:[#allocation2 + $0x180] sm:$0xff] %vm280, 0.0
      %331 = vst.msk [vmem:[#allocation2 + $0x188] sm:$0xff] %vm280, 0.0
      %332 = vst.msk [vmem:[#allocation2 + $0x190] sm:$0x3] %vm283, 0.0
      %333 = vst.msk [vmem:[#allocation2 + $0x198] sm:$0xff] %vm280, 0.0
      %334 = vst.msk [vmem:[#allocation2 + $0x1a0] sm:$0xff] %vm280, 0.0
      %335 = vst.msk [vmem:[#allocation2 + $0x1a8] sm:$0x3] %vm283, 0.0
      loop: start=0, step=1, limit=16
      $region49: #{bottleneck_forward.2} parent=47 // loop_pre_header
        _
      $region50: #{bottleneck_forward.2} parent=47 // loop_header
        %s337 = sphi 0, %s341
        %p338 = scmp.ge.s32.totalorder %s337, 16
      $region51: #{bottleneck_forward.2} parent=47 // loop_header_branch
        %340 = sbr.rel (%p338) target = $region55
      $region52: #{bottleneck_forward.2} parent=47 // loop_body
        %s342 = smul.u32 %s337, 2
        %s343 = smul.addr %s342, 4
        %s344 = scalar_lea.vmem %s273, %s343
        %v345 = vld [vmem:[%s344] sm:$0xf]
        %v346 = vld [vmem:[%s344 + $0x4] sm:$0xf]
        %v347 = vld [vmem:[%s1] sm:$0x3]
        %v350 = vunpack.c.l.b16 %v345
        %v351 = vunpack.c.l.b16 %v346
        %v352 = vpack.c.b16 %v351, %v350
        %v354 = vsel %vm280, %v352, 0
        %vm356 = vcmask 1041408
        %v358 = vsel %vm356, %v347, 0
        %360 = vmatprep.subr.bf16.mxu0 0
        %361 = vmatpush1.bf16.msra.mxu0 %v358
        %362 = vmatprep.subr.bf16.mxu0 0
        %363 = vmatpush1.bf16.msra.mxu0 0
        %364 = vmatprep.subr.bf16.mxu0 0
        %365 = vmatpush1.bf16.msra.mxu0 0
        %366 = vmatprep.subr.bf16.mxu0 0
        %367 = vmatpush1.bf16.msra.mxu0 0
        %368 = vmatprep.subr.bf16.mxu0 0
        %369 = vmatpush1.bf16.msra.mxu0 0
        %370 = vmatprep.subr.bf16.mxu0 0
        %371 = vmatpush1.bf16.msra.mxu0 0
        %372 = vmatprep.subr.bf16.mxu0 0
        %373 = vmatpush1.bf16.msra.mxu0 0
        %374 = vmatprep.subr.bf16.mxu0 0
        %375 = vmatpush1.bf16.msra.mxu0 0
        %376 = vmatprep.subr.bf16.mxu0 0
        %377 = vmatpush1.bf16.msra.mxu0 0
        %378 = vmatprep.subr.bf16.mxu0 0
        %379 = vmatpush1.bf16.msra.mxu0 0
        %380 = vmatprep.subr.bf16.mxu0 0
        %381 = vmatpush1.bf16.msra.mxu0 0
        %382 = vmatprep.subr.bf16.mxu0 0
        %383 = vmatpush1.bf16.msra.mxu0 0
        %384 = vmatprep.subr.bf16.mxu0 0
        %385 = vmatpush1.bf16.msra.mxu0 0
        %386 = vmatprep.subr.bf16.mxu0 0
        %387 = vmatpush1.bf16.msra.mxu0 0
        %388 = vmatprep.subr.bf16.mxu0 0
        %389 = vmatpush1.bf16.msra.mxu0 0
        %390 = vmatprep.subr.bf16.mxu0 0
        %391 = vmatpush1.bf16.msra.mxu0 0
        %392 = vmatprep.mubr.bf16.mxu0 0
        %393 = vmatmul.mubr.bf16.gmra.mrb[0].mxu0 %v354
        %v394 = vpop.f32.mrb[0].mxu0
        %v395 = vadd.f32 0.0, %v394
        %v396 = vpop.f32.mrb[0].mxu0
        %v397 = vpop.f32.mrb[0].mxu0
        %v398 = vadd.f32 0.0, %v397
        %v399 = vpop.f32.mrb[0].mxu0
        %400 = vdwg.mxu0
        %v401 = vld [vmem:[%s3] sm:$0x1]
        %v403 = vlaneseq
        %v404 = vshrl.u32 %v403, 7
        %v405 = vsub.s32 0, %v404
        %v406 = vrot.slane %v401, %v405
        %v408 = vmul.f32 %v395, %v406
        %v409 = vmul.f32 %v398, %v406
        %v410 = vld [vmem:[%s4] sm:$0x1]
        %v412 = vlaneseq
        %v413 = vshrl.u32 %v412, 7
        %v414 = vsub.s32 0, %v413
        %v415 = vrot.slane %v410, %v414
        %v417 = vadd.f32 %v408, %v415
        %v418 = vadd.f32 %v409, %v415
        %v419 = vmax.f32 %v417, 0.0
        %v420 = vmax.f32 %v418, 0.0
        %s421 = sadd.s32 %s337, 1
        %s422 = smul.u32 %s421, 24
        %s423 = scalar_lea.vmem [#allocation2], %s422
        %424 = vst.msk [vmem:[%s423 + $0x1] sm:$0xff] %vm280, %v419
        %425 = vst.msk [vmem:[%s423 + $0x9] sm:$0xff] %vm280, %v420
      $region53: #{bottleneck_forward.2} parent=47 // loop_footer
        %s341 = sadd.s32 1, %s337
      $region54: #{bottleneck_forward.2} parent=47 // loop_footer_branch
        %336 = sbr.rel target = $region50
      $region55: #{bottleneck_forward.2} parent=47 // loop_exit
        _
      loop: start=0, step=1, limit=16
      $region56: #{bottleneck_forward.2} parent=47 // loop_pre_header
        _
      $region57: #{bottleneck_forward.2} parent=47 // loop_header
        %s427 = sphi 0, %s431
        %p428 = scmp.ge.s32.totalorder %s427, 16
      $region58: #{bottleneck_forward.2} parent=47 // loop_header_branch
        %430 = sbr.rel (%p428) target = $region62
      $region59: #{bottleneck_forward.2} parent=47 // loop_body
        %s432 = smul.u32 %s427, 24
        %s433 = scalar_lea.vmem [#allocation2], %s432
        %v434 = vld [vmem:[%s433] sm:$0xff]
        %v435 = vld [vmem:[%s433 + $0x8] sm:$0xff]
        %v436 = vpack.c.bf16 %v435, %v434
        %v437 = vld [vmem:[%s2] sm:$0x3]
        %v438 = vld [vmem:[%s433 + $0x1] sm:$0xff]
        %v439 = vld [vmem:[%s433 + $0x9] sm:$0xff]
        %v440 = vpack.c.bf16 %v439, %v438
        %s441 = scalar_lea.vmem %s2, 2
        %v442 = vld [vmem:[%s441] sm:$0x3]
        %v444 = vsel %vm280, %v440, 0
        %vm446 = vcmask 1041408
        %v448 = vsel %vm446, %v442, 0
        %450 = vmatprep.subr.bf16.mxu0 0
        %451 = vmatpush1.bf16.msra.mxu0 %v448
        %452 = vmatprep.subr.bf16.mxu0 0
        %453 = vmatpush1.bf16.msra.mxu0 0
        %454 = vmatprep.subr.bf16.mxu0 0
        %455 = vmatpush1.bf16.msra.mxu0 0
        %456 = vmatprep.subr.bf16.mxu0 0
        %457 = vmatpush1.bf16.msra.mxu0 0
        %458 = vmatprep.subr.bf16.mxu0 0
        %459 = vmatpush1.bf16.msra.mxu0 0
        %460 = vmatprep.subr.bf16.mxu0 0
        %461 = vmatpush1.bf16.msra.mxu0 0
        %462 = vmatprep.subr.bf16.mxu0 0
        %463 = vmatpush1.bf16.msra.mxu0 0
        %464 = vmatprep.subr.bf16.mxu0 0
        %465 = vmatpush1.bf16.msra.mxu0 0
        %466 = vmatprep.subr.bf16.mxu0 0
        %467 = vmatpush1.bf16.msra.mxu0 0
        %468 = vmatprep.subr.bf16.mxu0 0
        %469 = vmatpush1.bf16.msra.mxu0 0
        %470 = vmatprep.subr.bf16.mxu0 0
        %471 = vmatpush1.bf16.msra.mxu0 0
        %472 = vmatprep.subr.bf16.mxu0 0
        %473 = vmatpush1.bf16.msra.mxu0 0
        %474 = vmatprep.subr.bf16.mxu0 0
        %475 = vmatpush1.bf16.msra.mxu0 0
        %476 = vmatprep.subr.bf16.mxu0 0
        %477 = vmatpush1.bf16.msra.mxu0 0
        %478 = vmatprep.subr.bf16.mxu0 0
        %479 = vmatpush1.bf16.msra.mxu0 0
        %480 = vmatprep.subr.bf16.mxu0 0
        %481 = vmatpush1.bf16.msra.mxu0 0
        %482 = vmatprep.mubr.bf16.mxu0 0
        %483 = vmatmul.mubr.bf16.gmra.mrb[0].mxu0 %v444
        %v484 = vpop.f32.mrb[0].mxu0
        %v485 = vadd.f32 0.0, %v484
        %v486 = vpop.f32.mrb[0].mxu0
        %v487 = vpop.f32.mrb[0].mxu0
        %v488 = vadd.f32 0.0, %v487
        %v489 = vpop.f32.mrb[0].mxu0
        %490 = vdwg.mxu0
        %v492 = vsel %vm280, %v436, 0
        %v495 = vsel %vm446, %v437, 0
        %497 = vmatprep.subr.bf16.mxu0 0
        %498 = vmatpush1.bf16.msra.mxu0 %v495
        %499 = vmatprep.subr.bf16.mxu0 0
        %500 = vmatpush1.bf16.msra.mxu0 0
        %501 = vmatprep.subr.bf16.mxu0 0
        %502 = vmatpush1.bf16.msra.mxu0 0
        %503 = vmatprep.subr.bf16.mxu0 0
        %504 = vmatpush1.bf16.msra.mxu0 0
        %505 = vmatprep.subr.bf16.mxu0 0
        %506 = vmatpush1.bf16.msra.mxu0 0
        %507 = vmatprep.subr.bf16.mxu0 0
        %508 = vmatpush1.bf16.msra.mxu0 0
        %509 = vmatprep.subr.bf16.mxu0 0
        %510 = vmatpush1.bf16.msra.mxu0 0
        %511 = vmatprep.subr.bf16.mxu0 0
        %512 = vmatpush1.bf16.msra.mxu0 0
        %513 = vmatprep.subr.bf16.mxu0 0
        %514 = vmatpush1.bf16.msra.mxu0 0
        %515 = vmatprep.subr.bf16.mxu0 0
        %516 = vmatpush1.bf16.msra.mxu0 0
        %517 = vmatprep.subr.bf16.mxu0 0
        %518 = vmatpush1.bf16.msra.mxu0 0
        %519 = vmatprep.subr.bf16.mxu0 0
        %520 = vmatpush1.bf16.msra.mxu0 0
        %521 = vmatprep.subr.bf16.mxu0 0
        %522 = vmatpush1.bf16.msra.mxu0 0
        %523 = vmatprep.subr.bf16.mxu0 0
        %524 = vmatpush1.bf16.msra.mxu0 0
        %525 = vmatprep.subr.bf16.mxu0 0
        %526 = vmatpush1.bf16.msra.mxu0 0
        %527 = vmatprep.subr.bf16.mxu0 0
        %528 = vmatpush1.bf16.msra.mxu0 0
        %529 = vmatprep.mubr.bf16.mxu0 0
        %530 = vmatmul.mubr.bf16.gmra.mrb[0].mxu0 %v492
        %v531 = vpop.f32.mrb[0].mxu0
        %v532 = vadd.f32 %v485, %v531
        %v533 = vpop.f32.mrb[0].mxu0
        %v534 = vpop.f32.mrb[0].mxu0
        %v535 = vadd.f32 %v488, %v534
        %v536 = vpop.f32.mrb[0].mxu0
        %537 = vdwg.mxu0
        %v538 = vld [vmem:[%s433 + $0x2] sm:$0xff]
        %v539 = vld [vmem:[%s433 + $0xa] sm:$0xff]
        %v540 = vpack.c.bf16 %v539, %v538
        %s541 = scalar_lea.vmem %s2, 4
        %v542 = vld [vmem:[%s541] sm:$0x3]
        %v544 = vsel %vm280, %v540, 0
        %v547 = vsel %vm446, %v542, 0
        %549 = vmatprep.subr.bf16.mxu0 0
        %550 = vmatpush1.bf16.msra.mxu0 %v547
        %551 = vmatprep.subr.bf16.mxu0 0
        %552 = vmatpush1.bf16.msra.mxu0 0
        %553 = vmatprep.subr.bf16.mxu0 0
        %554 = vmatpush1.bf16.msra.mxu0 0
        %555 = vmatprep.subr.bf16.mxu0 0
        %556 = vmatpush1.bf16.msra.mxu0 0
        %557 = vmatprep.subr.bf16.mxu0 0
        %558 = vmatpush1.bf16.msra.mxu0 0
        %559 = vmatprep.subr.bf16.mxu0 0
        %560 = vmatpush1.bf16.msra.mxu0 0
        %561 = vmatprep.subr.bf16.mxu0 0
        %562 = vmatpush1.bf16.msra.mxu0 0
        %563 = vmatprep.subr.bf16.mxu0 0
        %564 = vmatpush1.bf16.msra.mxu0 0
        %565 = vmatprep.subr.bf16.mxu0 0
        %566 = vmatpush1.bf16.msra.mxu0 0
        %567 = vmatprep.subr.bf16.mxu0 0
        %568 = vmatpush1.bf16.msra.mxu0 0
        %569 = vmatprep.subr.bf16.mxu0 0
        %570 = vmatpush1.bf16.msra.mxu0 0
        %571 = vmatprep.subr.bf16.mxu0 0
        %572 = vmatpush1.bf16.msra.mxu0 0
        %573 = vmatprep.subr.bf16.mxu0 0
        %574 = vmatpush1.bf16.msra.mxu0 0
        %575 = vmatprep.subr.bf16.mxu0 0
        %576 = vmatpush1.bf16.msra.mxu0 0
        %577 = vmatprep.subr.bf16.mxu0 0
        %578 = vmatpush1.bf16.msra.mxu0 0
        %579 = vmatprep.subr.bf16.mxu0 0
        %580 = vmatpush1.bf16.msra.mxu0 0
        %581 = vmatprep.mubr.bf16.mxu0 0
        %582 = vmatmul.mubr.bf16.gmra.mrb[0].mxu0 %v544
        %v583 = vpop.f32.mrb[0].mxu0
        %v584 = vadd.f32 0.0, %v583
        %v585 = vpop.f32.mrb[0].mxu0
        %v586 = vpop.f32.mrb[0].mxu0
        %v587 = vadd.f32 0.0, %v586
        %v588 = vpop.f32.mrb[0].mxu0
        %589 = vdwg.mxu0
        %v590 = vadd.f32 %v532, %v584
        %v591 = vadd.f32 %v535, %v587
        %s592 = sadd.s32 %s427, 1
        %s593 = smul.u32 %s592, 24
        %s594 = scalar_lea.vmem [#allocation2], %s593
        %v595 = vld [vmem:[%s594] sm:$0xff]
        %v596 = vld [vmem:[%s594 + $0x8] sm:$0xff]
        %v597 = vpack.c.bf16 %v596, %v595
        %s598 = scalar_lea.vmem %s2, 6
        %v599 = vld [vmem:[%s598] sm:$0x3]
        %v601 = vsel %vm280, %v597, 0
        %v604 = vsel %vm446, %v599, 0
        %606 = vmatprep.subr.bf16.mxu0 0
        %607 = vmatpush1.bf16.msra.mxu0 %v604
        %608 = vmatprep.subr.bf16.mxu0 0
        %609 = vmatpush1.bf16.msra.mxu0 0
        %610 = vmatprep.subr.bf16.mxu0 0
        %611 = vmatpush1.bf16.msra.mxu0 0
        %612 = vmatprep.subr.bf16.mxu0 0
        %613 = vmatpush1.bf16.msra.mxu0 0
        %614 = vmatprep.subr.bf16.mxu0 0
        %615 = vmatpush1.bf16.msra.mxu0 0
        %616 = vmatprep.subr.bf16.mxu0 0
        %617 = vmatpush1.bf16.msra.mxu0 0
        %618 = vmatprep.subr.bf16.mxu0 0
        %619 = vmatpush1.bf16.msra.mxu0 0
        %620 = vmatprep.subr.bf16.mxu0 0
        %621 = vmatpush1.bf16.msra.mxu0 0
        %622 = vmatprep.subr.bf16.mxu0 0
        %623 = vmatpush1.bf16.msra.mxu0 0
        %624 = vmatprep.subr.bf16.mxu0 0
        %625 = vmatpush1.bf16.msra.mxu0 0
        %626 = vmatprep.subr.bf16.mxu0 0
        %627 = vmatpush1.bf16.msra.mxu0 0
        %628 = vmatprep.subr.bf16.mxu0 0
        %629 = vmatpush1.bf16.msra.mxu0 0
        %630 = vmatprep.subr.bf16.mxu0 0
        %631 = vmatpush1.bf16.msra.mxu0 0
        %632 = vmatprep.subr.bf16.mxu0 0
        %633 = vmatpush1.bf16.msra.mxu0 0
        %634 = vmatprep.subr.bf16.mxu0 0
        %635 = vmatpush1.bf16.msra.mxu0 0
        %636 = vmatprep.subr.bf16.mxu0 0
        %637 = vmatpush1.bf16.msra.mxu0 0
        %638 = vmatprep.mubr.bf16.mxu0 0
        %639 = vmatmul.mubr.bf16.gmra.mrb[0].mxu0 %v601
        %v640 = vpop.f32.mrb[0].mxu0
        %v641 = vadd.f32 0.0, %v640
        %v642 = vpop.f32.mrb[0].mxu0
        %v643 = vpop.f32.mrb[0].mxu0
        %v644 = vadd.f32 0.0, %v643
        %v645 = vpop.f32.mrb[0].mxu0
        %646 = vdwg.mxu0
        %v647 = vadd.f32 %v590, %v641
        %v648 = vadd.f32 %v591, %v644
        %v649 = vld [vmem:[%s594 + $0x1] sm:$0xff]
        %v650 = vld [vmem:[%s594 + $0x9] sm:$0xff]
        %v651 = vpack.c.bf16 %v650, %v649
        %s652 = scalar_lea.vmem %s2, 8
        %v653 = vld [vmem:[%s652] sm:$0x3]
        %v655 = vsel %vm280, %v651, 0
        %v658 = vsel %vm446, %v653, 0
        %660 = vmatprep.subr.bf16.mxu0 0
        %661 = vmatpush1.bf16.msra.mxu0 %v658
        %662 = vmatprep.subr.bf16.mxu0 0
        %663 = vmatpush1.bf16.msra.mxu0 0
        %664 = vmatprep.subr.bf16.mxu0 0
        %665 = vmatpush1.bf16.msra.mxu0 0
        %666 = vmatprep.subr.bf16.mxu0 0
        %667 = vmatpush1.bf16.msra.mxu0 0
        %668 = vmatprep.subr.bf16.mxu0 0
        %669 = vmatpush1.bf16.msra.mxu0 0
        %670 = vmatprep.subr.bf16.mxu0 0
        %671 = vmatpush1.bf16.msra.mxu0 0
        %672 = vmatprep.subr.bf16.mxu0 0
        %673 = vmatpush1.bf16.msra.mxu0 0
        %674 = vmatprep.subr.bf16.mxu0 0
        %675 = vmatpush1.bf16.msra.mxu0 0
        %676 = vmatprep.subr.bf16.mxu0 0
        %677 = vmatpush1.bf16.msra.mxu0 0
        %678 = vmatprep.subr.bf16.mxu0 0
        %679 = vmatpush1.bf16.msra.mxu0 0
        %680 = vmatprep.subr.bf16.mxu0 0
        %681 = vmatpush1.bf16.msra.mxu0 0
        %682 = vmatprep.subr.bf16.mxu0 0
        %683 = vmatpush1.bf16.msra.mxu0 0
        %684 = vmatprep.subr.bf16.mxu0 0
        %685 = vmatpush1.bf16.msra.mxu0 0
        %686 = vmatprep.subr.bf16.mxu0 0
        %687 = vmatpush1.bf16.msra.mxu0 0
        %688 = vmatprep.subr.bf16.mxu0 0
        %689 = vmatpush1.bf16.msra.mxu0 0
        %690 = vmatprep.subr.bf16.mxu0 0
        %691 = vmatpush1.bf16.msra.mxu0 0
        %692 = vmatprep.mubr.bf16.mxu0 0
        %693 = vmatmul.mubr.bf16.gmra.mrb[0].mxu0 %v655
        %v694 = vpop.f32.mrb[0].mxu0
        %v695 = vadd.f32 0.0, %v694
        %v696 = vpop.f32.mrb[0].mxu0
        %v697 = vpop.f32.mrb[0].mxu0
        %v698 = vadd.f32 0.0, %v697
        %v699 = vpop.f32.mrb[0].mxu0
        %700 = vdwg.mxu0
        %v701 = vadd.f32 %v647, %v695
        %v702 = vadd.f32 %v648, %v698
        %v703 = vld [vmem:[%s594 + $0x2] sm:$0xff]
        %v704 = vld [vmem:[%s594 + $0xa] sm:$0xff]
        %v705 = vpack.c.bf16 %v704, %v703
        %s706 = scalar_lea.vmem %s2, 10
        %v707 = vld [vmem:[%s706] sm:$0x3]
        %v709 = vsel %vm280, %v705, 0
        %v712 = vsel %vm446, %v707, 0
        %714 = vmatprep.subr.bf16.mxu0 0
        %715 = vmatpush1.bf16.msra.mxu0 %v712
        %716 = vmatprep.subr.bf16.mxu0 0
        %717 = vmatpush1.bf16.msra.mxu0 0
        %718 = vmatprep.subr.bf16.mxu0 0
        %719 = vmatpush1.bf16.msra.mxu0 0
        %720 = vmatprep.subr.bf16.mxu0 0
        %721 = vmatpush1.bf16.msra.mxu0 0
        %722 = vmatprep.subr.bf16.mxu0 0
        %723 = vmatpush1.bf16.msra.mxu0 0
        %724 = vmatprep.subr.bf16.mxu0 0
        %725 = vmatpush1.bf16.msra.mxu0 0
        %726 = vmatprep.subr.bf16.mxu0 0
        %727 = vmatpush1.bf16.msra.mxu0 0
        %728 = vmatprep.subr.bf16.mxu0 0
        %729 = vmatpush1.bf16.msra.mxu0 0
        %730 = vmatprep.subr.bf16.mxu0 0
        %731 = vmatpush1.bf16.msra.mxu0 0
        %732 = vmatprep.subr.bf16.mxu0 0
        %733 = vmatpush1.bf16.msra.mxu0 0
        %734 = vmatprep.subr.bf16.mxu0 0
        %735 = vmatpush1.bf16.msra.mxu0 0
        %736 = vmatprep.subr.bf16.mxu0 0
        %737 = vmatpush1.bf16.msra.mxu0 0
        %738 = vmatprep.subr.bf16.mxu0 0
        %739 = vmatpush1.bf16.msra.mxu0 0
        %740 = vmatprep.subr.bf16.mxu0 0
        %741 = vmatpush1.bf16.msra.mxu0 0
        %742 = vmatprep.subr.bf16.mxu0 0
        %743 = vmatpush1.bf16.msra.mxu0 0
        %744 = vmatprep.subr.bf16.mxu0 0
        %745 = vmatpush1.bf16.msra.mxu0 0
        %746 = vmatprep.mubr.bf16.mxu0 0
        %747 = vmatmul.mubr.bf16.gmra.mrb[0].mxu0 %v709
        %v748 = vpop.f32.mrb[0].mxu0
        %v749 = vadd.f32 0.0, %v748
        %v750 = vpop.f32.mrb[0].mxu0
        %v751 = vpop.f32.mrb[0].mxu0
        %v752 = vadd.f32 0.0, %v751
        %v753 = vpop.f32.mrb[0].mxu0
        %754 = vdwg.mxu0
        %v755 = vadd.f32 %v701, %v749
        %v756 = vadd.f32 %v702, %v752
        %s757 = sadd.s32 %s427, 2
        %s758 = smul.u32 %s757, 24
        %s759 = scalar_lea.vmem [#allocation2], %s758
        %v760 = vld [vmem:[%s759] sm:$0xff]
        %v761 = vld [vmem:[%s759 + $0x8] sm:$0xff]
        %v762 = vpack.c.bf16 %v761, %v760
        %s763 = scalar_lea.vmem %s2, 12
        %v764 = vld [vmem:[%s763] sm:$0x3]
        %v766 = vsel %vm280, %v762, 0
        %v769 = vsel %vm446, %v764, 0
        %771 = vmatprep.subr.bf16.mxu0 0
        %772 = vmatpush1.bf16.msra.mxu0 %v769
        %773 = vmatprep.subr.bf16.mxu0 0
        %774 = vmatpush1.bf16.msra.mxu0 0
        %775 = vmatprep.subr.bf16.mxu0 0
        %776 = vmatpush1.bf16.msra.mxu0 0
        %777 = vmatprep.subr.bf16.mxu0 0
        %778 = vmatpush1.bf16.msra.mxu0 0
        %779 = vmatprep.subr.bf16.mxu0 0
        %780 = vmatpush1.bf16.msra.mxu0 0
        %781 = vmatprep.subr.bf16.mxu0 0
        %782 = vmatpush1.bf16.msra.mxu0 0
        %783 = vmatprep.subr.bf16.mxu0 0
        %784 = vmatpush1.bf16.msra.mxu0 0
        %785 = vmatprep.subr.bf16.mxu0 0
        %786 = vmatpush1.bf16.msra.mxu0 0
        %787 = vmatprep.subr.bf16.mxu0 0
        %788 = vmatpush1.bf16.msra.mxu0 0
        %789 = vmatprep.subr.bf16.mxu0 0
        %790 = vmatpush1.bf16.msra.mxu0 0
        %791 = vmatprep.subr.bf16.mxu0 0
        %792 = vmatpush1.bf16.msra.mxu0 0
        %793 = vmatprep.subr.bf16.mxu0 0
        %794 = vmatpush1.bf16.msra.mxu0 0
        %795 = vmatprep.subr.bf16.mxu0 0
        %796 = vmatpush1.bf16.msra.mxu0 0
        %797 = vmatprep.subr.bf16.mxu0 0
        %798 = vmatpush1.bf16.msra.mxu0 0
        %799 = vmatprep.subr.bf16.mxu0 0
        %800 = vmatpush1.bf16.msra.mxu0 0
        %801 = vmatprep.subr.bf16.mxu0 0
        %802 = vmatpush1.bf16.msra.mxu0 0
        %803 = vmatprep.mubr.bf16.mxu0 0
        %804 = vmatmul.mubr.bf16.gmra.mrb[0].mxu0 %v766
        %v805 = vpop.f32.mrb[0].mxu0
        %v806 = vadd.f32 0.0, %v805
        %v807 = vpop.f32.mrb[0].mxu0
        %v808 = vpop.f32.mrb[0].mxu0
        %v809 = vadd.f32 0.0, %v808
        %v810 = vpop.f32.mrb[0].mxu0
        %811 = vdwg.mxu0
        %v812 = vadd.f32 %v755, %v806
        %v813 = vadd.f32 %v756, %v809
        %v814 = vld [vmem:[%s759 + $0x1] sm:$0xff]
        %v815 = vld [vmem:[%s759 + $0x9] sm:$0xff]
        %v816 = vpack.c.bf16 %v815, %v814
        %s817 = scalar_lea.vmem %s2, 14
        %v818 = vld [vmem:[%s817] sm:$0x3]
        %v820 = vsel %vm280, %v816, 0
        %v823 = vsel %vm446, %v818, 0
        %825 = vmatprep.subr.bf16.mxu0 0
        %826 = vmatpush1.bf16.msra.mxu0 %v823
        %827 = vmatprep.subr.bf16.mxu0 0
        %828 = vmatpush1.bf16.msra.mxu0 0
        %829 = vmatprep.subr.bf16.mxu0 0
        %830 = vmatpush1.bf16.msra.mxu0 0
        %831 = vmatprep.subr.bf16.mxu0 0
        %832 = vmatpush1.bf16.msra.mxu0 0
        %833 = vmatprep.subr.bf16.mxu0 0
        %834 = vmatpush1.bf16.msra.mxu0 0
        %835 = vmatprep.subr.bf16.mxu0 0
        %836 = vmatpush1.bf16.msra.mxu0 0
        %837 = vmatprep.subr.bf16.mxu0 0
        %838 = vmatpush1.bf16.msra.mxu0 0
        %839 = vmatprep.subr.bf16.mxu0 0
        %840 = vmatpush1.bf16.msra.mxu0 0
        %841 = vmatprep.subr.bf16.mxu0 0
        %842 = vmatpush1.bf16.msra.mxu0 0
        %843 = vmatprep.subr.bf16.mxu0 0
        %844 = vmatpush1.bf16.msra.mxu0 0
        %845 = vmatprep.subr.bf16.mxu0 0
        %846 = vmatpush1.bf16.msra.mxu0 0
        %847 = vmatprep.subr.bf16.mxu0 0
        %848 = vmatpush1.bf16.msra.mxu0 0
        %849 = vmatprep.subr.bf16.mxu0 0
        %850 = vmatpush1.bf16.msra.mxu0 0
        %851 = vmatprep.subr.bf16.mxu0 0
        %852 = vmatpush1.bf16.msra.mxu0 0
        %853 = vmatprep.subr.bf16.mxu0 0
        %854 = vmatpush1.bf16.msra.mxu0 0
        %855 = vmatprep.subr.bf16.mxu0 0
        %856 = vmatpush1.bf16.msra.mxu0 0
        %857 = vmatprep.mubr.bf16.mxu0 0
        %858 = vmatmul.mubr.bf16.gmra.mrb[0].mxu0 %v820
        %v859 = vpop.f32.mrb[0].mxu0
        %v860 = vadd.f32 0.0, %v859
        %v861 = vpop.f32.mrb[0].mxu0
        %v862 = vpop.f32.mrb[0].mxu0
        %v863 = vadd.f32 0.0, %v862
        %v864 = vpop.f32.mrb[0].mxu0
        %865 = vdwg.mxu0
        %v866 = vadd.f32 %v812, %v860
        %v867 = vadd.f32 %v813, %v863
        %v868 = vld [vmem:[%s759 + $0x2] sm:$0xff]
        %v869 = vld [vmem:[%s759 + $0xa] sm:$0xff]
        %v870 = vpack.c.bf16 %v869, %v868
        %s871 = scalar_lea.vmem %s2, 16
        %v872 = vld [vmem:[%s871] sm:$0x3]
        %v874 = vsel %vm280, %v870, 0
        %v877 = vsel %vm446, %v872, 0
        %879 = vmatprep.subr.bf16.mxu0 0
        %880 = vmatpush1.bf16.msra.mxu0 %v877
        %881 = vmatprep.subr.bf16.mxu0 0
        %882 = vmatpush1.bf16.msra.mxu0 0
        %883 = vmatprep.subr.bf16.mxu0 0
        %884 = vmatpush1.bf16.msra.mxu0 0
        %885 = vmatprep.subr.bf16.mxu0 0
        %886 = vmatpush1.bf16.msra.mxu0 0
        %887 = vmatprep.subr.bf16.mxu0 0
        %888 = vmatpush1.bf16.msra.mxu0 0
        %889 = vmatprep.subr.bf16.mxu0 0
        %890 = vmatpush1.bf16.msra.mxu0 0
        %891 = vmatprep.subr.bf16.mxu0 0
        %892 = vmatpush1.bf16.msra.mxu0 0
        %893 = vmatprep.subr.bf16.mxu0 0
        %894 = vmatpush1.bf16.msra.mxu0 0
        %895 = vmatprep.subr.bf16.mxu0 0
        %896 = vmatpush1.bf16.msra.mxu0 0
        %897 = vmatprep.subr.bf16.mxu0 0
        %898 = vmatpush1.bf16.msra.mxu0 0
        %899 = vmatprep.subr.bf16.mxu0 0
        %900 = vmatpush1.bf16.msra.mxu0 0
        %901 = vmatprep.subr.bf16.mxu0 0
        %902 = vmatpush1.bf16.msra.mxu0 0
        %903 = vmatprep.subr.bf16.mxu0 0
        %904 = vmatpush1.bf16.msra.mxu0 0
        %905 = vmatprep.subr.bf16.mxu0 0
        %906 = vmatpush1.bf16.msra.mxu0 0
        %907 = vmatprep.subr.bf16.mxu0 0
        %908 = vmatpush1.bf16.msra.mxu0 0
        %909 = vmatprep.subr.bf16.mxu0 0
        %910 = vmatpush1.bf16.msra.mxu0 0
        %911 = vmatprep.mubr.bf16.mxu0 0
        %912 = vmatmul.mubr.bf16.gmra.mrb[0].mxu0 %v874
        %v913 = vpop.f32.mrb[0].mxu0
        %v914 = vadd.f32 0.0, %v913
        %v915 = vpop.f32.mrb[0].mxu0
        %v916 = vpop.f32.mrb[0].mxu0
        %v917 = vadd.f32 0.0, %v916
        %v918 = vpop.f32.mrb[0].mxu0
        %919 = vdwg.mxu0
        %v920 = vadd.f32 %v866, %v914
        %v921 = vadd.f32 %v867, %v917
        %v922 = vld [vmem:[%s5] sm:$0x1]
        %v924 = vlaneseq
        %v925 = vshrl.u32 %v924, 7
        %v926 = vsub.s32 0, %v925
        %v927 = vrot.slane %v922, %v926
        %v929 = vmul.f32 %v920, %v927
        %v930 = vmul.f32 %v921, %v927
        %v931 = vld [vmem:[%s6] sm:$0x1]
        %v933 = vlaneseq
        %v934 = vshrl.u32 %v933, 7
        %v935 = vsub.s32 0, %v934
        %v936 = vrot.slane %v931, %v935
        %v938 = vadd.f32 %v929, %v936
        %v939 = vadd.f32 %v930, %v936
        %v940 = vmax.f32 %v938, 0.0
        %v941 = vmax.f32 %v939, 0.0
        %v942 = vpack.c.bf16 %v941, %v940
        %v944 = vunpack.c.l.b16 %v942
        %v945 = vunpack.c.h.b16 %v942
        %v946 = vpack.c.b16 %v944, %v944
        %v947 = vpack.c.b16 %v945, %v945
        %s950 = smul.u32 %s427, 2
        %s951 = smul.addr %s950, 4
        %s952 = scalar_lea.vmem %s278, %s951
        %vm953 = vcmask 27648
        %954 = vst.msk [vmem:[%s952] sm:$0xf] %vm953, %v946
        %955 = vst.msk [vmem:[%s952 + $0x4] sm:$0xf] %vm953, %v947
      $region60: #{bottleneck_forward.2} parent=47 // loop_footer
        %s431 = sadd.s32 1, %s427
      $region61: #{bottleneck_forward.2} parent=47 // loop_footer_branch
        %426 = sbr.rel target = $region57
      $region62: #{bottleneck_forward.2} parent=47 // loop_exit
        _
      %p956 = scmp.lt.s32.totalorder %s18, 1
      %s957 = scalar_select %p956, %s18, 1
      %s958 = smul.addr %s957, 32
      %s959 = smul.addr %s958, 4
      %s960 = scalar_lea.vmem %s7, %s959
      // Predicated region
      $region63: #{bottleneck_forward.2} parent=47 // pred_check
        %p961 = pneg %p188
      $region64: #{bottleneck_forward.2} parent=47 // pred_check_branch
        %963 = sbr.rel (%p961) target = $region66
      $region65: #{bottleneck_forward.2} parent=47 // pred_region
        _
      $region66: #{bottleneck_forward.2} parent=47 // pred_fallthru
        _
    $region48: #{bottleneck_forward.2} parent=5 // pred_fallthru
      _
    %p964 = scmp.le.s32.totalorder 2, %s13
    // Predicated region
    $region67: #{bottleneck_forward.2} parent=5 // pred_check
      %p965 = pneg %p964
    $region68: #{bottleneck_forward.2} parent=5 // pred_check_branch
      %967 = sbr.rel (%p965) target = $region70
    $region69: #{bottleneck_forward.2} parent=5 // pred_region
      %s968 = ssub.s32 %s13, 2
      // Predicated region
      $region71: #{bottleneck_forward.2} parent=69 // pred_check
        %p969 = pneg %p194
      $region72: #{bottleneck_forward.2} parent=69 // pred_check_branch
        %971 = sbr.rel (%p969) target = $region74
      $region73: #{bottleneck_forward.2} parent=69 // pred_region
        %p972 = scmp.lt.s32.totalorder %s19, 1
        %s973 = scalar_select %p972, %s19, 1
        %s974 = smul.addr %s973, 32
        %s975 = smul.addr %s974, 4
        %s976 = scalar_lea.vmem %s7, %s975
      $region74: #{bottleneck_forward.2} parent=69 // pred_fallthru
        _
    $region70: #{bottleneck_forward.2} parent=5 // pred_fallthru
      _
  $region6: #{bottleneck_forward.2} parent=0 // loop_footer
    %s17 = sadd.s32 1, %s13
  $region7: #{bottleneck_forward.2} parent=0 // loop_footer_branch
    %12 = sbr.rel target = $region3
  $region8: #{bottleneck_forward.2} parent=0 // loop_exit
    _

// kernel: bottleneck_forward.3
$region0: #{bottleneck_forward.3}
  #allocation0 [shape = 'u32[]', space=smem, size = 0x4, offset = 0x4, fixed_abs, tag = 'smem constant byte address 0x4 - core index']
  #allocation1 [shape = 'u32[144,128]{1,0:T(1,128)}', space=vmem, size = 0x12000, scoped, tag = 'internal scratch']
  #allocation2 [shape = 'f32[512,16]{1,0:T(8,128)}', space=vmem, size = 0x40000, scoped, tag = 'scratch operand']
  %s0 = inlined_call_operand.vmem [shape: bf16[512,4], index: 0, kind: input, shape index: {}]
  %s1 = inlined_call_operand.vmem [shape: bf16[4,16], index: 1, kind: input, shape index: {}]
  %s2 = inlined_call_operand.vmem [shape: bf16[512,4], index: 2, kind: input, shape index: {}]
  %s3 = inlined_call_operand.vmem [shape: bf16[4,16], index: 3, kind: input, shape index: {}]
  %s4 = inlined_call_operand.vmem [shape: f32[1,16], index: 4, kind: input, shape index: {}]
  %s5 = inlined_call_operand.vmem [shape: f32[1,16], index: 5, kind: input, shape index: {}]
  %s6 = inlined_call_operand.vmem [shape: f32[1,16], index: 6, kind: input, shape index: {}]
  %s7 = inlined_call_operand.vmem [shape: f32[512,16], index: 7, kind: output, shape index: {}]
  %s8 = sld [smem:[#allocation0]]
  $region46: #{bottleneck_forward.3} parent=0
    _
  %s10 = ssub.s32 1, %s8
  %s11 = scalar_select 0, %s10, %s8
  // Predicated region
  $region2: #{bottleneck_forward.3} parent=0 // pred_check
    _
  $region3: #{bottleneck_forward.3} parent=0 // pred_check_branch
    %13 = sbr.rel (0) target = $region5
  $region4: #{bottleneck_forward.3} parent=0 // pred_region
    _
  $region5: #{bottleneck_forward.3} parent=0 // pred_fallthru
    _
  // Predicated region
  $region6: #{bottleneck_forward.3} parent=0 // pred_check
    _
  $region7: #{bottleneck_forward.3} parent=0 // pred_check_branch
    %15 = sbr.rel (0) target = $region9
  $region8: #{bottleneck_forward.3} parent=0 // pred_region
    _
  $region9: #{bottleneck_forward.3} parent=0 // pred_fallthru
    _
  // Predicated region
  $region10: #{bottleneck_forward.3} parent=0 // pred_check
    _
  $region11: #{bottleneck_forward.3} parent=0 // pred_check_branch
    %17 = sbr.rel (0) target = $region13
  $region12: #{bottleneck_forward.3} parent=0 // pred_region
    _
  $region13: #{bottleneck_forward.3} parent=0 // pred_fallthru
    _
  // Predicated region
  $region14: #{bottleneck_forward.3} parent=0 // pred_check
    _
  $region15: #{bottleneck_forward.3} parent=0 // pred_check_branch
    %19 = sbr.rel (0) target = $region17
  $region16: #{bottleneck_forward.3} parent=0 // pred_region
    _
  $region17: #{bottleneck_forward.3} parent=0 // pred_fallthru
    _
  // Predicated region
  $region18: #{bottleneck_forward.3} parent=0 // pred_check
    _
  $region19: #{bottleneck_forward.3} parent=0 // pred_check_branch
    %21 = sbr.rel (0) target = $region21
  $region20: #{bottleneck_forward.3} parent=0 // pred_region
    _
  $region21: #{bottleneck_forward.3} parent=0 // pred_fallthru
    _
  // Predicated region
  $region22: #{bottleneck_forward.3} parent=0 // pred_check
    _
  $region23: #{bottleneck_forward.3} parent=0 // pred_check_branch
    %23 = sbr.rel (0) target = $region25
  $region24: #{bottleneck_forward.3} parent=0 // pred_region
    _
  $region25: #{bottleneck_forward.3} parent=0 // pred_fallthru
    _
  // Predicated region
  $region26: #{bottleneck_forward.3} parent=0 // pred_check
    _
  $region27: #{bottleneck_forward.3} parent=0 // pred_check_branch
    %25 = sbr.rel (0) target = $region29
  $region28: #{bottleneck_forward.3} parent=0 // pred_region
    _
  $region29: #{bottleneck_forward.3} parent=0 // pred_fallthru
    _
  %p27 = scmp.eq.s32.totalorder 0, 0
  // Predicated region
  $region30: #{bottleneck_forward.3} parent=0 // pred_check
    %p28 = pneg %p27
  $region31: #{bottleneck_forward.3} parent=0 // pred_check_branch
    %30 = sbr.rel (%p28) target = $region33
  $region32: #{bottleneck_forward.3} parent=0 // pred_region
    %v31 = vld [vmem:[%s0] sm:$0xf]
    %v32 = vld [vmem:[%s0 + $0x4] sm:$0xf]
    %v33 = vld [vmem:[%s0 + $0x8] sm:$0xf]
    %v34 = vld [vmem:[%s0 + $0xc] sm:$0xf]
    %v35 = vld [vmem:[%s0 + $0x10] sm:$0xf]
    %v36 = vld [vmem:[%s0 + $0x14] sm:$0xf]
    %v37 = vld [vmem:[%s0 + $0x18] sm:$0xf]
    %v38 = vld [vmem:[%s0 + $0x1c] sm:$0xf]
    %v39 = vld [vmem:[%s0 + $0x20] sm:$0xf]
    %v40 = vld [vmem:[%s0 + $0x24] sm:$0xf]
    %v41 = vld [vmem:[%s0 + $0x28] sm:$0xf]
    %v42 = vld [vmem:[%s0 + $0x2c] sm:$0xf]
    %v43 = vld [vmem:[%s0 + $0x30] sm:$0xf]
    %v44 = vld [vmem:[%s0 + $0x34] sm:$0xf]
    %v45 = vld [vmem:[%s0 + $0x38] sm:$0xf]
    %v46 = vld [vmem:[%s0 + $0x3c] sm:$0xf]
    %v47 = vld [vmem:[%s0 + $0x40] sm:$0xf]
    %v48 = vld [vmem:[%s0 + $0x44] sm:$0xf]
    %v49 = vld [vmem:[%s0 + $0x48] sm:$0xf]
    %v50 = vld [vmem:[%s0 + $0x4c] sm:$0xf]
    %v51 = vld [vmem:[%s0 + $0x50] sm:$0xf]
    %v52 = vld [vmem:[%s0 + $0x54] sm:$0xf]
    %v53 = vld [vmem:[%s0 + $0x58] sm:$0xf]
    %v54 = vld [vmem:[%s0 + $0x5c] sm:$0xf]
    %v55 = vld [vmem:[%s0 + $0x60] sm:$0xf]
    %v56 = vld [vmem:[%s0 + $0x64] sm:$0xf]
    %v57 = vld [vmem:[%s0 + $0x68] sm:$0xf]
    %v58 = vld [vmem:[%s0 + $0x6c] sm:$0xf]
    %v59 = vld [vmem:[%s0 + $0x70] sm:$0xf]
    %v60 = vld [vmem:[%s0 + $0x74] sm:$0xf]
    %v61 = vld [vmem:[%s0 + $0x78] sm:$0xf]
    %v62 = vld [vmem:[%s0 + $0x7c] sm:$0xf]
    %v63 = vld [vmem:[%s0 + $0x80] sm:$0xf]
    %v64 = vld [vmem:[%s0 + $0x84] sm:$0xf]
    %v65 = vld [vmem:[%s0 + $0x88] sm:$0xf]
    %v66 = vld [vmem:[%s0 + $0x8c] sm:$0xf]
    %v67 = vld [vmem:[%s0 + $0x90] sm:$0xf]
    %v68 = vld [vmem:[%s0 + $0x94] sm:$0xf]
    %v69 = vld [vmem:[%s0 + $0x98] sm:$0xf]
    %v70 = vld [vmem:[%s0 + $0x9c] sm:$0xf]
    %v71 = vld [vmem:[%s0 + $0xa0] sm:$0xf]
    %v72 = vld [vmem:[%s0 + $0xa4] sm:$0xf]
    %v73 = vld [vmem:[%s0 + $0xa8] sm:$0xf]
    %v74 = vld [vmem:[%s0 + $0xac] sm:$0xf]
    %v75 = vld [vmem:[%s0 + $0xb0] sm:$0xf]
    %v76 = vld [vmem:[%s0 + $0xb4] sm:$0xf]
    %v77 = vld [vmem:[%s0 + $0xb8] sm:$0xf]
    %v78 = vld [vmem:[%s0 + $0xbc] sm:$0xf]
    %v79 = vld [vmem:[%s0 + $0xc0] sm:$0xf]
    %v80 = vld [vmem:[%s0 + $0xc4] sm:$0xf]
    %v81 = vld [vmem:[%s0 + $0xc8] sm:$0xf]
    %v82 = vld [vmem:[%s0 + $0xcc] sm:$0xf]
    %v83 = vld [vmem:[%s0 + $0xd0] sm:$0xf]
    %v84 = vld [vmem:[%s0 + $0xd4] sm:$0xf]
    %v85 = vld [vmem:[%s0 + $0xd8] sm:$0xf]
    %v86 = vld [vmem:[%s0 + $0xdc] sm:$0xf]
    %v87 = vld [vmem:[%s0 + $0xe0] sm:$0xf]
    %v88 = vld [vmem:[%s0 + $0xe4] sm:$0xf]
    %v89 = vld [vmem:[%s0 + $0xe8] sm:$0xf]
    %v90 = vld [vmem:[%s0 + $0xec] sm:$0xf]
    %v91 = vld [vmem:[%s0 + $0xf0] sm:$0xf]
    %v92 = vld [vmem:[%s0 + $0xf4] sm:$0xf]
    %v93 = vld [vmem:[%s0 + $0xf8] sm:$0xf]
    %v94 = vld [vmem:[%s0 + $0xfc] sm:$0xf]
    %v95 = vld [vmem:[%s1] sm:$0x3]
    %v160 = vunpack.c.l.b16 %v31
    %v161 = vunpack.c.l.b16 %v32
    %v162 = vunpack.c.l.b16 %v33
    %v163 = vunpack.c.l.b16 %v34
    %v164 = vunpack.c.l.b16 %v35
    %v165 = vunpack.c.l.b16 %v36
    %v166 = vunpack.c.l.b16 %v37
    %v167 = vunpack.c.l.b16 %v38
    %v168 = vunpack.c.l.b16 %v39
    %v169 = vunpack.c.l.b16 %v40
    %v170 = vunpack.c.l.b16 %v41
    %v171 = vunpack.c.l.b16 %v42
    %v172 = vunpack.c.l.b16 %v43
    %v173 = vunpack.c.l.b16 %v44
    %v174 = vunpack.c.l.b16 %v45
    %v175 = vunpack.c.l.b16 %v46
    %v176 = vunpack.c.l.b16 %v47
    %v177 = vunpack.c.l.b16 %v48
    %v178 = vunpack.c.l.b16 %v49
    %v179 = vunpack.c.l.b16 %v50
    %v180 = vunpack.c.l.b16 %v51
    %v181 = vunpack.c.l.b16 %v52
    %v182 = vunpack.c.l.b16 %v53
    %v183 = vunpack.c.l.b16 %v54
    %v184 = vunpack.c.l.b16 %v55
    %v185 = vunpack.c.l.b16 %v56
    %v186 = vunpack.c.l.b16 %v57
    %v187 = vunpack.c.l.b16 %v58
    %v188 = vunpack.c.l.b16 %v59
    %v189 = vunpack.c.l.b16 %v60
    %v190 = vunpack.c.l.b16 %v61
    %v191 = vunpack.c.l.b16 %v62
    %v192 = vunpack.c.l.b16 %v63
    %v193 = vunpack.c.l.b16 %v64
    %v194 = vunpack.c.l.b16 %v65
    %v195 = vunpack.c.l.b16 %v66
    %v196 = vunpack.c.l.b16 %v67
    %v197 = vunpack.c.l.b16 %v68
    %v198 = vunpack.c.l.b16 %v69
    %v199 = vunpack.c.l.b16 %v70
    %v200 = vunpack.c.l.b16 %v71
    %v201 = vunpack.c.l.b16 %v72
    %v202 = vunpack.c.l.b16 %v73
    %v203 = vunpack.c.l.b16 %v74
    %v204 = vunpack.c.l.b16 %v75
    %v205 = vunpack.c.l.b16 %v76
    %v206 = vunpack.c.l.b16 %v77
    %v207 = vunpack.c.l.b16 %v78
    %v208 = vunpack.c.l.b16 %v79
    %v209 = vunpack.c.l.b16 %v80
    %v210 = vunpack.c.l.b16 %v81
    %v211 = vunpack.c.l.b16 %v82
    %v212 = vunpack.c.l.b16 %v83
    %v213 = vunpack.c.l.b16 %v84
    %v214 = vunpack.c.l.b16 %v85
    %v215 = vunpack.c.l.b16 %v86
    %v216 = vunpack.c.l.b16 %v87
    %v217 = vunpack.c.l.b16 %v88
    %v218 = vunpack.c.l.b16 %v89
    %v219 = vunpack.c.l.b16 %v90
    %v220 = vunpack.c.l.b16 %v91
    %v221 = vunpack.c.l.b16 %v92
    %v222 = vunpack.c.l.b16 %v93
    %v223 = vunpack.c.l.b16 %v94
    %v224 = vpack.c.b16 %v161, %v160
    %v225 = vpack.c.b16 %v163, %v162
    %v226 = vpack.c.b16 %v165, %v164
    %v227 = vpack.c.b16 %v167, %v166
    %v228 = vpack.c.b16 %v169, %v168
    %v229 = vpack.c.b16 %v171, %v170
    %v230 = vpack.c.b16 %v173, %v172
    %v231 = vpack.c.b16 %v175, %v174
    %v232 = vpack.c.b16 %v177, %v176
    %v233 = vpack.c.b16 %v179, %v178
    %v234 = vpack.c.b16 %v181, %v180
    %v235 = vpack.c.b16 %v183, %v182
    %v236 = vpack.c.b16 %v185, %v184
    %v237 = vpack.c.b16 %v187, %v186
    %v238 = vpack.c.b16 %v189, %v188
    %v239 = vpack.c.b16 %v191, %v190
    %v240 = vpack.c.b16 %v193, %v192
    %v241 = vpack.c.b16 %v195, %v194
    %v242 = vpack.c.b16 %v197, %v196
    %v243 = vpack.c.b16 %v199, %v198
    %v244 = vpack.c.b16 %v201, %v200
    %v245 = vpack.c.b16 %v203, %v202
    %v246 = vpack.c.b16 %v205, %v204
    %v247 = vpack.c.b16 %v207, %v206
    %v248 = vpack.c.b16 %v209, %v208
    %v249 = vpack.c.b16 %v211, %v210
    %v250 = vpack.c.b16 %v213, %v212
    %v251 = vpack.c.b16 %v215, %v214
    %v252 = vpack.c.b16 %v217, %v216
    %v253 = vpack.c.b16 %v219, %v218
    %v254 = vpack.c.b16 %v221, %v220
    %v255 = vpack.c.b16 %v223, %v222
    %vm256 = vcmask 31744
    %v258 = vsel %vm256, %v224, 0
    %v261 = vsel %vm256, %v225, 0
    %v264 = vsel %vm256, %v226, 0
    %v267 = vsel %vm256, %v227, 0
    %v270 = vsel %vm256, %v228, 0
    %v273 = vsel %vm256, %v229, 0
    %v276 = vsel %vm256, %v230, 0
    %v279 = vsel %vm256, %v231, 0
    %v282 = vsel %vm256, %v232, 0
    %v285 = vsel %vm256, %v233, 0
    %v288 = vsel %vm256, %v234, 0
    %v291 = vsel %vm256, %v235, 0
    %v294 = vsel %vm256, %v236, 0
    %v297 = vsel %vm256, %v237, 0
    %v300 = vsel %vm256, %v238, 0
    %v303 = vsel %vm256, %v239, 0
    %v306 = vsel %vm256, %v240, 0
    %v309 = vsel %vm256, %v241, 0
    %v312 = vsel %vm256, %v242, 0
    %v315 = vsel %vm256, %v243, 0
    %v318 = vsel %vm256, %v244, 0
    %v321 = vsel %vm256, %v245, 0
    %v324 = vsel %vm256, %v246, 0
    %v327 = vsel %vm256, %v247, 0
    %v330 = vsel %vm256, %v248, 0
    %v333 = vsel %vm256, %v249, 0
    %v336 = vsel %vm256, %v250, 0
    %v339 = vsel %vm256, %v251, 0
    %v342 = vsel %vm256, %v252, 0
    %v345 = vsel %vm256, %v253, 0
    %v348 = vsel %vm256, %v254, 0
    %v351 = vsel %vm256, %v255, 0
    %vm353 = vcmask 1041408
    %v355 = vsel %vm353, %v95, 0
    %357 = vmatprep.subr.bf16.mxu0 0
    %358 = vmatpush1.bf16.msra.mxu0 %v355
    %359 = vmatprep.subr.bf16.mxu0 0
    %360 = vmatpush1.bf16.msra.mxu0 0
    %361 = vmatprep.subr.bf16.mxu0 0
    %362 = vmatpush1.bf16.msra.mxu0 0
    %363 = vmatprep.subr.bf16.mxu0 0
    %364 = vmatpush1.bf16.msra.mxu0 0
    %365 = vmatprep.subr.bf16.mxu0 0
    %366 = vmatpush1.bf16.msra.mxu0 0
    %367 = vmatprep.subr.bf16.mxu0 0
    %368 = vmatpush1.bf16.msra.mxu0 0
    %369 = vmatprep.subr.bf16.mxu0 0
    %370 = vmatpush1.bf16.msra.mxu0 0
    %371 = vmatprep.subr.bf16.mxu0 0
    %372 = vmatpush1.bf16.msra.mxu0 0
    %373 = vmatprep.subr.bf16.mxu0 0
    %374 = vmatpush1.bf16.msra.mxu0 0
    %375 = vmatprep.subr.bf16.mxu0 0
    %376 = vmatpush1.bf16.msra.mxu0 0
    %377 = vmatprep.subr.bf16.mxu0 0
    %378 = vmatpush1.bf16.msra.mxu0 0
    %379 = vmatprep.subr.bf16.mxu0 0
    %380 = vmatpush1.bf16.msra.mxu0 0
    %381 = vmatprep.subr.bf16.mxu0 0
    %382 = vmatpush1.bf16.msra.mxu0 0
    %383 = vmatprep.subr.bf16.mxu0 0
    %384 = vmatpush1.bf16.msra.mxu0 0
    %385 = vmatprep.subr.bf16.mxu0 0
    %386 = vmatpush1.bf16.msra.mxu0 0
    %387 = vmatprep.subr.bf16.mxu0 0
    %388 = vmatpush1.bf16.msra.mxu0 0
    %389 = vmatprep.mubr.bf16.mxu0 0
    %390 = vmatmul.mubr.bf16.gmra.mrb[0].mxu0 %v258
    %v391 = vpop.f32.mrb[0].mxu0
    %v392 = vadd.f32 0.0, %v391
    %v393 = vpop.f32.mrb[0].mxu0
    %v394 = vpop.f32.mrb[0].mxu0
    %v395 = vadd.f32 0.0, %v394
    %v396 = vpop.f32.mrb[0].mxu0
    %397 = vmatprep.mubr.bf16.mxu0 0
    %398 = vmatmul.mubr.bf16.gmra.mrb[0].mxu0 %v261
    %v399 = vpop.f32.mrb[0].mxu0
    %v400 = vadd.f32 0.0, %v399
    %v401 = vpop.f32.mrb[0].mxu0
    %v402 = vpop.f32.mrb[0].mxu0
    %v403 = vadd.f32 0.0, %v402
    %v404 = vpop.f32.mrb[0].mxu0
    %405 = vmatprep.mubr.bf16.mxu0 0
    %406 = vmatmul.mubr.bf16.gmra.mrb[0].mxu0 %v264
    %v407 = vpop.f32.mrb[0].mxu0
    %v408 = vadd.f32 0.0, %v407
    %v409 = vpop.f32.mrb[0].mxu0
    %v410 = vpop.f32.mrb[0].mxu0
    %v411 = vadd.f32 0.0, %v410
    %v412 = vpop.f32.mrb[0].mxu0
    %413 = vmatprep.mubr.bf16.mxu0 0
    %414 = vmatmul.mubr.bf16.gmra.mrb[0].mxu0 %v267
    %v415 = vpop.f32.mrb[0].mxu0
    %v416 = vadd.f32 0.0, %v415
    %v417 = vpop.f32.mrb[0].mxu0
    %v418 = vpop.f32.mrb[0].mxu0
    %v419 = vadd.f32 0.0, %v418
    %v420 = vpop.f32.mrb[0].mxu0
    %421 = vmatprep.mubr.bf16.mxu0 0
    %422 = vmatmul.mubr.bf16.gmra.mrb[0].mxu0 %v270
    %v423 = vpop.f32.mrb[0].mxu0
    %v424 = vadd.f32 0.0, %v423
    %v425 = vpop.f32.mrb[0].mxu0
    %v426 = vpop.f32.mrb[0].mxu0
    %v427 = vadd.f32 0.0, %v426
    %v428 = vpop.f32.mrb[0].mxu0
    %429 = vmatprep.mubr.bf16.mxu0 0
    %430 = vmatmul.mubr.bf16.gmra.mrb[0].mxu0 %v273
    %v431 = vpop.f32.mrb[0].mxu0
    %v432 = vadd.f32 0.0, %v431
    %v433 = vpop.f32.mrb[0].mxu0
    %v434 = vpop.f32.mrb[0].mxu0
    %v435 = vadd.f32 0.0, %v434
    %v436 = vpop.f32.mrb[0].mxu0
    %437 = vmatprep.mubr.bf16.mxu0 0
    %438 = vmatmul.mubr.bf16.gmra.mrb[0].mxu0 %v276
    %v439 = vpop.f32.mrb[0].mxu0
    %v440 = vadd.f32 0.0, %v439
    %v441 = vpop.f32.mrb[0].mxu0
    %v442 = vpop.f32.mrb[0].mxu0
    %v443 = vadd.f32 0.0, %v442
    %v444 = vpop.f32.mrb[0].mxu0
    %445 = vmatprep.mubr.bf16.mxu0 0
    %446 = vmatmul.mubr.bf16.gmra.mrb[0].mxu0 %v279
    %v447 = vpop.f32.mrb[0].mxu0
    %v448 = vadd.f32 0.0, %v447
    %v449 = vpop.f32.mrb[0].mxu0
    %v450 = vpop.f32.mrb[0].mxu0
    %v451 = vadd.f32 0.0, %v450
    %v452 = vpop.f32.mrb[0].mxu0
    %453 = vmatprep.mubr.bf16.mxu0 0
    %454 = vmatmul.mubr.bf16.gmra.mrb[0].mxu0 %v282
    %v455 = vpop.f32.mrb[0].mxu0
    %v456 = vadd.f32 0.0, %v455
    %v457 = vpop.f32.mrb[0].mxu0
    %v458 = vpop.f32.mrb[0].mxu0
    %v459 = vadd.f32 0.0, %v458
    %v460 = vpop.f32.mrb[0].mxu0
    %461 = vmatprep.mubr.bf16.mxu0 0
    %462 = vmatmul.mubr.bf16.gmra.mrb[0].mxu0 %v285
    %v463 = vpop.f32.mrb[0].mxu0
    %v464 = vadd.f32 0.0, %v463
    %v465 = vpop.f32.mrb[0].mxu0
    %v466 = vpop.f32.mrb[0].mxu0
    %v467 = vadd.f32 0.0, %v466
    %v468 = vpop.f32.mrb[0].mxu0
    %469 = vmatprep.mubr.bf16.mxu0 0
    %470 = vmatmul.mubr.bf16.gmra.mrb[0].mxu0 %v288
    %v471 = vpop.f32.mrb[0].mxu0
    %v472 = vadd.f32 0.0, %v471
    %v473 = vpop.f32.mrb[0].mxu0
    %v474 = vpop.f32.mrb[0].mxu0
    %v475 = vadd.f32 0.0, %v474
    %v476 = vpop.f32.mrb[0].mxu0
    %477 = vmatprep.mubr.bf16.mxu0 0
    %478 = vmatmul.mubr.bf16.gmra.mrb[0].mxu0 %v291
    %v479 = vpop.f32.mrb[0].mxu0
    %v480 = vadd.f32 0.0, %v479
    %v481 = vpop.f32.mrb[0].mxu0
    %v482 = vpop.f32.mrb[0].mxu0
    %v483 = vadd.f32 0.0, %v482
    %v484 = vpop.f32.mrb[0].mxu0
    %485 = vmatprep.mubr.bf16.mxu0 0
    %486 = vmatmul.mubr.bf16.gmra.mrb[0].mxu0 %v294
    %v487 = vpop.f32.mrb[0].mxu0
    %v488 = vadd.f32 0.0, %v487
    %v489 = vpop.f32.mrb[0].mxu0
    %v490 = vpop.f32.mrb[0].mxu0
    %v491 = vadd.f32 0.0, %v490
    %v492 = vpop.f32.mrb[0].mxu0
    %493 = vmatprep.mubr.bf16.mxu0 0
    %494 = vmatmul.mubr.bf16.gmra.mrb[0].mxu0 %v297
    %v495 = vpop.f32.mrb[0].mxu0
    %v496 = vadd.f32 0.0, %v495
    %v497 = vpop.f32.mrb[0].mxu0
    %v498 = vpop.f32.mrb[0].mxu0
    %v499 = vadd.f32 0.0, %v498
    %v500 = vpop.f32.mrb[0].mxu0
    %501 = vmatprep.mubr.bf16.mxu0 0
    %502 = vmatmul.mubr.bf16.gmra.mrb[0].mxu0 %v300
    %v503 = vpop.f32.mrb[0].mxu0
    %v504 = vadd.f32 0.0, %v503
    %v505 = vpop.f32.mrb[0].mxu0
    %v506 = vpop.f32.mrb[0].mxu0
    %v507 = vadd.f32 0.0, %v506
    %v508 = vpop.f32.mrb[0].mxu0
    %509 = vmatprep.mubr.bf16.mxu0 0
    %510 = vmatmul.mubr.bf16.gmra.mrb[0].mxu0 %v303
    %v511 = vpop.f32.mrb[0].mxu0
    %v512 = vadd.f32 0.0, %v511
    %v513 = vpop.f32.mrb[0].mxu0
    %v514 = vpop.f32.mrb[0].mxu0
    %v515 = vadd.f32 0.0, %v514
    %v516 = vpop.f32.mrb[0].mxu0
    %517 = vmatprep.mubr.bf16.mxu0 0
    %518 = vmatmul.mubr.bf16.gmra.mrb[0].mxu0 %v306
    %v519 = vpop.f32.mrb[0].mxu0
    %v520 = vadd.f32 0.0, %v519
    %v521 = vpop.f32.mrb[0].mxu0
    %v522 = vpop.f32.mrb[0].mxu0
    %v523 = vadd.f32 0.0, %v522
    %v524 = vpop.f32.mrb[0].mxu0
    %525 = vmatprep.mubr.bf16.mxu0 0
    %526 = vmatmul.mubr.bf16.gmra.mrb[0].mxu0 %v309
    %v527 = vpop.f32.mrb[0].mxu0
    %v528 = vadd.f32 0.0, %v527
    %v529 = vpop.f32.mrb[0].mxu0
    %v530 = vpop.f32.mrb[0].mxu0
    %v531 = vadd.f32 0.0, %v530
    %v532 = vpop.f32.mrb[0].mxu0
    %533 = vmatprep.mubr.bf16.mxu0 0
    %534 = vmatmul.mubr.bf16.gmra.mrb[0].mxu0 %v312
    %v535 = vpop.f32.mrb[0].mxu0
    %v536 = vadd.f32 0.0, %v535
    %v537 = vpop.f32.mrb[0].mxu0
    %v538 = vpop.f32.mrb[0].mxu0
    %v539 = vadd.f32 0.0, %v538
    %v540 = vpop.f32.mrb[0].mxu0
    %541 = vmatprep.mubr.bf16.mxu0 0
    %542 = vmatmul.mubr.bf16.gmra.mrb[0].mxu0 %v315
    %v543 = vpop.f32.mrb[0].mxu0
    %v544 = vadd.f32 0.0, %v543
    %v545 = vpop.f32.mrb[0].mxu0
    %v546 = vpop.f32.mrb[0].mxu0
    %v547 = vadd.f32 0.0, %v546
    %v548 = vpop.f32.mrb[0].mxu0
    %549 = vmatprep.mubr.bf16.mxu0 0
    %550 = vmatmul.mubr.bf16.gmra.mrb[0].mxu0 %v318
    %v551 = vpop.f32.mrb[0].mxu0
    %v552 = vadd.f32 0.0, %v551
    %v553 = vpop.f32.mrb[0].mxu0
    %v554 = vpop.f32.mrb[0].mxu0
    %v555 = vadd.f32 0.0, %v554
    %v556 = vpop.f32.mrb[0].mxu0
    %557 = vmatprep.mubr.bf16.mxu0 0
    %558 = vmatmul.mubr.bf16.gmra.mrb[0].mxu0 %v321
    %v559 = vpop.f32.mrb[0].mxu0
    %v560 = vadd.f32 0.0, %v559
    %v561 = vpop.f32.mrb[0].mxu0
    %v562 = vpop.f32.mrb[0].mxu0
    %v563 = vadd.f32 0.0, %v562
    %v564 = vpop.f32.mrb[0].mxu0
    %565 = vmatprep.mubr.bf16.mxu0 0
    %566 = vmatmul.mubr.bf16.gmra.mrb[0].mxu0 %v324
    %v567 = vpop.f32.mrb[0].mxu0
    %v568 = vadd.f32 0.0, %v567
    %v569 = vpop.f32.mrb[0].mxu0
    %v570 = vpop.f32.mrb[0].mxu0
    %v571 = vadd.f32 0.0, %v570
    %v572 = vpop.f32.mrb[0].mxu0
    %573 = vmatprep.mubr.bf16.mxu0 0
    %574 = vmatmul.mubr.bf16.gmra.mrb[0].mxu0 %v327
    %v575 = vpop.f32.mrb[0].mxu0
    %v576 = vadd.f32 0.0, %v575
    %v577 = vpop.f32.mrb[0].mxu0
    %v578 = vpop.f32.mrb[0].mxu0
    %v579 = vadd.f32 0.0, %v578
    %v580 = vpop.f32.mrb[0].mxu0
    %581 = vmatprep.mubr.bf16.mxu0 0
    %582 = vmatmul.mubr.bf16.gmra.mrb[0].mxu0 %v330
    %v583 = vpop.f32.mrb[0].mxu0
    %v584 = vadd.f32 0.0, %v583
    %v585 = vpop.f32.mrb[0].mxu0
    %v586 = vpop.f32.mrb[0].mxu0
    %v587 = vadd.f32 0.0, %v586
    %v588 = vpop.f32.mrb[0].mxu0
    %589 = vmatprep.mubr.bf16.mxu0 0
    %590 = vmatmul.mubr.bf16.gmra.mrb[0].mxu0 %v333
    %v591 = vpop.f32.mrb[0].mxu0
    %v592 = vadd.f32 0.0, %v591
    %v593 = vpop.f32.mrb[0].mxu0
    %v594 = vpop.f32.mrb[0].mxu0
    %v595 = vadd.f32 0.0, %v594
    %v596 = vpop.f32.mrb[0].mxu0
    %597 = vmatprep.mubr.bf16.mxu0 0
    %598 = vmatmul.mubr.bf16.gmra.mrb[0].mxu0 %v336
    %v599 = vpop.f32.mrb[0].mxu0
    %v600 = vadd.f32 0.0, %v599
    %v601 = vpop.f32.mrb[0].mxu0
    %v602 = vpop.f32.mrb[0].mxu0
    %v603 = vadd.f32 0.0, %v602
    %v604 = vpop.f32.mrb[0].mxu0
    %605 = vmatprep.mubr.bf16.mxu0 0
    %606 = vmatmul.mubr.bf16.gmra.mrb[0].mxu0 %v339
    %v607 = vpop.f32.mrb[0].mxu0
    %v608 = vadd.f32 0.0, %v607
    %v609 = vpop.f32.mrb[0].mxu0
    %v610 = vpop.f32.mrb[0].mxu0
    %v611 = vadd.f32 0.0, %v610
    %v612 = vpop.f32.mrb[0].mxu0
    %613 = vmatprep.mubr.bf16.mxu0 0
    %614 = vmatmul.mubr.bf16.gmra.mrb[0].mxu0 %v342
    %v615 = vpop.f32.mrb[0].mxu0
    %v616 = vadd.f32 0.0, %v615
    %v617 = vpop.f32.mrb[0].mxu0
    %v618 = vpop.f32.mrb[0].mxu0
    %v619 = vadd.f32 0.0, %v618
    %v620 = vpop.f32.mrb[0].mxu0
    %621 = vmatprep.mubr.bf16.mxu0 0
    %622 = vmatmul.mubr.bf16.gmra.mrb[0].mxu0 %v345
    %v623 = vpop.f32.mrb[0].mxu0
    %v624 = vadd.f32 0.0, %v623
    %v625 = vpop.f32.mrb[0].mxu0
    %v626 = vpop.f32.mrb[0].mxu0
    %v627 = vadd.f32 0.0, %v626
    %v628 = vpop.f32.mrb[0].mxu0
    %629 = vmatprep.mubr.bf16.mxu0 0
    %630 = vmatmul.mubr.bf16.gmra.mrb[0].mxu0 %v348
    %v631 = vpop.f32.mrb[0].mxu0
    %v632 = vadd.f32 0.0, %v631
    %v633 = vpop.f32.mrb[0].mxu0
    %v634 = vpop.f32.mrb[0].mxu0
    %v635 = vadd.f32 0.0, %v634
    %v636 = vpop.f32.mrb[0].mxu0
    %637 = vmatprep.mubr.bf16.mxu0 0
    %638 = vmatmul.mubr.bf16.gmra.mrb[0].mxu0 %v351
    %v639 = vpop.f32.mrb[0].mxu0
    %v640 = vadd.f32 0.0, %v639
    %v641 = vpop.f32.mrb[0].mxu0
    %v642 = vpop.f32.mrb[0].mxu0
    %v643 = vadd.f32 0.0, %v642
    %v644 = vpop.f32.mrb[0].mxu0
    %645 = vdwg.mxu0
    %v646 = vld [vmem:[%s4] sm:$0x1]
    %v648 = vlaneseq
    %v649 = vshrl.u32 %v648, 7
    %v650 = vsub.s32 0, %v649
    %v651 = vrot.slane %v646, %v650
    %v653 = vmul.f32 %v392, %v651
    %v654 = vmul.f32 %v395, %v651
    %v655 = vmul.f32 %v400, %v651
    %v656 = vmul.f32 %v403, %v651
    %v657 = vmul.f32 %v408, %v651
    %v658 = vmul.f32 %v411, %v651
    %v659 = vmul.f32 %v416, %v651
    %v660 = vmul.f32 %v419, %v651
    %v661 = vmul.f32 %v424, %v651
    %v662 = vmul.f32 %v427, %v651
    %v663 = vmul.f32 %v432, %v651
    %v664 = vmul.f32 %v435, %v651
    %v665 = vmul.f32 %v440, %v651
    %v666 = vmul.f32 %v443, %v651
    %v667 = vmul.f32 %v448, %v651
    %v668 = vmul.f32 %v451, %v651
    %v669 = vmul.f32 %v456, %v651
    %v670 = vmul.f32 %v459, %v651
    %v671 = vmul.f32 %v464, %v651
    %v672 = vmul.f32 %v467, %v651
    %v673 = vmul.f32 %v472, %v651
    %v674 = vmul.f32 %v475, %v651
    %v675 = vmul.f32 %v480, %v651
    %v676 = vmul.f32 %v483, %v651
    %v677 = vmul.f32 %v488, %v651
    %v678 = vmul.f32 %v491, %v651
    %v679 = vmul.f32 %v496, %v651
    %v680 = vmul.f32 %v499, %v651
    %v681 = vmul.f32 %v504, %v651
    %v682 = vmul.f32 %v507, %v651
    %v683 = vmul.f32 %v512, %v651
    %v684 = vmul.f32 %v515, %v651
    %v685 = vmul.f32 %v520, %v651
    %v686 = vmul.f32 %v523, %v651
    %v687 = vmul.f32 %v528, %v651
    %v688 = vmul.f32 %v531, %v651
    %v689 = vmul.f32 %v536, %v651
    %v690 = vmul.f32 %v539, %v651
    %v691 = vmul.f32 %v544, %v651
    %v692 = vmul.f32 %v547, %v651
    %v693 = vmul.f32 %v552, %v651
    %v694 = vmul.f32 %v555, %v651
    %v695 = vmul.f32 %v560, %v651
    %v696 = vmul.f32 %v563, %v651
    %v697 = vmul.f32 %v568, %v651
    %v698 = vmul.f32 %v571, %v651
    %v699 = vmul.f32 %v576, %v651
    %v700 = vmul.f32 %v579, %v651
    %v701 = vmul.f32 %v584, %v651
    %v702 = vmul.f32 %v587, %v651
    %v703 = vmul.f32 %v592, %v651
    %v704 = vmul.f32 %v595, %v651
    %v705 = vmul.f32 %v600, %v651
    %v706 = vmul.f32 %v603, %v651
    %v707 = vmul.f32 %v608, %v651
    %v708 = vmul.f32 %v611, %v651
    %v709 = vmul.f32 %v616, %v651
    %v710 = vmul.f32 %v619, %v651
    %v711 = vmul.f32 %v624, %v651
    %v712 = vmul.f32 %v627, %v651
    %v713 = vmul.f32 %v632, %v651
    %v714 = vmul.f32 %v635, %v651
    %v715 = vmul.f32 %v640, %v651
    %v716 = vmul.f32 %v643, %v651
    %v717 = vld [vmem:[%s6] sm:$0x1]
    %v719 = vlaneseq
    %v720 = vshrl.u32 %v719, 7
    %v721 = vsub.s32 0, %v720
    %v722 = vrot.slane %v717, %v721
    %v724 = vadd.f32 %v653, %v722
    %v725 = vadd.f32 %v654, %v722
    %v726 = vadd.f32 %v655, %v722
    %v727 = vadd.f32 %v656, %v722
    %v728 = vadd.f32 %v657, %v722
    %v729 = vadd.f32 %v658, %v722
    %v730 = vadd.f32 %v659, %v722
    %v731 = vadd.f32 %v660, %v722
    %v732 = vadd.f32 %v661, %v722
    %v733 = vadd.f32 %v662, %v722
    %v734 = vadd.f32 %v663, %v722
    %v735 = vadd.f32 %v664, %v722
    %v736 = vadd.f32 %v665, %v722
    %v737 = vadd.f32 %v666, %v722
    %v738 = vadd.f32 %v667, %v722
    %v739 = vadd.f32 %v668, %v722
    %v740 = vadd.f32 %v669, %v722
    %v741 = vadd.f32 %v670, %v722
    %v742 = vadd.f32 %v671, %v722
    %v743 = vadd.f32 %v672, %v722
    %v744 = vadd.f32 %v673, %v722
    %v745 = vadd.f32 %v674, %v722
    %v746 = vadd.f32 %v675, %v722
    %v747 = vadd.f32 %v676, %v722
    %v748 = vadd.f32 %v677, %v722
    %v749 = vadd.f32 %v678, %v722
    %v750 = vadd.f32 %v679, %v722
    %v751 = vadd.f32 %v680, %v722
    %v752 = vadd.f32 %v681, %v722
    %v753 = vadd.f32 %v682, %v722
    %v754 = vadd.f32 %v683, %v722
    %v755 = vadd.f32 %v684, %v722
    %v756 = vadd.f32 %v685, %v722
    %v757 = vadd.f32 %v686, %v722
    %v758 = vadd.f32 %v687, %v722
    %v759 = vadd.f32 %v688, %v722
    %v760 = vadd.f32 %v689, %v722
    %v761 = vadd.f32 %v690, %v722
    %v762 = vadd.f32 %v691, %v722
    %v763 = vadd.f32 %v692, %v722
    %v764 = vadd.f32 %v693, %v722
    %v765 = vadd.f32 %v694, %v722
    %v766 = vadd.f32 %v695, %v722
    %v767 = vadd.f32 %v696, %v722
    %v768 = vadd.f32 %v697, %v722
    %v769 = vadd.f32 %v698, %v722
    %v770 = vadd.f32 %v699, %v722
    %v771 = vadd.f32 %v700, %v722
    %v772 = vadd.f32 %v701, %v722
    %v773 = vadd.f32 %v702, %v722
    %v774 = vadd.f32 %v703, %v722
    %v775 = vadd.f32 %v704, %v722
    %v776 = vadd.f32 %v705, %v722
    %v777 = vadd.f32 %v706, %v722
    %v778 = vadd.f32 %v707, %v722
    %v779 = vadd.f32 %v708, %v722
    %v780 = vadd.f32 %v709, %v722
    %v781 = vadd.f32 %v710, %v722
    %v782 = vadd.f32 %v711, %v722
    %v783 = vadd.f32 %v712, %v722
    %v784 = vadd.f32 %v713, %v722
    %v785 = vadd.f32 %v714, %v722
    %v786 = vadd.f32 %v715, %v722
    %v787 = vadd.f32 %v716, %v722
    %vm788 = vcmask 130048
    %789 = vst.msk [vmem:[#allocation2] sm:$0xff] %vm788, %v724
    %790 = vst.msk [vmem:[#allocation2 + $0x8] sm:$0xff] %vm788, %v725
    %791 = vst.msk [vmem:[#allocation2 + $0x10] sm:$0xff] %vm788, %v726
    %792 = vst.msk [vmem:[#allocation2 + $0x18] sm:$0xff] %vm788, %v727
    %793 = vst.msk [vmem:[#allocation2 + $0x20] sm:$0xff] %vm788, %v728
    %794 = vst.msk [vmem:[#allocation2 + $0x28] sm:$0xff] %vm788, %v729
    %795 = vst.msk [vmem:[#allocation2 + $0x30] sm:$0xff] %vm788, %v730
    %796 = vst.msk [vmem:[#allocation2 + $0x38] sm:$0xff] %vm788, %v731
    %797 = vst.msk [vmem:[#allocation2 + $0x40] sm:$0xff] %vm788, %v732
    %798 = vst.msk [vmem:[#allocation2 + $0x48] sm:$0xff] %vm788, %v733
    %799 = vst.msk [vmem:[#allocation2 + $0x50] sm:$0xff] %vm788, %v734
    %800 = vst.msk [vmem:[#allocation2 + $0x58] sm:$0xff] %vm788, %v735
    %801 = vst.msk [vmem:[#allocation2 + $0x60] sm:$0xff] %vm788, %v736
    %802 = vst.msk [vmem:[#allocation2 + $0x68] sm:$0xff] %vm788, %v737
    %803 = vst.msk [vmem:[#allocation2 + $0x70] sm:$0xff] %vm788, %v738
    %804 = vst.msk [vmem:[#allocation2 + $0x78] sm:$0xff] %vm788, %v739
    %805 = vst.msk [vmem:[#allocation2 + $0x80] sm:$0xff] %vm788, %v740
    %806 = vst.msk [vmem:[#allocation2 + $0x88] sm:$0xff] %vm788, %v741
    %807 = vst.msk [vmem:[#allocation2 + $0x90] sm:$0xff] %vm788, %v742
    %808 = vst.msk [vmem:[#allocation2 + $0x98] sm:$0xff] %vm788, %v743
    %809 = vst.msk [vmem:[#allocation2 + $0xa0] sm:$0xff] %vm788, %v744
    %810 = vst.msk [vmem:[#allocation2 + $0xa8] sm:$0xff] %vm788, %v745
    %811 = vst.msk [vmem:[#allocation2 + $0xb0] sm:$0xff] %vm788, %v746
    %812 = vst.msk [vmem:[#allocation2 + $0xb8] sm:$0xff] %vm788, %v747
    %813 = vst.msk [vmem:[#allocation2 + $0xc0] sm:$0xff] %vm788, %v748
    %814 = vst.msk [vmem:[#allocation2 + $0xc8] sm:$0xff] %vm788, %v749
    %815 = vst.msk [vmem:[#allocation2 + $0xd0] sm:$0xff] %vm788, %v750
    %816 = vst.msk [vmem:[#allocation2 + $0xd8] sm:$0xff] %vm788, %v751
    %817 = vst.msk [vmem:[#allocation2 + $0xe0] sm:$0xff] %vm788, %v752
    %818 = vst.msk [vmem:[#allocation2 + $0xe8] sm:$0xff] %vm788, %v753
    %819 = vst.msk [vmem:[#allocation2 + $0xf0] sm:$0xff] %vm788, %v754
    %820 = vst.msk [vmem:[#allocation2 + $0xf8] sm:$0xff] %vm788, %v755
    %821 = vst.msk [vmem:[#allocation2 + $0x100] sm:$0xff] %vm788, %v756
    %822 = vst.msk [vmem:[#allocation2 + $0x108] sm:$0xff] %vm788, %v757
    %823 = vst.msk [vmem:[#allocation2 + $0x110] sm:$0xff] %vm788, %v758
    %824 = vst.msk [vmem:[#allocation2 + $0x118] sm:$0xff] %vm788, %v759
    %825 = vst.msk [vmem:[#allocation2 + $0x120] sm:$0xff] %vm788, %v760
    %826 = vst.msk [vmem:[#allocation2 + $0x128] sm:$0xff] %vm788, %v761
    %827 = vst.msk [vmem:[#allocation2 + $0x130] sm:$0xff] %vm788, %v762
    %828 = vst.msk [vmem:[#allocation2 + $0x138] sm:$0xff] %vm788, %v763
    %829 = vst.msk [vmem:[#allocation2 + $0x140] sm:$0xff] %vm788, %v764
    %830 = vst.msk [vmem:[#allocation2 + $0x148] sm:$0xff] %vm788, %v765
    %831 = vst.msk [vmem:[#allocation2 + $0x150] sm:$0xff] %vm788, %v766
    %832 = vst.msk [vmem:[#allocation2 + $0x158] sm:$0xff] %vm788, %v767
    %833 = vst.msk [vmem:[#allocation2 + $0x160] sm:$0xff] %vm788, %v768
    %834 = vst.msk [vmem:[#allocation2 + $0x168] sm:$0xff] %vm788, %v769
    %835 = vst.msk [vmem:[#allocation2 + $0x170] sm:$0xff] %vm788, %v770
    %836 = vst.msk [vmem:[#allocation2 + $0x178] sm:$0xff] %vm788, %v771
    %837 = vst.msk [vmem:[#allocation2 + $0x180] sm:$0xff] %vm788, %v772
    %838 = vst.msk [vmem:[#allocation2 + $0x188] sm:$0xff] %vm788, %v773
    %839 = vst.msk [vmem:[#allocation2 + $0x190] sm:$0xff] %vm788, %v774
    %840 = vst.msk [vmem:[#allocation2 + $0x198] sm:$0xff] %vm788, %v775
    %841 = vst.msk [vmem:[#allocation2 + $0x1a0] sm:$0xff] %vm788, %v776
    %842 = vst.msk [vmem:[#allocation2 + $0x1a8] sm:$0xff] %vm788, %v777
    %843 = vst.msk [vmem:[#allocation2 + $0x1b0] sm:$0xff] %vm788, %v778
    %844 = vst.msk [vmem:[#allocation2 + $0x1b8] sm:$0xff] %vm788, %v779
    %845 = vst.msk [vmem:[#allocation2 + $0x1c0] sm:$0xff] %vm788, %v780
    %846 = vst.msk [vmem:[#allocation2 + $0x1c8] sm:$0xff] %vm788, %v781
    %847 = vst.msk [vmem:[#allocation2 + $0x1d0] sm:$0xff] %vm788, %v782
    %848 = vst.msk [vmem:[#allocation2 + $0x1d8] sm:$0xff] %vm788, %v783
    %849 = vst.msk [vmem:[#allocation2 + $0x1e0] sm:$0xff] %vm788, %v784
    %850 = vst.msk [vmem:[#allocation2 + $0x1e8] sm:$0xff] %vm788, %v785
    %851 = vst.msk [vmem:[#allocation2 + $0x1f0] sm:$0xff] %vm788, %v786
    %852 = vst.msk [vmem:[#allocation2 + $0x1f8] sm:$0xff] %vm788, %v787
  $region33: #{bottleneck_forward.3} parent=0 // pred_fallthru
    _
  %v853 = vld [vmem:[#allocation2] sm:$0xff]
  %v854 = vld [vmem:[#allocation2 + $0x8] sm:$0xff]
  %v855 = vld [vmem:[#allocation2 + $0x10] sm:$0xff]
  %v856 = vld [vmem:[#allocation2 + $0x18] sm:$0xff]
  %v857 = vld [vmem:[#allocation2 + $0x20] sm:$0xff]
  %v858 = vld [vmem:[#allocation2 + $0x28] sm:$0xff]
  %v859 = vld [vmem:[#allocation2 + $0x30] sm:$0xff]
  %v860 = vld [vmem:[#allocation2 + $0x38] sm:$0xff]
  %v861 = vld [vmem:[#allocation2 + $0x40] sm:$0xff]
  %v862 = vld [vmem:[#allocation2 + $0x48] sm:$0xff]
  %v863 = vld [vmem:[#allocation2 + $0x50] sm:$0xff]
  %v864 = vld [vmem:[#allocation2 + $0x58] sm:$0xff]
  %v865 = vld [vmem:[#allocation2 + $0x60] sm:$0xff]
  %v866 = vld [vmem:[#allocation2 + $0x68] sm:$0xff]
  %v867 = vld [vmem:[#allocation2 + $0x70] sm:$0xff]
  %v868 = vld [vmem:[#allocation2 + $0x78] sm:$0xff]
  %v869 = vld [vmem:[#allocation2 + $0x80] sm:$0xff]
  %v870 = vld [vmem:[#allocation2 + $0x88] sm:$0xff]
  %v871 = vld [vmem:[#allocation2 + $0x90] sm:$0xff]
  %v872 = vld [vmem:[#allocation2 + $0x98] sm:$0xff]
  %v873 = vld [vmem:[#allocation2 + $0xa0] sm:$0xff]
  %v874 = vld [vmem:[#allocation2 + $0xa8] sm:$0xff]
  %v875 = vld [vmem:[#allocation2 + $0xb0] sm:$0xff]
  %v876 = vld [vmem:[#allocation2 + $0xb8] sm:$0xff]
  %v877 = vld [vmem:[#allocation2 + $0xc0] sm:$0xff]
  %v878 = vld [vmem:[#allocation2 + $0xc8] sm:$0xff]
  %v879 = vld [vmem:[#allocation2 + $0xd0] sm:$0xff]
  %v880 = vld [vmem:[#allocation2 + $0xd8] sm:$0xff]
  %v881 = vld [vmem:[#allocation2 + $0xe0] sm:$0xff]
  %v882 = vld [vmem:[#allocation2 + $0xe8] sm:$0xff]
  %v883 = vld [vmem:[#allocation2 + $0xf0] sm:$0xff]
  %v884 = vld [vmem:[#allocation2 + $0xf8] sm:$0xff]
  %v885 = vld [vmem:[#allocation2 + $0x100] sm:$0xff]
  %v886 = vld [vmem:[#allocation2 + $0x108] sm:$0xff]
  %v887 = vld [vmem:[#allocation2 + $0x110] sm:$0xff]
  %v888 = vld [vmem:[#allocation2 + $0x118] sm:$0xff]
  %v889 = vld [vmem:[#allocation2 + $0x120] sm:$0xff]
  %v890 = vld [vmem:[#allocation2 + $0x128] sm:$0xff]
  %v891 = vld [vmem:[#allocation2 + $0x130] sm:$0xff]
  %v892 = vld [vmem:[#allocation2 + $0x138] sm:$0xff]
  %v893 = vld [vmem:[#allocation2 + $0x140] sm:$0xff]
  %v894 = vld [vmem:[#allocation2 + $0x148] sm:$0xff]
  %v895 = vld [vmem:[#allocation2 + $0x150] sm:$0xff]
  %v896 = vld [vmem:[#allocation2 + $0x158] sm:$0xff]
  %v897 = vld [vmem:[#allocation2 + $0x160] sm:$0xff]
  %v898 = vld [vmem:[#allocation2 + $0x168] sm:$0xff]
  %v899 = vld [vmem:[#allocation2 + $0x170] sm:$0xff]
  %v900 = vld [vmem:[#allocation2 + $0x178] sm:$0xff]
  %v901 = vld [vmem:[#allocation2 + $0x180] sm:$0xff]
  %v902 = vld [vmem:[#allocation2 + $0x188] sm:$0xff]
  %v903 = vld [vmem:[#allocation2 + $0x190] sm:$0xff]
  %v904 = vld [vmem:[#allocation2 + $0x198] sm:$0xff]
  %v905 = vld [vmem:[#allocation2 + $0x1a0] sm:$0xff]
  %v906 = vld [vmem:[#allocation2 + $0x1a8] sm:$0xff]
  %v907 = vld [vmem:[#allocation2 + $0x1b0] sm:$0xff]
  %v908 = vld [vmem:[#allocation2 + $0x1b8] sm:$0xff]
  %v909 = vld [vmem:[#allocation2 + $0x1c0] sm:$0xff]
  %v910 = vld [vmem:[#allocation2 + $0x1c8] sm:$0xff]
  %v911 = vld [vmem:[#allocation2 + $0x1d0] sm:$0xff]
  %v912 = vld [vmem:[#allocation2 + $0x1d8] sm:$0xff]
  %v913 = vld [vmem:[#allocation2 + $0x1e0] sm:$0xff]
  %v914 = vld [vmem:[#allocation2 + $0x1e8] sm:$0xff]
  %v915 = vld [vmem:[#allocation2 + $0x1f0] sm:$0xff]
  %v916 = vld [vmem:[#allocation2 + $0x1f8] sm:$0xff]
  %v917 = vld [vmem:[%s2] sm:$0xf]
  %v918 = vld [vmem:[%s2 + $0x4] sm:$0xf]
  %v919 = vld [vmem:[%s2 + $0x8] sm:$0xf]
  %v920 = vld [vmem:[%s2 + $0xc] sm:$0xf]
  %v921 = vld [vmem:[%s2 + $0x10] sm:$0xf]
  %v922 = vld [vmem:[%s2 + $0x14] sm:$0xf]
  %v923 = vld [vmem:[%s2 + $0x18] sm:$0xf]
  %v924 = vld [vmem:[%s2 + $0x1c] sm:$0xf]
  %v925 = vld [vmem:[%s2 + $0x20] sm:$0xf]
  %v926 = vld [vmem:[%s2 + $0x24] sm:$0xf]
  %v927 = vld [vmem:[%s2 + $0x28] sm:$0xf]
  %v928 = vld [vmem:[%s2 + $0x2c] sm:$0xf]
  %v929 = vld [vmem:[%s2 + $0x30] sm:$0xf]
  %v930 = vld [vmem:[%s2 + $0x34] sm:$0xf]
  %v931 = vld [vmem:[%s2 + $0x38] sm:$0xf]
  %v932 = vld [vmem:[%s2 + $0x3c] sm:$0xf]
  %v933 = vld [vmem:[%s2 + $0x40] sm:$0xf]
  %v934 = vld [vmem:[%s2 + $0x44] sm:$0xf]
  %v935 = vld [vmem:[%s2 + $0x48] sm:$0xf]
  %v936 = vld [vmem:[%s2 + $0x4c] sm:$0xf]
  %v937 = vld [vmem:[%s2 + $0x50] sm:$0xf]
  %v938 = vld [vmem:[%s2 + $0x54] sm:$0xf]
  %v939 = vld [vmem:[%s2 + $0x58] sm:$0xf]
  %v940 = vld [vmem:[%s2 + $0x5c] sm:$0xf]
  %v941 = vld [vmem:[%s2 + $0x60] sm:$0xf]
  %v942 = vld [vmem:[%s2 + $0x64] sm:$0xf]
  %v943 = vld [vmem:[%s2 + $0x68] sm:$0xf]
  %v944 = vld [vmem:[%s2 + $0x6c] sm:$0xf]
  %v945 = vld [vmem:[%s2 + $0x70] sm:$0xf]
  %v946 = vld [vmem:[%s2 + $0x74] sm:$0xf]
  %v947 = vld [vmem:[%s2 + $0x78] sm:$0xf]
  %v948 = vld [vmem:[%s2 + $0x7c] sm:$0xf]
  %v949 = vld [vmem:[%s2 + $0x80] sm:$0xf]
  %v950 = vld [vmem:[%s2 + $0x84] sm:$0xf]
  %v951 = vld [vmem:[%s2 + $0x88] sm:$0xf]
  %v952 = vld [vmem:[%s2 + $0x8c] sm:$0xf]
  %v953 = vld [vmem:[%s2 + $0x90] sm:$0xf]
  %v954 = vld [vmem:[%s2 + $0x94] sm:$0xf]
  %v955 = vld [vmem:[%s2 + $0x98] sm:$0xf]
  %v956 = vld [vmem:[%s2 + $0x9c] sm:$0xf]
  %v957 = vld [vmem:[%s2 + $0xa0] sm:$0xf]
  %v958 = vld [vmem:[%s2 + $0xa4] sm:$0xf]
  %v959 = vld [vmem:[%s2 + $0xa8] sm:$0xf]
  %v960 = vld [vmem:[%s2 + $0xac] sm:$0xf]
  %v961 = vld [vmem:[%s2 + $0xb0] sm:$0xf]
  %v962 = vld [vmem:[%s2 + $0xb4] sm:$0xf]
  %v963 = vld [vmem:[%s2 + $0xb8] sm:$0xf]
  %v964 = vld [vmem:[%s2 + $0xbc] sm:$0xf]
  %v965 = vld [vmem:[%s2 + $0xc0] sm:$0xf]
  %v966 = vld [vmem:[%s2 + $0xc4] sm:$0xf]
  %v967 = vld [vmem:[%s2 + $0xc8] sm:$0xf]
  %v968 = vld [vmem:[%s2 + $0xcc] sm:$0xf]
  %v969 = vld [vmem:[%s2 + $0xd0] sm:$0xf]
  %v970 = vld [vmem:[%s2 + $0xd4] sm:$0xf]
  %v971 = vld [vmem:[%s2 + $0xd8] sm:$0xf]
  %v972 = vld [vmem:[%s2 + $0xdc] sm:$0xf]
  %v973 = vld [vmem:[%s2 + $0xe0] sm:$0xf]
  %v974 = vld [vmem:[%s2 + $0xe4] sm:$0xf]
  %v975 = vld [vmem:[%s2 + $0xe8] sm:$0xf]
  %v976 = vld [vmem:[%s2 + $0xec] sm:$0xf]
  %v977 = vld [vmem:[%s2 + $0xf0] sm:$0xf]
  %v978 = vld [vmem:[%s2 + $0xf4] sm:$0xf]
  %v979 = vld [vmem:[%s2 + $0xf8] sm:$0xf]
  %v980 = vld [vmem:[%s2 + $0xfc] sm:$0xf]
  %v981 = vld [vmem:[%s3] sm:$0x3]
  %v1046 = vunpack.c.l.b16 %v917
  %v1047 = vunpack.c.l.b16 %v918
  %v1048 = vunpack.c.l.b16 %v919
  %v1049 = vunpack.c.l.b16 %v920
  %v1050 = vunpack.c.l.b16 %v921
  %v1051 = vunpack.c.l.b16 %v922
  %v1052 = vunpack.c.l.b16 %v923
  %v1053 = vunpack.c.l.b16 %v924
  %v1054 = vunpack.c.l.b16 %v925
  %v1055 = vunpack.c.l.b16 %v926
  %v1056 = vunpack.c.l.b16 %v927
  %v1057 = vunpack.c.l.b16 %v928
  %v1058 = vunpack.c.l.b16 %v929
  %v1059 = vunpack.c.l.b16 %v930
  %v1060 = vunpack.c.l.b16 %v931
  %v1061 = vunpack.c.l.b16 %v932
  %v1062 = vunpack.c.l.b16 %v933
  %v1063 = vunpack.c.l.b16 %v934
  %v1064 = vunpack.c.l.b16 %v935
  %v1065 = vunpack.c.l.b16 %v936
  %v1066 = vunpack.c.l.b16 %v937
  %v1067 = vunpack.c.l.b16 %v938
  %v1068 = vunpack.c.l.b16 %v939
  %v1069 = vunpack.c.l.b16 %v940
  %v1070 = vunpack.c.l.b16 %v941
  %v1071 = vunpack.c.l.b16 %v942
  %v1072 = vunpack.c.l.b16 %v943
  %v1073 = vunpack.c.l.b16 %v944
  %v1074 = vunpack.c.l.b16 %v945
  %v1075 = vunpack.c.l.b16 %v946
  %v1076 = vunpack.c.l.b16 %v947
  %v1077 = vunpack.c.l.b16 %v948
  %v1078 = vunpack.c.l.b16 %v949
  %v1079 = vunpack.c.l.b16 %v950
  %v1080 = vunpack.c.l.b16 %v951
  %v1081 = vunpack.c.l.b16 %v952
  %v1082 = vunpack.c.l.b16 %v953
  %v1083 = vunpack.c.l.b16 %v954
  %v1084 = vunpack.c.l.b16 %v955
  %v1085 = vunpack.c.l.b16 %v956
  %v1086 = vunpack.c.l.b16 %v957
  %v1087 = vunpack.c.l.b16 %v958
  %v1088 = vunpack.c.l.b16 %v959
  %v1089 = vunpack.c.l.b16 %v960
  %v1090 = vunpack.c.l.b16 %v961
  %v1091 = vunpack.c.l.b16 %v962
  %v1092 = vunpack.c.l.b16 %v963
  %v1093 = vunpack.c.l.b16 %v964
  %v1094 = vunpack.c.l.b16 %v965
  %v1095 = vunpack.c.l.b16 %v966
  %v1096 = vunpack.c.l.b16 %v967
  %v1097 = vunpack.c.l.b16 %v968
  %v1098 = vunpack.c.l.b16 %v969
  %v1099 = vunpack.c.l.b16 %v970
  %v1100 = vunpack.c.l.b16 %v971
  %v1101 = vunpack.c.l.b16 %v972
  %v1102 = vunpack.c.l.b16 %v973
  %v1103 = vunpack.c.l.b16 %v974
  %v1104 = vunpack.c.l.b16 %v975
  %v1105 = vunpack.c.l.b16 %v976
  %v1106 = vunpack.c.l.b16 %v977
  %v1107 = vunpack.c.l.b16 %v978
  %v1108 = vunpack.c.l.b16 %v979
  %v1109 = vunpack.c.l.b16 %v980
  %v1110 = vpack.c.b16 %v1047, %v1046
  %v1111 = vpack.c.b16 %v1049, %v1048
  %v1112 = vpack.c.b16 %v1051, %v1050
  %v1113 = vpack.c.b16 %v1053, %v1052
  %v1114 = vpack.c.b16 %v1055, %v1054
  %v1115 = vpack.c.b16 %v1057, %v1056
  %v1116 = vpack.c.b16 %v1059, %v1058
  %v1117 = vpack.c.b16 %v1061, %v1060
  %v1118 = vpack.c.b16 %v1063, %v1062
  %v1119 = vpack.c.b16 %v1065, %v1064
  %v1120 = vpack.c.b16 %v1067, %v1066
  %v1121 = vpack.c.b16 %v1069, %v1068
  %v1122 = vpack.c.b16 %v1071, %v1070
  %v1123 = vpack.c.b16 %v1073, %v1072
  %v1124 = vpack.c.b16 %v1075, %v1074
  %v1125 = vpack.c.b16 %v1077, %v1076
  %v1126 = vpack.c.b16 %v1079, %v1078
  %v1127 = vpack.c.b16 %v1081, %v1080
  %v1128 = vpack.c.b16 %v1083, %v1082
  %v1129 = vpack.c.b16 %v1085, %v1084
  %v1130 = vpack.c.b16 %v1087, %v1086
  %v1131 = vpack.c.b16 %v1089, %v1088
  %v1132 = vpack.c.b16 %v1091, %v1090
  %v1133 = vpack.c.b16 %v1093, %v1092
  %v1134 = vpack.c.b16 %v1095, %v1094
  %v1135 = vpack.c.b16 %v1097, %v1096
  %v1136 = vpack.c.b16 %v1099, %v1098
  %v1137 = vpack.c.b16 %v1101, %v1100
  %v1138 = vpack.c.b16 %v1103, %v1102
  %v1139 = vpack.c.b16 %v1105, %v1104
  %v1140 = vpack.c.b16 %v1107, %v1106
  %v1141 = vpack.c.b16 %v1109, %v1108
  %vm1142 = vcmask 31744
  %v1144 = vsel %vm1142, %v1110, 0
  %v1147 = vsel %vm1142, %v1111, 0
  %v1150 = vsel %vm1142, %v1112, 0
  %v1153 = vsel %vm1142, %v1113, 0
  %v1156 = vsel %vm1142, %v1114, 0
  %v1159 = vsel %vm1142, %v1115, 0
  %v1162 = vsel %vm1142, %v1116, 0
  %v1165 = vsel %vm1142, %v1117, 0
  %v1168 = vsel %vm1142, %v1118, 0
  %v1171 = vsel %vm1142, %v1119, 0
  %v1174 = vsel %vm1142, %v1120, 0
  %v1177 = vsel %vm1142, %v1121, 0
  %v1180 = vsel %vm1142, %v1122, 0
  %v1183 = vsel %vm1142, %v1123, 0
  %v1186 = vsel %vm1142, %v1124, 0
  %v1189 = vsel %vm1142, %v1125, 0
  %v1192 = vsel %vm1142, %v1126, 0
  %v1195 = vsel %vm1142, %v1127, 0
  %v1198 = vsel %vm1142, %v1128, 0
  %v1201 = vsel %vm1142, %v1129, 0
  %v1204 = vsel %vm1142, %v1130, 0
  %v1207 = vsel %vm1142, %v1131, 0
  %v1210 = vsel %vm1142, %v1132, 0
  %v1213 = vsel %vm1142, %v1133, 0
  %v1216 = vsel %vm1142, %v1134, 0
  %v1219 = vsel %vm1142, %v1135, 0
  %v1222 = vsel %vm1142, %v1136, 0
  %v1225 = vsel %vm1142, %v1137, 0
  %v1228 = vsel %vm1142, %v1138, 0
  %v1231 = vsel %vm1142, %v1139, 0
  %v1234 = vsel %vm1142, %v1140, 0
  %v1237 = vsel %vm1142, %v1141, 0
  %vm1239 = vcmask 1041408
  %v1241 = vsel %vm1239, %v981, 0
  %1243 = vmatprep.subr.bf16.mxu0 0
  %1244 = vmatpush1.bf16.msra.mxu0 %v1241
  %1245 = vmatprep.subr.bf16.mxu0 0
  %1246 = vmatpush1.bf16.msra.mxu0 0
  %1247 = vmatprep.subr.bf16.mxu0 0
  %1248 = vmatpush1.bf16.msra.mxu0 0
  %1249 = vmatprep.subr.bf16.mxu0 0
  %1250 = vmatpush1.bf16.msra.mxu0 0
  %1251 = vmatprep.subr.bf16.mxu0 0
  %1252 = vmatpush1.bf16.msra.mxu0 0
  %1253 = vmatprep.subr.bf16.mxu0 0
  %1254 = vmatpush1.bf16.msra.mxu0 0
  %1255 = vmatprep.subr.bf16.mxu0 0
  %1256 = vmatpush1.bf16.msra.mxu0 0
  %1257 = vmatprep.subr.bf16.mxu0 0
  %1258 = vmatpush1.bf16.msra.mxu0 0
  %1259 = vmatprep.subr.bf16.mxu0 0
  %1260 = vmatpush1.bf16.msra.mxu0 0
  %1261 = vmatprep.subr.bf16.mxu0 0
  %1262 = vmatpush1.bf16.msra.mxu0 0
  %1263 = vmatprep.subr.bf16.mxu0 0
  %1264 = vmatpush1.bf16.msra.mxu0 0
  %1265 = vmatprep.subr.bf16.mxu0 0
  %1266 = vmatpush1.bf16.msra.mxu0 0
  %1267 = vmatprep.subr.bf16.mxu0 0
  %1268 = vmatpush1.bf16.msra.mxu0 0
  %1269 = vmatprep.subr.bf16.mxu0 0
  %1270 = vmatpush1.bf16.msra.mxu0 0
  %1271 = vmatprep.subr.bf16.mxu0 0
  %1272 = vmatpush1.bf16.msra.mxu0 0
  %1273 = vmatprep.subr.bf16.mxu0 0
  %1274 = vmatpush1.bf16.msra.mxu0 0
  %1275 = vmatprep.mubr.bf16.mxu0 0
  %1276 = vmatmul.mubr.bf16.gmra.mrb[0].mxu0 %v1144
  %v1277 = vpop.f32.mrb[0].mxu0
  %v1278 = vadd.f32 0.0, %v1277
  %v1279 = vpop.f32.mrb[0].mxu0
  %v1280 = vpop.f32.mrb[0].mxu0
  %v1281 = vadd.f32 0.0, %v1280
  %v1282 = vpop.f32.mrb[0].mxu0
  %1283 = vmatprep.mubr.bf16.mxu0 0
  %1284 = vmatmul.mubr.bf16.gmra.mrb[0].mxu0 %v1147
  %v1285 = vpop.f32.mrb[0].mxu0
  %v1286 = vadd.f32 0.0, %v1285
  %v1287 = vpop.f32.mrb[0].mxu0
  %v1288 = vpop.f32.mrb[0].mxu0
  %v1289 = vadd.f32 0.0, %v1288
  %v1290 = vpop.f32.mrb[0].mxu0
  %1291 = vmatprep.mubr.bf16.mxu0 0
  %1292 = vmatmul.mubr.bf16.gmra.mrb[0].mxu0 %v1150
  %v1293 = vpop.f32.mrb[0].mxu0
  %v1294 = vadd.f32 0.0, %v1293
  %v1295 = vpop.f32.mrb[0].mxu0
  %v1296 = vpop.f32.mrb[0].mxu0
  %v1297 = vadd.f32 0.0, %v1296
  %v1298 = vpop.f32.mrb[0].mxu0
  %1299 = vmatprep.mubr.bf16.mxu0 0
  %1300 = vmatmul.mubr.bf16.gmra.mrb[0].mxu0 %v1153
  %v1301 = vpop.f32.mrb[0].mxu0
  %v1302 = vadd.f32 0.0, %v1301
  %v1303 = vpop.f32.mrb[0].mxu0
  %v1304 = vpop.f32.mrb[0].mxu0
  %v1305 = vadd.f32 0.0, %v1304
  %v1306 = vpop.f32.mrb[0].mxu0
  %1307 = vmatprep.mubr.bf16.mxu0 0
  %1308 = vmatmul.mubr.bf16.gmra.mrb[0].mxu0 %v1156
  %v1309 = vpop.f32.mrb[0].mxu0
  %v1310 = vadd.f32 0.0, %v1309
  %v1311 = vpop.f32.mrb[0].mxu0
  %v1312 = vpop.f32.mrb[0].mxu0
  %v1313 = vadd.f32 0.0, %v1312
  %v1314 = vpop.f32.mrb[0].mxu0
  %1315 = vmatprep.mubr.bf16.mxu0 0
  %1316 = vmatmul.mubr.bf16.gmra.mrb[0].mxu0 %v1159
  %v1317 = vpop.f32.mrb[0].mxu0
  %v1318 = vadd.f32 0.0, %v1317
  %v1319 = vpop.f32.mrb[0].mxu0
  %v1320 = vpop.f32.mrb[0].mxu0
  %v1321 = vadd.f32 0.0, %v1320
  %v1322 = vpop.f32.mrb[0].mxu0
  %1323 = vmatprep.mubr.bf16.mxu0 0
  %1324 = vmatmul.mubr.bf16.gmra.mrb[0].mxu0 %v1162
  %v1325 = vpop.f32.mrb[0].mxu0
  %v1326 = vadd.f32 0.0, %v1325
  %v1327 = vpop.f32.mrb[0].mxu0
  %v1328 = vpop.f32.mrb[0].mxu0
  %v1329 = vadd.f32 0.0, %v1328
  %v1330 = vpop.f32.mrb[0].mxu0
  %1331 = vmatprep.mubr.bf16.mxu0 0
  %1332 = vmatmul.mubr.bf16.gmra.mrb[0].mxu0 %v1165
  %v1333 = vpop.f32.mrb[0].mxu0
  %v1334 = vadd.f32 0.0, %v1333
  %v1335 = vpop.f32.mrb[0].mxu0
  %v1336 = vpop.f32.mrb[0].mxu0
  %v1337 = vadd.f32 0.0, %v1336
  %v1338 = vpop.f32.mrb[0].mxu0
  %1339 = vmatprep.mubr.bf16.mxu0 0
  %1340 = vmatmul.mubr.bf16.gmra.mrb[0].mxu0 %v1168
  %v1341 = vpop.f32.mrb[0].mxu0
  %v1342 = vadd.f32 0.0, %v1341
  %v1343 = vpop.f32.mrb[0].mxu0
  %v1344 = vpop.f32.mrb[0].mxu0
  %v1345 = vadd.f32 0.0, %v1344
  %v1346 = vpop.f32.mrb[0].mxu0
  %1347 = vmatprep.mubr.bf16.mxu0 0
  %1348 = vmatmul.mubr.bf16.gmra.mrb[0].mxu0 %v1171
  %v1349 = vpop.f32.mrb[0].mxu0
  %v1350 = vadd.f32 0.0, %v1349
  %v1351 = vpop.f32.mrb[0].mxu0
  %v1352 = vpop.f32.mrb[0].mxu0
  %v1353 = vadd.f32 0.0, %v1352
  %v1354 = vpop.f32.mrb[0].mxu0
  %1355 = vmatprep.mubr.bf16.mxu0 0
  %1356 = vmatmul.mubr.bf16.gmra.mrb[0].mxu0 %v1174
  %v1357 = vpop.f32.mrb[0].mxu0
  %v1358 = vadd.f32 0.0, %v1357
  %v1359 = vpop.f32.mrb[0].mxu0
  %v1360 = vpop.f32.mrb[0].mxu0
  %v1361 = vadd.f32 0.0, %v1360
  %v1362 = vpop.f32.mrb[0].mxu0
  %1363 = vmatprep.mubr.bf16.mxu0 0
  %1364 = vmatmul.mubr.bf16.gmra.mrb[0].mxu0 %v1177
  %v1365 = vpop.f32.mrb[0].mxu0
  %v1366 = vadd.f32 0.0, %v1365
  %v1367 = vpop.f32.mrb[0].mxu0
  %v1368 = vpop.f32.mrb[0].mxu0
  %v1369 = vadd.f32 0.0, %v1368
  %v1370 = vpop.f32.mrb[0].mxu0
  %1371 = vmatprep.mubr.bf16.mxu0 0
  %1372 = vmatmul.mubr.bf16.gmra.mrb[0].mxu0 %v1180
  %v1373 = vpop.f32.mrb[0].mxu0
  %v1374 = vadd.f32 0.0, %v1373
  %v1375 = vpop.f32.mrb[0].mxu0
  %v1376 = vpop.f32.mrb[0].mxu0
  %v1377 = vadd.f32 0.0, %v1376
  %v1378 = vpop.f32.mrb[0].mxu0
  %1379 = vmatprep.mubr.bf16.mxu0 0
  %1380 = vmatmul.mubr.bf16.gmra.mrb[0].mxu0 %v1183
  %v1381 = vpop.f32.mrb[0].mxu0
  %v1382 = vadd.f32 0.0, %v1381
  %v1383 = vpop.f32.mrb[0].mxu0
  %v1384 = vpop.f32.mrb[0].mxu0
  %v1385 = vadd.f32 0.0, %v1384
  %v1386 = vpop.f32.mrb[0].mxu0
  %1387 = vmatprep.mubr.bf16.mxu0 0
  %1388 = vmatmul.mubr.bf16.gmra.mrb[0].mxu0 %v1186
  %v1389 = vpop.f32.mrb[0].mxu0
  %v1390 = vadd.f32 0.0, %v1389
  %v1391 = vpop.f32.mrb[0].mxu0
  %v1392 = vpop.f32.mrb[0].mxu0
  %v1393 = vadd.f32 0.0, %v1392
  %v1394 = vpop.f32.mrb[0].mxu0
  %1395 = vmatprep.mubr.bf16.mxu0 0
  %1396 = vmatmul.mubr.bf16.gmra.mrb[0].mxu0 %v1189
  %v1397 = vpop.f32.mrb[0].mxu0
  %v1398 = vadd.f32 0.0, %v1397
  %v1399 = vpop.f32.mrb[0].mxu0
  %v1400 = vpop.f32.mrb[0].mxu0
  %v1401 = vadd.f32 0.0, %v1400
  %v1402 = vpop.f32.mrb[0].mxu0
  %1403 = vmatprep.mubr.bf16.mxu0 0
  %1404 = vmatmul.mubr.bf16.gmra.mrb[0].mxu0 %v1192
  %v1405 = vpop.f32.mrb[0].mxu0
  %v1406 = vadd.f32 0.0, %v1405
  %v1407 = vpop.f32.mrb[0].mxu0
  %v1408 = vpop.f32.mrb[0].mxu0
  %v1409 = vadd.f32 0.0, %v1408
  %v1410 = vpop.f32.mrb[0].mxu0
  %1411 = vmatprep.mubr.bf16.mxu0 0
  %1412 = vmatmul.mubr.bf16.gmra.mrb[0].mxu0 %v1195
  %v1413 = vpop.f32.mrb[0].mxu0
  %v1414 = vadd.f32 0.0, %v1413
  %v1415 = vpop.f32.mrb[0].mxu0
  %v1416 = vpop.f32.mrb[0].mxu0
  %v1417 = vadd.f32 0.0, %v1416
  %v1418 = vpop.f32.mrb[0].mxu0
  %1419 = vmatprep.mubr.bf16.mxu0 0
  %1420 = vmatmul.mubr.bf16.gmra.mrb[0].mxu0 %v1198
  %v1421 = vpop.f32.mrb[0].mxu0
  %v1422 = vadd.f32 0.0, %v1421
  %v1423 = vpop.f32.mrb[0].mxu0
  %v1424 = vpop.f32.mrb[0].mxu0
  %v1425 = vadd.f32 0.0, %v1424
  %v1426 = vpop.f32.mrb[0].mxu0
  %1427 = vmatprep.mubr.bf16.mxu0 0
  %1428 = vmatmul.mubr.bf16.gmra.mrb[0].mxu0 %v1201
  %v1429 = vpop.f32.mrb[0].mxu0
  %v1430 = vadd.f32 0.0, %v1429
  %v1431 = vpop.f32.mrb[0].mxu0
  %v1432 = vpop.f32.mrb[0].mxu0
  %v1433 = vadd.f32 0.0, %v1432
  %v1434 = vpop.f32.mrb[0].mxu0
  %1435 = vmatprep.mubr.bf16.mxu0 0
  %1436 = vmatmul.mubr.bf16.gmra.mrb[0].mxu0 %v1204
  %v1437 = vpop.f32.mrb[0].mxu0
  %v1438 = vadd.f32 0.0, %v1437
  %v1439 = vpop.f32.mrb[0].mxu0
  %v1440 = vpop.f32.mrb[0].mxu0
  %v1441 = vadd.f32 0.0, %v1440
  %v1442 = vpop.f32.mrb[0].mxu0
  %1443 = vmatprep.mubr.bf16.mxu0 0
  %1444 = vmatmul.mubr.bf16.gmra.mrb[0].mxu0 %v1207
  %v1445 = vpop.f32.mrb[0].mxu0
  %v1446 = vadd.f32 0.0, %v1445
  %v1447 = vpop.f32.mrb[0].mxu0
  %v1448 = vpop.f32.mrb[0].mxu0
  %v1449 = vadd.f32 0.0, %v1448
  %v1450 = vpop.f32.mrb[0].mxu0
  %1451 = vmatprep.mubr.bf16.mxu0 0
  %1452 = vmatmul.mubr.bf16.gmra.mrb[0].mxu0 %v1210
  %v1453 = vpop.f32.mrb[0].mxu0
  %v1454 = vadd.f32 0.0, %v1453
  %v1455 = vpop.f32.mrb[0].mxu0
  %v1456 = vpop.f32.mrb[0].mxu0
  %v1457 = vadd.f32 0.0, %v1456
  %v1458 = vpop.f32.mrb[0].mxu0
  %1459 = vmatprep.mubr.bf16.mxu0 0
  %1460 = vmatmul.mubr.bf16.gmra.mrb[0].mxu0 %v1213
  %v1461 = vpop.f32.mrb[0].mxu0
  %v1462 = vadd.f32 0.0, %v1461
  %v1463 = vpop.f32.mrb[0].mxu0
  %v1464 = vpop.f32.mrb[0].mxu0
  %v1465 = vadd.f32 0.0, %v1464
  %v1466 = vpop.f32.mrb[0].mxu0
  %1467 = vmatprep.mubr.bf16.mxu0 0
  %1468 = vmatmul.mubr.bf16.gmra.mrb[0].mxu0 %v1216
  %v1469 = vpop.f32.mrb[0].mxu0
  %v1470 = vadd.f32 0.0, %v1469
  %v1471 = vpop.f32.mrb[0].mxu0
  %v1472 = vpop.f32.mrb[0].mxu0
  %v1473 = vadd.f32 0.0, %v1472
  %v1474 = vpop.f32.mrb[0].mxu0
  %1475 = vmatprep.mubr.bf16.mxu0 0
  %1476 = vmatmul.mubr.bf16.gmra.mrb[0].mxu0 %v1219
  %v1477 = vpop.f32.mrb[0].mxu0
  %v1478 = vadd.f32 0.0, %v1477
  %v1479 = vpop.f32.mrb[0].mxu0
  %v1480 = vpop.f32.mrb[0].mxu0
  %v1481 = vadd.f32 0.0, %v1480
  %v1482 = vpop.f32.mrb[0].mxu0
  %1483 = vmatprep.mubr.bf16.mxu0 0
  %1484 = vmatmul.mubr.bf16.gmra.mrb[0].mxu0 %v1222
  %v1485 = vpop.f32.mrb[0].mxu0
  %v1486 = vadd.f32 0.0, %v1485
  %v1487 = vpop.f32.mrb[0].mxu0
  %v1488 = vpop.f32.mrb[0].mxu0
  %v1489 = vadd.f32 0.0, %v1488
  %v1490 = vpop.f32.mrb[0].mxu0
  %1491 = vmatprep.mubr.bf16.mxu0 0
  %1492 = vmatmul.mubr.bf16.gmra.mrb[0].mxu0 %v1225
  %v1493 = vpop.f32.mrb[0].mxu0
  %v1494 = vadd.f32 0.0, %v1493
  %v1495 = vpop.f32.mrb[0].mxu0
  %v1496 = vpop.f32.mrb[0].mxu0
  %v1497 = vadd.f32 0.0, %v1496
  %v1498 = vpop.f32.mrb[0].mxu0
  %1499 = vmatprep.mubr.bf16.mxu0 0
  %1500 = vmatmul.mubr.bf16.gmra.mrb[0].mxu0 %v1228
  %v1501 = vpop.f32.mrb[0].mxu0
  %v1502 = vadd.f32 0.0, %v1501
  %v1503 = vpop.f32.mrb[0].mxu0
  %v1504 = vpop.f32.mrb[0].mxu0
  %v1505 = vadd.f32 0.0, %v1504
  %v1506 = vpop.f32.mrb[0].mxu0
  %1507 = vmatprep.mubr.bf16.mxu0 0
  %1508 = vmatmul.mubr.bf16.gmra.mrb[0].mxu0 %v1231
  %v1509 = vpop.f32.mrb[0].mxu0
  %v1510 = vadd.f32 0.0, %v1509
  %v1511 = vpop.f32.mrb[0].mxu0
  %v1512 = vpop.f32.mrb[0].mxu0
  %v1513 = vadd.f32 0.0, %v1512
  %v1514 = vpop.f32.mrb[0].mxu0
  %1515 = vmatprep.mubr.bf16.mxu0 0
  %1516 = vmatmul.mubr.bf16.gmra.mrb[0].mxu0 %v1234
  %v1517 = vpop.f32.mrb[0].mxu0
  %v1518 = vadd.f32 0.0, %v1517
  %v1519 = vpop.f32.mrb[0].mxu0
  %v1520 = vpop.f32.mrb[0].mxu0
  %v1521 = vadd.f32 0.0, %v1520
  %v1522 = vpop.f32.mrb[0].mxu0
  %1523 = vmatprep.mubr.bf16.mxu0 0
  %1524 = vmatmul.mubr.bf16.gmra.mrb[0].mxu0 %v1237
  %v1525 = vpop.f32.mrb[0].mxu0
  %v1526 = vadd.f32 0.0, %v1525
  %v1527 = vpop.f32.mrb[0].mxu0
  %v1528 = vpop.f32.mrb[0].mxu0
  %v1529 = vadd.f32 0.0, %v1528
  %v1530 = vpop.f32.mrb[0].mxu0
  %1531 = vdwg.mxu0
  %v1532 = vld [vmem:[%s5] sm:$0x1]
  %v1534 = vlaneseq
  %v1535 = vshrl.u32 %v1534, 7
  %v1536 = vsub.s32 0, %v1535
  %v1537 = vrot.slane %v1532, %v1536
  %v1539 = vmul.f32 %v1278, %v1537
  %v1540 = vmul.f32 %v1281, %v1537
  %v1541 = vmul.f32 %v1286, %v1537
  %v1542 = vmul.f32 %v1289, %v1537
  %v1543 = vmul.f32 %v1294, %v1537
  %v1544 = vmul.f32 %v1297, %v1537
  %v1545 = vmul.f32 %v1302, %v1537
  %v1546 = vmul.f32 %v1305, %v1537
  %v1547 = vmul.f32 %v1310, %v1537
  %v1548 = vmul.f32 %v1313, %v1537
  %v1549 = vmul.f32 %v1318, %v1537
  %v1550 = vmul.f32 %v1321, %v1537
  %v1551 = vmul.f32 %v1326, %v1537
  %v1552 = vmul.f32 %v1329, %v1537
  %v1553 = vmul.f32 %v1334, %v1537
  %v1554 = vmul.f32 %v1337, %v1537
  %v1555 = vmul.f32 %v1342, %v1537
  %v1556 = vmul.f32 %v1345, %v1537
  %v1557 = vmul.f32 %v1350, %v1537
  %v1558 = vmul.f32 %v1353, %v1537
  %v1559 = vmul.f32 %v1358, %v1537
  %v1560 = vmul.f32 %v1361, %v1537
  %v1561 = vmul.f32 %v1366, %v1537
  %v1562 = vmul.f32 %v1369, %v1537
  %v1563 = vmul.f32 %v1374, %v1537
  %v1564 = vmul.f32 %v1377, %v1537
  %v1565 = vmul.f32 %v1382, %v1537
  %v1566 = vmul.f32 %v1385, %v1537
  %v1567 = vmul.f32 %v1390, %v1537
  %v1568 = vmul.f32 %v1393, %v1537
  %v1569 = vmul.f32 %v1398, %v1537
  %v1570 = vmul.f32 %v1401, %v1537
  %v1571 = vmul.f32 %v1406, %v1537
  %v1572 = vmul.f32 %v1409, %v1537
  %v1573 = vmul.f32 %v1414, %v1537
  %v1574 = vmul.f32 %v1417, %v1537
  %v1575 = vmul.f32 %v1422, %v1537
  %v1576 = vmul.f32 %v1425, %v1537
  %v1577 = vmul.f32 %v1430, %v1537
  %v1578 = vmul.f32 %v1433, %v1537
  %v1579 = vmul.f32 %v1438, %v1537
  %v1580 = vmul.f32 %v1441, %v1537
  %v1581 = vmul.f32 %v1446, %v1537
  %v1582 = vmul.f32 %v1449, %v1537
  %v1583 = vmul.f32 %v1454, %v1537
  %v1584 = vmul.f32 %v1457, %v1537
  %v1585 = vmul.f32 %v1462, %v1537
  %v1586 = vmul.f32 %v1465, %v1537
  %v1587 = vmul.f32 %v1470, %v1537
  %v1588 = vmul.f32 %v1473, %v1537
  %v1589 = vmul.f32 %v1478, %v1537
  %v1590 = vmul.f32 %v1481, %v1537
  %v1591 = vmul.f32 %v1486, %v1537
  %v1592 = vmul.f32 %v1489, %v1537
  %v1593 = vmul.f32 %v1494, %v1537
  %v1594 = vmul.f32 %v1497, %v1537
  %v1595 = vmul.f32 %v1502, %v1537
  %v1596 = vmul.f32 %v1505, %v1537
  %v1597 = vmul.f32 %v1510, %v1537
  %v1598 = vmul.f32 %v1513, %v1537
  %v1599 = vmul.f32 %v1518, %v1537
  %v1600 = vmul.f32 %v1521, %v1537
  %v1601 = vmul.f32 %v1526, %v1537
  %v1602 = vmul.f32 %v1529, %v1537
  %v1603 = vadd.f32 %v853, %v1539
  %v1604 = vadd.f32 %v854, %v1540
  %v1605 = vadd.f32 %v855, %v1541
  %v1606 = vadd.f32 %v856, %v1542
  %v1607 = vadd.f32 %v857, %v1543
  %v1608 = vadd.f32 %v858, %v1544
  %v1609 = vadd.f32 %v859, %v1545
  %v1610 = vadd.f32 %v860, %v1546
  %v1611 = vadd.f32 %v861, %v1547
  %v1612 = vadd.f32 %v862, %v1548
  %v1613 = vadd.f32 %v863, %v1549
  %v1614 = vadd.f32 %v864, %v1550
  %v1615 = vadd.f32 %v865, %v1551
  %v1616 = vadd.f32 %v866, %v1552
  %v1617 = vadd.f32 %v867, %v1553
  %v1618 = vadd.f32 %v868, %v1554
  %v1619 = vadd.f32 %v869, %v1555
  %v1620 = vadd.f32 %v870, %v1556
  %v1621 = vadd.f32 %v871, %v1557
  %v1622 = vadd.f32 %v872, %v1558
  %v1623 = vadd.f32 %v873, %v1559
  %v1624 = vadd.f32 %v874, %v1560
  %v1625 = vadd.f32 %v875, %v1561
  %v1626 = vadd.f32 %v876, %v1562
  %v1627 = vadd.f32 %v877, %v1563
  %v1628 = vadd.f32 %v878, %v1564
  %v1629 = vadd.f32 %v879, %v1565
  %v1630 = vadd.f32 %v880, %v1566
  %v1631 = vadd.f32 %v881, %v1567
  %v1632 = vadd.f32 %v882, %v1568
  %v1633 = vadd.f32 %v883, %v1569
  %v1634 = vadd.f32 %v884, %v1570
  %v1635 = vadd.f32 %v885, %v1571
  %v1636 = vadd.f32 %v886, %v1572
  %v1637 = vadd.f32 %v887, %v1573
  %v1638 = vadd.f32 %v888, %v1574
  %v1639 = vadd.f32 %v889, %v1575
  %v1640 = vadd.f32 %v890, %v1576
  %v1641 = vadd.f32 %v891, %v1577
  %v1642 = vadd.f32 %v892, %v1578
  %v1643 = vadd.f32 %v893, %v1579
  %v1644 = vadd.f32 %v894, %v1580
  %v1645 = vadd.f32 %v895, %v1581
  %v1646 = vadd.f32 %v896, %v1582
  %v1647 = vadd.f32 %v897, %v1583
  %v1648 = vadd.f32 %v898, %v1584
  %v1649 = vadd.f32 %v899, %v1585
  %v1650 = vadd.f32 %v900, %v1586
  %v1651 = vadd.f32 %v901, %v1587
  %v1652 = vadd.f32 %v902, %v1588
  %v1653 = vadd.f32 %v903, %v1589
  %v1654 = vadd.f32 %v904, %v1590
  %v1655 = vadd.f32 %v905, %v1591
  %v1656 = vadd.f32 %v906, %v1592
  %v1657 = vadd.f32 %v907, %v1593
  %v1658 = vadd.f32 %v908, %v1594
  %v1659 = vadd.f32 %v909, %v1595
  %v1660 = vadd.f32 %v910, %v1596
  %v1661 = vadd.f32 %v911, %v1597
  %v1662 = vadd.f32 %v912, %v1598
  %v1663 = vadd.f32 %v913, %v1599
  %v1664 = vadd.f32 %v914, %v1600
  %v1665 = vadd.f32 %v915, %v1601
  %v1666 = vadd.f32 %v916, %v1602
  %vm1667 = vcmask 130048
  %1668 = vst.msk [vmem:[#allocation2] sm:$0xff] %vm1667, %v1603
  %1669 = vst.msk [vmem:[#allocation2 + $0x8] sm:$0xff] %vm1667, %v1604
  %1670 = vst.msk [vmem:[#allocation2 + $0x10] sm:$0xff] %vm1667, %v1605
  %1671 = vst.msk [vmem:[#allocation2 + $0x18] sm:$0xff] %vm1667, %v1606
  %1672 = vst.msk [vmem:[#allocation2 + $0x20] sm:$0xff] %vm1667, %v1607
  %1673 = vst.msk [vmem:[#allocation2 + $0x28] sm:$0xff] %vm1667, %v1608
  %1674 = vst.msk [vmem:[#allocation2 + $0x30] sm:$0xff] %vm1667, %v1609
  %1675 = vst.msk [vmem:[#allocation2 + $0x38] sm:$0xff] %vm1667, %v1610
  %1676 = vst.msk [vmem:[#allocation2 + $0x40] sm:$0xff] %vm1667, %v1611
  %1677 = vst.msk [vmem:[#allocation2 + $0x48] sm:$0xff] %vm1667, %v1612
  %1678 = vst.msk [vmem:[#allocation2 + $0x50] sm:$0xff] %vm1667, %v1613
  %1679 = vst.msk [vmem:[#allocation2 + $0x58] sm:$0xff] %vm1667, %v1614
  %1680 = vst.msk [vmem:[#allocation2 + $0x60] sm:$0xff] %vm1667, %v1615
  %1681 = vst.msk [vmem:[#allocation2 + $0x68] sm:$0xff] %vm1667, %v1616
  %1682 = vst.msk [vmem:[#allocation2 + $0x70] sm:$0xff] %vm1667, %v1617
  %1683 = vst.msk [vmem:[#allocation2 + $0x78] sm:$0xff] %vm1667, %v1618
  %1684 = vst.msk [vmem:[#allocation2 + $0x80] sm:$0xff] %vm1667, %v1619
  %1685 = vst.msk [vmem:[#allocation2 + $0x88] sm:$0xff] %vm1667, %v1620
  %1686 = vst.msk [vmem:[#allocation2 + $0x90] sm:$0xff] %vm1667, %v1621
  %1687 = vst.msk [vmem:[#allocation2 + $0x98] sm:$0xff] %vm1667, %v1622
  %1688 = vst.msk [vmem:[#allocation2 + $0xa0] sm:$0xff] %vm1667, %v1623
  %1689 = vst.msk [vmem:[#allocation2 + $0xa8] sm:$0xff] %vm1667, %v1624
  %1690 = vst.msk [vmem:[#allocation2 + $0xb0] sm:$0xff] %vm1667, %v1625
  %1691 = vst.msk [vmem:[#allocation2 + $0xb8] sm:$0xff] %vm1667, %v1626
  %1692 = vst.msk [vmem:[#allocation2 + $0xc0] sm:$0xff] %vm1667, %v1627
  %1693 = vst.msk [vmem:[#allocation2 + $0xc8] sm:$0xff] %vm1667, %v1628
  %1694 = vst.msk [vmem:[#allocation2 + $0xd0] sm:$0xff] %vm1667, %v1629
  %1695 = vst.msk [vmem:[#allocation2 + $0xd8] sm:$0xff] %vm1667, %v1630
  %1696 = vst.msk [vmem:[#allocation2 + $0xe0] sm:$0xff] %vm1667, %v1631
  %1697 = vst.msk [vmem:[#allocation2 + $0xe8] sm:$0xff] %vm1667, %v1632
  %1698 = vst.msk [vmem:[#allocation2 + $0xf0] sm:$0xff] %vm1667, %v1633
  %1699 = vst.msk [vmem:[#allocation2 + $0xf8] sm:$0xff] %vm1667, %v1634
  %1700 = vst.msk [vmem:[#allocation2 + $0x100] sm:$0xff] %vm1667, %v1635
  %1701 = vst.msk [vmem:[#allocation2 + $0x108] sm:$0xff] %vm1667, %v1636
  %1702 = vst.msk [vmem:[#allocation2 + $0x110] sm:$0xff] %vm1667, %v1637
  %1703 = vst.msk [vmem:[#allocation2 + $0x118] sm:$0xff] %vm1667, %v1638
  %1704 = vst.msk [vmem:[#allocation2 + $0x120] sm:$0xff] %vm1667, %v1639
  %1705 = vst.msk [vmem:[#allocation2 + $0x128] sm:$0xff] %vm1667, %v1640
  %1706 = vst.msk [vmem:[#allocation2 + $0x130] sm:$0xff] %vm1667, %v1641
  %1707 = vst.msk [vmem:[#allocation2 + $0x138] sm:$0xff] %vm1667, %v1642
  %1708 = vst.msk [vmem:[#allocation2 + $0x140] sm:$0xff] %vm1667, %v1643
  %1709 = vst.msk [vmem:[#allocation2 + $0x148] sm:$0xff] %vm1667, %v1644
  %1710 = vst.msk [vmem:[#allocation2 + $0x150] sm:$0xff] %vm1667, %v1645
  %1711 = vst.msk [vmem:[#allocation2 + $0x158] sm:$0xff] %vm1667, %v1646
  %1712 = vst.msk [vmem:[#allocation2 + $0x160] sm:$0xff] %vm1667, %v1647
  %1713 = vst.msk [vmem:[#allocation2 + $0x168] sm:$0xff] %vm1667, %v1648
  %1714 = vst.msk [vmem:[#allocation2 + $0x170] sm:$0xff] %vm1667, %v1649
  %1715 = vst.msk [vmem:[#allocation2 + $0x178] sm:$0xff] %vm1667, %v1650
  %1716 = vst.msk [vmem:[#allocation2 + $0x180] sm:$0xff] %vm1667, %v1651
  %1717 = vst.msk [vmem:[#allocation2 + $0x188] sm:$0xff] %vm1667, %v1652
  %1718 = vst.msk [vmem:[#allocation2 + $0x190] sm:$0xff] %vm1667, %v1653
  %1719 = vst.msk [vmem:[#allocation2 + $0x198] sm:$0xff] %vm1667, %v1654
  %1720 = vst.msk [vmem:[#allocation2 + $0x1a0] sm:$0xff] %vm1667, %v1655
  %1721 = vst.msk [vmem:[#allocation2 + $0x1a8] sm:$0xff] %vm1667, %v1656
  %1722 = vst.msk [vmem:[#allocation2 + $0x1b0] sm:$0xff] %vm1667, %v1657
  %1723 = vst.msk [vmem:[#allocation2 + $0x1b8] sm:$0xff] %vm1667, %v1658
  %1724 = vst.msk [vmem:[#allocation2 + $0x1c0] sm:$0xff] %vm1667, %v1659
  %1725 = vst.msk [vmem:[#allocation2 + $0x1c8] sm:$0xff] %vm1667, %v1660
  %1726 = vst.msk [vmem:[#allocation2 + $0x1d0] sm:$0xff] %vm1667, %v1661
  %1727 = vst.msk [vmem:[#allocation2 + $0x1d8] sm:$0xff] %vm1667, %v1662
  %1728 = vst.msk [vmem:[#allocation2 + $0x1e0] sm:$0xff] %vm1667, %v1663
  %1729 = vst.msk [vmem:[#allocation2 + $0x1e8] sm:$0xff] %vm1667, %v1664
  %1730 = vst.msk [vmem:[#allocation2 + $0x1f0] sm:$0xff] %vm1667, %v1665
  %1731 = vst.msk [vmem:[#allocation2 + $0x1f8] sm:$0xff] %vm1667, %v1666
  // Predicated region
  $region34: #{bottleneck_forward.3} parent=0 // pred_check
    %p1732 = pneg %p27
  $region35: #{bottleneck_forward.3} parent=0 // pred_check_branch
    %1734 = sbr.rel (%p1732) target = $region37
  $region36: #{bottleneck_forward.3} parent=0 // pred_region
    %v1735 = vld [vmem:[#allocation2] sm:$0xff]
    %v1736 = vld [vmem:[#allocation2 + $0x8] sm:$0xff]
    %v1737 = vld [vmem:[#allocation2 + $0x10] sm:$0xff]
    %v1738 = vld [vmem:[#allocation2 + $0x18] sm:$0xff]
    %v1739 = vld [vmem:[#allocation2 + $0x20] sm:$0xff]
    %v1740 = vld [vmem:[#allocation2 + $0x28] sm:$0xff]
    %v1741 = vld [vmem:[#allocation2 + $0x30] sm:$0xff]
    %v1742 = vld [vmem:[#allocation2 + $0x38] sm:$0xff]
    %v1743 = vld [vmem:[#allocation2 + $0x40] sm:$0xff]
    %v1744 = vld [vmem:[#allocation2 + $0x48] sm:$0xff]
    %v1745 = vld [vmem:[#allocation2 + $0x50] sm:$0xff]
    %v1746 = vld [vmem:[#allocation2 + $0x58] sm:$0xff]
    %v1747 = vld [vmem:[#allocation2 + $0x60] sm:$0xff]
    %v1748 = vld [vmem:[#allocation2 + $0x68] sm:$0xff]
    %v1749 = vld [vmem:[#allocation2 + $0x70] sm:$0xff]
    %v1750 = vld [vmem:[#allocation2 + $0x78] sm:$0xff]
    %v1751 = vld [vmem:[#allocation2 + $0x80] sm:$0xff]
    %v1752 = vld [vmem:[#allocation2 + $0x88] sm:$0xff]
    %v1753 = vld [vmem:[#allocation2 + $0x90] sm:$0xff]
    %v1754 = vld [vmem:[#allocation2 + $0x98] sm:$0xff]
    %v1755 = vld [vmem:[#allocation2 + $0xa0] sm:$0xff]
    %v1756 = vld [vmem:[#allocation2 + $0xa8] sm:$0xff]
    %v1757 = vld [vmem:[#allocation2 + $0xb0] sm:$0xff]
    %v1758 = vld [vmem:[#allocation2 + $0xb8] sm:$0xff]
    %v1759 = vld [vmem:[#allocation2 + $0xc0] sm:$0xff]
    %v1760 = vld [vmem:[#allocation2 + $0xc8] sm:$0xff]
    %v1761 = vld [vmem:[#allocation2 + $0xd0] sm:$0xff]
    %v1762 = vld [vmem:[#allocation2 + $0xd8] sm:$0xff]
    %v1763 = vld [vmem:[#allocation2 + $0xe0] sm:$0xff]
    %v1764 = vld [vmem:[#allocation2 + $0xe8] sm:$0xff]
    %v1765 = vld [vmem:[#allocation2 + $0xf0] sm:$0xff]
    %v1766 = vld [vmem:[#allocation2 + $0xf8] sm:$0xff]
    %v1767 = vld [vmem:[#allocation2 + $0x100] sm:$0xff]
    %v1768 = vld [vmem:[#allocation2 + $0x108] sm:$0xff]
    %v1769 = vld [vmem:[#allocation2 + $0x110] sm:$0xff]
    %v1770 = vld [vmem:[#allocation2 + $0x118] sm:$0xff]
    %v1771 = vld [vmem:[#allocation2 + $0x120] sm:$0xff]
    %v1772 = vld [vmem:[#allocation2 + $0x128] sm:$0xff]
    %v1773 = vld [vmem:[#allocation2 + $0x130] sm:$0xff]
    %v1774 = vld [vmem:[#allocation2 + $0x138] sm:$0xff]
    %v1775 = vld [vmem:[#allocation2 + $0x140] sm:$0xff]
    %v1776 = vld [vmem:[#allocation2 + $0x148] sm:$0xff]
    %v1777 = vld [vmem:[#allocation2 + $0x150] sm:$0xff]
    %v1778 = vld [vmem:[#allocation2 + $0x158] sm:$0xff]
    %v1779 = vld [vmem:[#allocation2 + $0x160] sm:$0xff]
    %v1780 = vld [vmem:[#allocation2 + $0x168] sm:$0xff]
    %v1781 = vld [vmem:[#allocation2 + $0x170] sm:$0xff]
    %v1782 = vld [vmem:[#allocation2 + $0x178] sm:$0xff]
    %v1783 = vld [vmem:[#allocation2 + $0x180] sm:$0xff]
    %v1784 = vld [vmem:[#allocation2 + $0x188] sm:$0xff]
    %v1785 = vld [vmem:[#allocation2 + $0x190] sm:$0xff]
    %v1786 = vld [vmem:[#allocation2 + $0x198] sm:$0xff]
    %v1787 = vld [vmem:[#allocation2 + $0x1a0] sm:$0xff]
    %v1788 = vld [vmem:[#allocation2 + $0x1a8] sm:$0xff]
    %v1789 = vld [vmem:[#allocation2 + $0x1b0] sm:$0xff]
    %v1790 = vld [vmem:[#allocation2 + $0x1b8] sm:$0xff]
    %v1791 = vld [vmem:[#allocation2 + $0x1c0] sm:$0xff]
    %v1792 = vld [vmem:[#allocation2 + $0x1c8] sm:$0xff]
    %v1793 = vld [vmem:[#allocation2 + $0x1d0] sm:$0xff]
    %v1794 = vld [vmem:[#allocation2 + $0x1d8] sm:$0xff]
    %v1795 = vld [vmem:[#allocation2 + $0x1e0] sm:$0xff]
    %v1796 = vld [vmem:[#allocation2 + $0x1e8] sm:$0xff]
    %v1797 = vld [vmem:[#allocation2 + $0x1f0] sm:$0xff]
    %v1798 = vld [vmem:[#allocation2 + $0x1f8] sm:$0xff]
    %v1799 = vmax.f32 %v1735, 0.0
    %v1800 = vmax.f32 %v1736, 0.0
    %v1801 = vmax.f32 %v1737, 0.0
    %v1802 = vmax.f32 %v1738, 0.0
    %v1803 = vmax.f32 %v1739, 0.0
    %v1804 = vmax.f32 %v1740, 0.0
    %v1805 = vmax.f32 %v1741, 0.0
    %v1806 = vmax.f32 %v1742, 0.0
    %v1807 = vmax.f32 %v1743, 0.0
    %v1808 = vmax.f32 %v1744, 0.0
    %v1809 = vmax.f32 %v1745, 0.0
    %v1810 = vmax.f32 %v1746, 0.0
    %v1811 = vmax.f32 %v1747, 0.0
    %v1812 = vmax.f32 %v1748, 0.0
    %v1813 = vmax.f32 %v1749, 0.0
    %v1814 = vmax.f32 %v1750, 0.0
    %v1815 = vmax.f32 %v1751, 0.0
    %v1816 = vmax.f32 %v1752, 0.0
    %v1817 = vmax.f32 %v1753, 0.0
    %v1818 = vmax.f32 %v1754, 0.0
    %v1819 = vmax.f32 %v1755, 0.0
    %v1820 = vmax.f32 %v1756, 0.0
    %v1821 = vmax.f32 %v1757, 0.0
    %v1822 = vmax.f32 %v1758, 0.0
    %v1823 = vmax.f32 %v1759, 0.0
    %v1824 = vmax.f32 %v1760, 0.0
    %v1825 = vmax.f32 %v1761, 0.0
    %v1826 = vmax.f32 %v1762, 0.0
    %v1827 = vmax.f32 %v1763, 0.0
    %v1828 = vmax.f32 %v1764, 0.0
    %v1829 = vmax.f32 %v1765, 0.0
    %v1830 = vmax.f32 %v1766, 0.0
    %v1831 = vmax.f32 %v1767, 0.0
    %v1832 = vmax.f32 %v1768, 0.0
    %v1833 = vmax.f32 %v1769, 0.0
    %v1834 = vmax.f32 %v1770, 0.0
    %v1835 = vmax.f32 %v1771, 0.0
    %v1836 = vmax.f32 %v1772, 0.0
    %v1837 = vmax.f32 %v1773, 0.0
    %v1838 = vmax.f32 %v1774, 0.0
    %v1839 = vmax.f32 %v1775, 0.0
    %v1840 = vmax.f32 %v1776, 0.0
    %v1841 = vmax.f32 %v1777, 0.0
    %v1842 = vmax.f32 %v1778, 0.0
    %v1843 = vmax.f32 %v1779, 0.0
    %v1844 = vmax.f32 %v1780, 0.0
    %v1845 = vmax.f32 %v1781, 0.0
    %v1846 = vmax.f32 %v1782, 0.0
    %v1847 = vmax.f32 %v1783, 0.0
    %v1848 = vmax.f32 %v1784, 0.0
    %v1849 = vmax.f32 %v1785, 0.0
    %v1850 = vmax.f32 %v1786, 0.0
    %v1851 = vmax.f32 %v1787, 0.0
    %v1852 = vmax.f32 %v1788, 0.0
    %v1853 = vmax.f32 %v1789, 0.0
    %v1854 = vmax.f32 %v1790, 0.0
    %v1855 = vmax.f32 %v1791, 0.0
    %v1856 = vmax.f32 %v1792, 0.0
    %v1857 = vmax.f32 %v1793, 0.0
    %v1858 = vmax.f32 %v1794, 0.0
    %v1859 = vmax.f32 %v1795, 0.0
    %v1860 = vmax.f32 %v1796, 0.0
    %v1861 = vmax.f32 %v1797, 0.0
    %v1862 = vmax.f32 %v1798, 0.0
    %1863 = vst.msk [vmem:[%s7] sm:$0xff] %vm1667, %v1799
    %1864 = vst.msk [vmem:[%s7 + $0x8] sm:$0xff] %vm1667, %v1800
    %1865 = vst.msk [vmem:[%s7 + $0x10] sm:$0xff] %vm1667, %v1801
    %1866 = vst.msk [vmem:[%s7 + $0x18] sm:$0xff] %vm1667, %v1802
    %1867 = vst.msk [vmem:[%s7 + $0x20] sm:$0xff] %vm1667, %v1803
    %1868 = vst.msk [vmem:[%s7 + $0x28] sm:$0xff] %vm1667, %v1804
    %1869 = vst.msk [vmem:[%s7 + $0x30] sm:$0xff] %vm1667, %v1805
    %1870 = vst.msk [vmem:[%s7 + $0x38] sm:$0xff] %vm1667, %v1806
    %1871 = vst.msk [vmem:[%s7 + $0x40] sm:$0xff] %vm1667, %v1807
    %1872 = vst.msk [vmem:[%s7 + $0x48] sm:$0xff] %vm1667, %v1808
    %1873 = vst.msk [vmem:[%s7 + $0x50] sm:$0xff] %vm1667, %v1809
    %1874 = vst.msk [vmem:[%s7 + $0x58] sm:$0xff] %vm1667, %v1810
    %1875 = vst.msk [vmem:[%s7 + $0x60] sm:$0xff] %vm1667, %v1811
    %1876 = vst.msk [vmem:[%s7 + $0x68] sm:$0xff] %vm1667, %v1812
    %1877 = vst.msk [vmem:[%s7 + $0x70] sm:$0xff] %vm1667, %v1813
    %1878 = vst.msk [vmem:[%s7 + $0x78] sm:$0xff] %vm1667, %v1814
    %1879 = vst.msk [vmem:[%s7 + $0x80] sm:$0xff] %vm1667, %v1815
    %1880 = vst.msk [vmem:[%s7 + $0x88] sm:$0xff] %vm1667, %v1816
    %1881 = vst.msk [vmem:[%s7 + $0x90] sm:$0xff] %vm1667, %v1817
    %1882 = vst.msk [vmem:[%s7 + $0x98] sm:$0xff] %vm1667, %v1818
    %1883 = vst.msk [vmem:[%s7 + $0xa0] sm:$0xff] %vm1667, %v1819
    %1884 = vst.msk [vmem:[%s7 + $0xa8] sm:$0xff] %vm1667, %v1820
    %1885 = vst.msk [vmem:[%s7 + $0xb0] sm:$0xff] %vm1667, %v1821
    %1886 = vst.msk [vmem:[%s7 + $0xb8] sm:$0xff] %vm1667, %v1822
    %1887 = vst.msk [vmem:[%s7 + $0xc0] sm:$0xff] %vm1667, %v1823
    %1888 = vst.msk [vmem:[%s7 + $0xc8] sm:$0xff] %vm1667, %v1824
    %1889 = vst.msk [vmem:[%s7 + $0xd0] sm:$0xff] %vm1667, %v1825
    %1890 = vst.msk [vmem:[%s7 + $0xd8] sm:$0xff] %vm1667, %v1826
    %1891 = vst.msk [vmem:[%s7 + $0xe0] sm:$0xff] %vm1667, %v1827
    %1892 = vst.msk [vmem:[%s7 + $0xe8] sm:$0xff] %vm1667, %v1828
    %1893 = vst.msk [vmem:[%s7 + $0xf0] sm:$0xff] %vm1667, %v1829
    %1894 = vst.msk [vmem:[%s7 + $0xf8] sm:$0xff] %vm1667, %v1830
    %1895 = vst.msk [vmem:[%s7 + $0x100] sm:$0xff] %vm1667, %v1831
    %1896 = vst.msk [vmem:[%s7 + $0x108] sm:$0xff] %vm1667, %v1832
    %1897 = vst.msk [vmem:[%s7 + $0x110] sm:$0xff] %vm1667, %v1833
    %1898 = vst.msk [vmem:[%s7 + $0x118] sm:$0xff] %vm1667, %v1834
    %1899 = vst.msk [vmem:[%s7 + $0x120] sm:$0xff] %vm1667, %v1835
    %1900 = vst.msk [vmem:[%s7 + $0x128] sm:$0xff] %vm1667, %v1836
    %1901 = vst.msk [vmem:[%s7 + $0x130] sm:$0xff] %vm1667, %v1837
    %1902 = vst.msk [vmem:[%s7 + $0x138] sm:$0xff] %vm1667, %v1838
    %1903 = vst.msk [vmem:[%s7 + $0x140] sm:$0xff] %vm1667, %v1839
    %1904 = vst.msk [vmem:[%s7 + $0x148] sm:$0xff] %vm1667, %v1840
    %1905 = vst.msk [vmem:[%s7 + $0x150] sm:$0xff] %vm1667, %v1841
    %1906 = vst.msk [vmem:[%s7 + $0x158] sm:$0xff] %vm1667, %v1842
    %1907 = vst.msk [vmem:[%s7 + $0x160] sm:$0xff] %vm1667, %v1843
    %1908 = vst.msk [vmem:[%s7 + $0x168] sm:$0xff] %vm1667, %v1844
    %1909 = vst.msk [vmem:[%s7 + $0x170] sm:$0xff] %vm1667, %v1845
    %1910 = vst.msk [vmem:[%s7 + $0x178] sm:$0xff] %vm1667, %v1846
    %1911 = vst.msk [vmem:[%s7 + $0x180] sm:$0xff] %vm1667, %v1847
    %1912 = vst.msk [vmem:[%s7 + $0x188] sm:$0xff] %vm1667, %v1848
    %1913 = vst.msk [vmem:[%s7 + $0x190] sm:$0xff] %vm1667, %v1849
    %1914 = vst.msk [vmem:[%s7 + $0x198] sm:$0xff] %vm1667, %v1850
    %1915 = vst.msk [vmem:[%s7 + $0x1a0] sm:$0xff] %vm1667, %v1851
    %1916 = vst.msk [vmem:[%s7 + $0x1a8] sm:$0xff] %vm1667, %v1852
    %1917 = vst.msk [vmem:[%s7 + $0x1b0] sm:$0xff] %vm1667, %v1853
    %1918 = vst.msk [vmem:[%s7 + $0x1b8] sm:$0xff] %vm1667, %v1854
    %1919 = vst.msk [vmem:[%s7 + $0x1c0] sm:$0xff] %vm1667, %v1855
    %1920 = vst.msk [vmem:[%s7 + $0x1c8] sm:$0xff] %vm1667, %v1856
    %1921 = vst.msk [vmem:[%s7 + $0x1d0] sm:$0xff] %vm1667, %v1857
    %1922 = vst.msk [vmem:[%s7 + $0x1d8] sm:$0xff] %vm1667, %v1858
    %1923 = vst.msk [vmem:[%s7 + $0x1e0] sm:$0xff] %vm1667, %v1859
    %1924 = vst.msk [vmem:[%s7 + $0x1e8] sm:$0xff] %vm1667, %v1860
    %1925 = vst.msk [vmem:[%s7 + $0x1f0] sm:$0xff] %vm1667, %v1861
    %1926 = vst.msk [vmem:[%s7 + $0x1f8] sm:$0xff] %vm1667, %v1862
  $region37: #{bottleneck_forward.3} parent=0 // pred_fallthru
    _
  // Predicated region
  $region38: #{bottleneck_forward.3} parent=0 // pred_check
    _
  $region39: #{bottleneck_forward.3} parent=0 // pred_check_branch
    %1928 = sbr.rel (0) target = $region41
  $region40: #{bottleneck_forward.3} parent=0 // pred_region
    _
  $region41: #{bottleneck_forward.3} parent=0 // pred_fallthru
    _
  // Predicated region
  $region42: #{bottleneck_forward.3} parent=0 // pred_check
    _
  $region43: #{bottleneck_forward.3} parent=0 // pred_check_branch
    %1930 = sbr.rel (0) target = $region45
  $region44: #{bottleneck_forward.3} parent=0 // pred_region
    _
  $region45: #{bottleneck_forward.3} parent=0 // pred_fallthru
    _

</llo_original>
